<compile_context>
chip_gen: v7x
topology: tpu7x:2x2x1
jax: 0.10.0
libtpu: 0.0.40
codegen_flags: <defaults>
</compile_context>

<pallas_src>
import functools

import jax
import jax.numpy as jnp
from jax import lax
from jax.experimental import pallas as pl
from jax.experimental.pallas import tpu as pltpu

LK = 5
NEG_SLOPE = 1.0 / LK      # nn.LeakyReLU(1/LK)
EPS = 1e-5                # nn.BatchNorm2d default eps


def _leaky(x):
    return jnp.where(x > 0, x, NEG_SLOPE * x)


def _pick_tile(n, target):
    """Largest multiple-of-8 divisor of n that is <= target (falls back to n)."""
    if n <= target:
        return n
    best = 0
    for t in range(8, target + 1, 8):
        if n % t == 0:
            best = t
    return best if best else n


# ---------------------------------------------------------------------------------------
# Pass 1: squeeze 1x1 conv (bf16 MXU matmul) + per-tile BN partial sums.
# grid: (P // TM,) over rows of the (P, Cin) activation matrix, P = N*H*W.
# ---------------------------------------------------------------------------------------
def _squeeze_kernel(x_ref, w_ref, b_ref, spre_ref, stats_ref):
    y = jnp.dot(x_ref[...], w_ref[...], preferred_element_type=jnp.float32) + b_ref[...]
    spre_ref[...] = y.astype(spre_ref.dtype)
    s1 = jnp.sum(y, axis=0, keepdims=True)
    s2 = jnp.sum(y * y, axis=0, keepdims=True)
    stats_ref[0] = jnp.concatenate([s1, s2], axis=0)       # per-tile [sum, sumsq]


# ---------------------------------------------------------------------------------------
# Pass 2: squeeze BN/act, build 3x3 im2col patches by row shifts (no padded scratch),
# ONE fused bf16 matmul producing [branch1 | branch3], per-image BN partial sums.
# grid: (N,)  -- one image per step keeps the 3x3 halo inside the block.
# ---------------------------------------------------------------------------------------
def _shift_rows(a, k):
    # t[r] = a[r + k] if 0 <= r + k < rows else 0   (static k, zero fill)
    if k == 0:
        return a
    cols = a.shape[1]
    pad = jnp.zeros((abs(k), cols), a.dtype)
    if k > 0:
        return jnp.concatenate([a[k:, :], pad], axis=0)
    return jnp.concatenate([pad, a[:k, :]], axis=0)


def _branch_kernel(H, W, spre_ref, scale_ref, shift_ref, w_ref, b_ref,
                   ypre_ref, stats_ref):
    HW = H * W
    s_pre = spre_ref[0].astype(jnp.float32)                      # (HW, mid)
    s = _leaky(s_pre * scale_ref[...] + shift_ref[...])          # squeeze BN + LeakyReLU

    # masks for the W edges (row shifts already zero-fill the H edges exactly)
    w_idx = lax.broadcasted_iota(jnp.int32, (HW, 1), 0) % W
    ok_wm = w_idx >= 1            # has a left neighbour
    ok_wp = w_idx <= W - 2        # has a right neighbour

    taps = []
    for dh in (-1, 0, 1):
        for dw in (-1, 0, 1):
            t = _shift_rows(s, dh * W + dw)
            if dw == -1:
                t = jnp.where(ok_wm, t, 0.0)
            elif dw == 1:
                t = jnp.where(ok_wp, t, 0.0)
            taps.append(t)
    patches = jnp.concatenate(taps, axis=1).astype(jnp.bfloat16)  # (HW, 9*mid)

    # fused expand: columns [0:e1] = branch1 (1x1), [e1:] = branch3 (3x3) -> no concat later
    y = jnp.dot(patches, w_ref[...], preferred_element_type=jnp.float32) + b_ref[...]
    ypre_ref[0] = y.astype(ypre_ref.dtype)
    s1 = jnp.sum(y, axis=0, keepdims=True)
    s2 = jnp.sum(y * y, axis=0, keepdims=True)
    stats_ref[0] = jnp.concatenate([s1, s2], axis=0)


# ---------------------------------------------------------------------------------------
# Pass 3: expand BN + LeakyReLU, streamed as (N*H, W*(e1+e3)) so loads/stores are
# lane-dense; the per-channel scale/shift were pre-tiled along W in the wrapper.
# grid: (N*H // TMC,)
# ---------------------------------------------------------------------------------------
def _finalize_kernel(y_ref, scale_ref, shift_ref, o_ref):
    z = y_ref[...].astype(jnp.float32) * scale_ref[...] + shift_ref[...]
    o_ref[...] = _leaky(z)


def _bn_scale_shift(stats, count, gamma, beta):
    # stats: (2, C) rows = [sum, sum of squares]; training-mode (biased) variance
    mean = stats[0] / count
    var = jnp.maximum(stats[1] / count - mean * mean, 0.0)
    scale = gamma.reshape(-1) * lax.rsqrt(var + EPS)
    shift = beta.reshape(-1) - mean * scale
    return scale.reshape(1, -1), shift.reshape(1, -1)


@jax.jit
def fire_forward(x_nchw, params):
    (wsq, bsq, gsq, betsq, wb1, bb1, gb1, betb1, wb3, bb3, gb3, betb3) = params
    N, Cin, H, W = x_nchw.shape
    mid = wsq.shape[1]
    e1 = wb1.shape[1]
    e3 = wb3.shape[2]
    E = e1 + e3
    P = N * H * W
    HW = H * W
    f32 = jnp.float32
    bf16 = jnp.bfloat16

    # NCHW -> NHWC -> (P, Cin); bf16 activations for the MXU (accumulation stays f32).
    x2 = jnp.transpose(x_nchw, (0, 2, 3, 1)).reshape(P, Cin).astype(bf16)

    # Fused expand weight: branch1's 1x1 weight lives in the centre-tap rows of the 3x3
    # im2col weight, so a single matmul yields [branch1 | branch3] side by side.
    w3_flat = wb3.reshape(9 * mid, e3)
    w1_pad = jnp.zeros((9 * mid, e1), f32).at[4 * mid:5 * mid, :].set(wb1)
    w_br = jnp.concatenate([w1_pad, w3_flat], axis=1).astype(bf16)      # (9*mid, E)
    b_br = jnp.concatenate([bb1, bb3], axis=1).astype(f32)              # (1, E)
    g_br = jnp.concatenate([gb1, gb3], axis=1).astype(f32)
    beta_br = jnp.concatenate([betb1, betb3], axis=1).astype(f32)

    cparams = pltpu.CompilerParams(
        dimension_semantics=("parallel",),        # no cross-step accumulation -> megacore OK
        vmem_limit_bytes=32 * 1024 * 1024,        # far above what these tiles need
    )

    # ---- pass 1: squeeze conv + BN partials, tiled & pipelined over P ----
    TM = _pick_tile(P, 256)
    n_a = P // TM
    s_pre, stats_s_p = pl.pallas_call(
        _squeeze_kernel,
        grid=(n_a,),
        in_specs=[
            pl.BlockSpec((TM, Cin), lambda i: (i, 0)),
            pl.BlockSpec((Cin, mid), lambda i: (0, 0)),
            pl.BlockSpec((1, mid), lambda i: (0, 0)),
        ],
        out_specs=[
            pl.BlockSpec((TM, mid), lambda i: (i, 0)),
            pl.BlockSpec((1, 2, mid), lambda i: (i, 0, 0)),
        ],
        out_shape=[
            jax.ShapeDtypeStruct((P, mid), bf16),
            jax.ShapeDtypeStruct((n_a, 2, mid), f32),
        ],
        compiler_params=cparams,
    )(x2, wsq.astype(bf16), bsq.astype(f32))

    scale_s, shift_s = _bn_scale_shift(jnp.sum(stats_s_p, axis=0), P, gsq, betsq)

    # ---- pass 2: squeeze BN/act + fused im2col expand matmul + BN partials, per image ----
    y_pre, stats_b_p = pl.pallas_call(
        functools.partial(_branch_kernel, H, W),
        grid=(N,),
        in_specs=[
            pl.BlockSpec((1, HW, mid), lambda n: (n, 0, 0)),
            pl.BlockSpec((1, mid), lambda n: (0, 0)),
            pl.BlockSpec((1, mid), lambda n: (0, 0)),
            pl.BlockSpec((9 * mid, E), lambda n: (0, 0)),
            pl.BlockSpec((1, E), lambda n: (0, 0)),
        ],
        out_specs=[
            pl.BlockSpec((1, HW, E), lambda n: (n, 0, 0)),
            pl.BlockSpec((1, 2, E), lambda n: (n, 0, 0)),
        ],
        out_shape=[
            jax.ShapeDtypeStruct((N, HW, E), bf16),
            jax.ShapeDtypeStruct((N, 2, E), f32),
        ],
        compiler_params=cparams,
    )(s_pre.reshape(N, HW, mid), scale_s, shift_s, w_br, b_br)

    scale_b, shift_b = _bn_scale_shift(jnp.sum(stats_b_p, axis=0), P, g_br, beta_br)

    # ---- pass 3: expand BN + LeakyReLU, lane-dense (N*H, W*E) streaming ----
    y2 = y_pre.reshape(N * H, W * E)            # same memory order -> free reshape
    scale_w = jnp.tile(scale_b, (1, W))         # (1, W*E): per-lane channel params
    shift_w = jnp.tile(shift_b, (1, W))
    TMC = _pick_tile(N * H, 256)
    n_c = (N * H) // TMC
    out2 = pl.pallas_call(
        _finalize_kernel,
        grid=(n_c,),
        in_specs=[
            pl.BlockSpec((TMC, W * E), lambda i: (i, 0)),
            pl.BlockSpec((1, W * E), lambda i: (0, 0)),
            pl.BlockSpec((1, W * E), lambda i: (0, 0)),
        ],
        out_specs=pl.BlockSpec((TMC, W * E), lambda i: (i, 0)),
        out_shape=jax.ShapeDtypeStruct((N * H, W * E), f32),
        compiler_params=cparams,
    )(y2, scale_w, shift_w)

    return jnp.transpose(out2.reshape(N, H, W, E), (0, 3, 1, 2))   # -> NCHW


def fire_reference(x_nchw, params):
    # Pure-JAX f32 reference for verification (true module semantics).
    (wsq, bsq, gsq, betsq, wb1, bb1, gb1, betb1, wb3, bb3, gb3, betb3) = params
    x = jnp.transpose(x_nchw, (0, 2, 3, 1)).astype(jnp.float32)

    def bn(y, g, b):
        m = jnp.mean(y, axis=(0, 1, 2), keepdims=True)
        v = jnp.mean((y - m) ** 2, axis=(0, 1, 2), keepdims=True)
        return (y - m) * lax.rsqrt(v + EPS) * g.reshape(1, 1, 1, -1) + b.reshape(1, 1, 1, -1)

    s = jnp.einsum('nhwc,cm->nhwm', x, wsq) + bsq.reshape(1, 1, 1, -1)
    s = _leaky(bn(s, gsq, betsq))

    y1 = jnp.einsum('nhwc,cm->nhwm', s, wb1) + bb1.reshape(1, 1, 1, -1)
    y1 = _leaky(bn(y1, gb1, betb1))

    w3 = wb3.reshape(3, 3, wb3.shape[1], wb3.shape[2])          # HWIO
    y3 = lax.conv_general_dilated(s, w3, (1, 1), ((1, 1), (1, 1)),
                                  dimension_numbers=('NHWC', 'HWIO', 'NHWC'))
    y3 = y3 + bb3.reshape(1, 1, 1, -1)
    y3 = _leaky(bn(y3, gb3, betb3))

    out = jnp.concatenate([y1, y3], axis=-1)
    return jnp.transpose(out, (0, 3, 1, 2))


if __name__ == "__main__":
    N, Cin, H, W = 2, 4, 16, 16
    mid, e1, e3 = 8, 8, 8

    key = jax.random.PRNGKey(0)
    keys = jax.random.split(key, 13)

    def nrm(k, shape, scale):
        return scale * jax.random.normal(k, shape, jnp.float32)

    wsq = nrm(keys[0], (Cin, mid), 0.5)          # Conv2d(inc, mid, 1) weight as (Cin, mid)
    bsq = nrm(keys[1], (1, mid), 0.1)
    gsq = 1.0 + nrm(keys[2], (1, mid), 0.1)      # BN gamma
    betsq = nrm(keys[3], (1, mid), 0.1)          # BN beta

    wb1 = nrm(keys[4], (mid, e1), 0.5)           # Conv2d(mid, e1, 1)
    bb1 = nrm(keys[5], (1, e1), 0.1)
    gb1 = 1.0 + nrm(keys[6], (1, e1), 0.1)
    betb1 = nrm(keys[7], (1, e1), 0.1)

    wb3 = nrm(keys[8], (9, mid, e3), 0.2)        # Conv2d(mid, e3, 3) weight as (kh*3+kw, mid, e3)
    bb3 = nrm(keys[9], (1, e3), 0.1)
    gb3 = 1.0 + nrm(keys[10], (1, e3), 0.1)
    betb3 = nrm(keys[11], (1, e3), 0.1)

    x = nrm(keys[12], (N, Cin, H, W), 1.0)       # NCHW input, like PyTorch

    params = (wsq, bsq, gsq, betsq, wb1, bb1, gb1, betb1, wb3, bb3, gb3, betb3)

    out = fire_forward(x, params)
    out = jax.block_until_ready(out)

    ref = fire_reference(x, params)
    assert out.shape == (N, e1 + e3, H, W), out.shape
    # Matmul operands are bf16 (per perf feedback); tolerance loosened accordingly
    # versus the pure-f32 reference.
    max_err = float(jnp.max(jnp.abs(out - ref)))
    assert jnp.allclose(out, ref, atol=8e-2, rtol=8e-2), max_err

    print("KERNEL_OK")
</pallas_src>

<mosaic_0001>
module attributes {stable_mosaic.version = 11 : i64} {
  func.func @_squeeze_kernel(%arg0: i32, %arg1: memref<256x4xbf16, #tpu.memory_space<vmem>>, %arg2: memref<4x8xbf16, #tpu.memory_space<vmem>>, %arg3: memref<1x8xf32, #tpu.memory_space<vmem>>, %arg4: memref<256x8xbf16, #tpu.memory_space<vmem>>, %arg5: memref<1x2x8xf32, #tpu.memory_space<vmem>>) attributes {dimension_semantics = [#tpu.dimension_semantics<parallel>], iteration_bounds = array<i64: 2>, scalar_prefetch = 0 : i64, scratch_operands = 0 : i64, tpu.core_type = #tpu.core_type<tc>, window_params = [{transform_indices = @transform_0, window_bounds = array<i64: 256, 4>}, {pipeline_mode = #tpu.pipeline_mode<synchronous>, transform_indices = @transform_1, window_bounds = array<i64: 4, 8>}, {pipeline_mode = #tpu.pipeline_mode<synchronous>, transform_indices = @transform_2, window_bounds = array<i64: 1, 8>}, {transform_indices = @transform_3, window_bounds = array<i64: 256, 8>}, {transform_indices = @transform_4, window_bounds = array<i64: 1, 2, 8>}]} {
    %c0 = arith.constant 0 : index
    %c0_0 = arith.constant 0 : index
    %0 = vector.load %arg1[%c0, %c0_0] : memref<256x4xbf16, #tpu.memory_space<vmem>>, vector<256x4xbf16>
    %c0_1 = arith.constant 0 : index
    %c0_2 = arith.constant 0 : index
    %1 = vector.load %arg2[%c0_1, %c0_2] : memref<4x8xbf16, #tpu.memory_space<vmem>>, vector<4x8xbf16>
    %cst = arith.constant dense<0.000000e+00> : vector<256x8xf32>
    %2 = tpu.matmul %0, %1, %cst {dimension_numbers = #tpu.dot_dimension_numbers<[1], [0], [0], [1], [0, 0, 1, 1], [], []>} : vector<256x4xbf16>, vector<4x8xbf16>, vector<256x8xf32> -> vector<256x8xf32>
    %c0_3 = arith.constant 0 : index
    %c0_4 = arith.constant 0 : index
    %3 = vector.load %arg3[%c0_3, %c0_4] : memref<1x8xf32, #tpu.memory_space<vmem>>, vector<1x8xf32>
    %4 = vector.broadcast %3 : vector<1x8xf32> to vector<256x8xf32>
    %5 = arith.addf %2, %4 : vector<256x8xf32>
    %6 = arith.truncf %5 : vector<256x8xf32> to vector<256x8xbf16>
    %c0_5 = arith.constant 0 : index
    %c0_6 = arith.constant 0 : index
    %7 = vector.load %arg4[%c0_5, %c0_6] : memref<256x8xbf16, #tpu.memory_space<vmem>>, vector<256x8xbf16>
    tpu.vector_store %arg4[%c0_5, %c0_6], %6 {strides = array<i32>} : memref<256x8xbf16, #tpu.memory_space<vmem>>, vector<256x8xbf16>,
    %cst_7 = arith.constant dense<0.000000e+00> : vector<8xf32>
    %8 = vector.multi_reduction <add>, %5, %cst_7 [0] : vector<256x8xf32> to vector<8xf32>
    %9 = vector.shape_cast %8 : vector<8xf32> to vector<1x8xf32>
    %10 = arith.mulf %5, %5 : vector<256x8xf32>
    %cst_8 = arith.constant dense<0.000000e+00> : vector<8xf32>
    %11 = vector.multi_reduction <add>, %10, %cst_8 [0] : vector<256x8xf32> to vector<8xf32>
    %12 = vector.shape_cast %11 : vector<8xf32> to vector<1x8xf32>
    %13 = tpu.concatenate %9, %12 in 0 : vector<1x8xf32>, vector<1x8xf32> -> vector<2x8xf32>
    %c0_9 = arith.constant 0 : index
    %c0_10 = arith.constant 0 : index
    %c0_11 = arith.constant 0 : index
    %14 = vector.load %arg5[%c0_9, %c0_10, %c0_11] : memref<1x2x8xf32, #tpu.memory_space<vmem>>, vector<1x2x8xf32>
    %15 = vector.shape_cast %14 : vector<1x2x8xf32> to vector<2x8xf32>
    %16 = vector.shape_cast %13 : vector<2x8xf32> to vector<1x2x8xf32>
    tpu.vector_store %arg5[%c0_9, %c0_10, %c0_11], %16 {strides = array<i32>} : memref<1x2x8xf32, #tpu.memory_space<vmem>>, vector<1x2x8xf32>,
    return
  }
  func.func @transform_0(%arg0: i32) -> (i32, i32) {
    %c0_i32 = arith.constant 0 : i32
    %c0_i32_0 = arith.constant 0 : i32
    return %arg0, %c0_i32 : i32, i32
  }
  func.func @transform_1(%arg0: i32) -> (i32, i32) {
    %c0_i32 = arith.constant 0 : i32
    %c0_i32_0 = arith.constant 0 : i32
    %c0_i32_1 = arith.constant 0 : i32
    return %c0_i32, %c0_i32_0 : i32, i32
  }
  func.func @transform_2(%arg0: i32) -> (i32, i32) {
    %c0_i32 = arith.constant 0 : i32
    %c0_i32_0 = arith.constant 0 : i32
    %c0_i32_1 = arith.constant 0 : i32
    return %c0_i32, %c0_i32_0 : i32, i32
  }
  func.func @transform_3(%arg0: i32) -> (i32, i32) {
    %c0_i32 = arith.constant 0 : i32
    %c0_i32_0 = arith.constant 0 : i32
    return %arg0, %c0_i32 : i32, i32
  }
  func.func @transform_4(%arg0: i32) -> (i32, i32, i32) {
    %c0_i32 = arith.constant 0 : i32
    %c0_i32_0 = arith.constant 0 : i32
    %c0_i32_1 = arith.constant 0 : i32
    return %arg0, %c0_i32, %c0_i32_0 : i32, i32, i32
  }
}

module attributes {stable_mosaic.version = 11 : i64} {
  func.func @_branch_kernel(%arg0: i32, %arg1: memref<1x256x8xbf16, #tpu.memory_space<vmem>>, %arg2: memref<1x8xf32, #tpu.memory_space<vmem>>, %arg3: memref<1x8xf32, #tpu.memory_space<vmem>>, %arg4: memref<72x16xbf16, #tpu.memory_space<vmem>>, %arg5: memref<1x16xf32, #tpu.memory_space<vmem>>, %arg6: memref<1x256x16xbf16, #tpu.memory_space<vmem>>, %arg7: memref<1x2x16xf32, #tpu.memory_space<vmem>>) attributes {dimension_semantics = [#tpu.dimension_semantics<parallel>], iteration_bounds = array<i64: 2>, scalar_prefetch = 0 : i64, scratch_operands = 0 : i64, tpu.core_type = #tpu.core_type<tc>, window_params = [{transform_indices = @transform_0, window_bounds = array<i64: 1, 256, 8>}, {pipeline_mode = #tpu.pipeline_mode<synchronous>, transform_indices = @transform_1, window_bounds = array<i64: 1, 8>}, {pipeline_mode = #tpu.pipeline_mode<synchronous>, transform_indices = @transform_2, window_bounds = array<i64: 1, 8>}, {pipeline_mode = #tpu.pipeline_mode<synchronous>, transform_indices = @transform_3, window_bounds = array<i64: 72, 16>}, {pipeline_mode = #tpu.pipeline_mode<synchronous>, transform_indices = @transform_4, window_bounds = array<i64: 1, 16>}, {transform_indices = @transform_5, window_bounds = array<i64: 1, 256, 16>}, {transform_indices = @transform_6, window_bounds = array<i64: 1, 2, 16>}]} {
    %c0 = arith.constant 0 : index
    %c0_0 = arith.constant 0 : index
    %c0_1 = arith.constant 0 : index
    %0 = vector.load %arg1[%c0, %c0_0, %c0_1] : memref<1x256x8xbf16, #tpu.memory_space<vmem>>, vector<1x256x8xbf16>
    %1 = vector.shape_cast %0 : vector<1x256x8xbf16> to vector<256x8xbf16>
    %2 = arith.extf %1 : vector<256x8xbf16> to vector<256x8xf32>
    %c0_2 = arith.constant 0 : index
    %c0_3 = arith.constant 0 : index
    %3 = vector.load %arg2[%c0_2, %c0_3] : memref<1x8xf32, #tpu.memory_space<vmem>>, vector<1x8xf32>
    %4 = vector.broadcast %3 : vector<1x8xf32> to vector<256x8xf32>
    %5 = arith.mulf %2, %4 : vector<256x8xf32>
    %c0_4 = arith.constant 0 : index
    %c0_5 = arith.constant 0 : index
    %6 = vector.load %arg3[%c0_4, %c0_5] : memref<1x8xf32, #tpu.memory_space<vmem>>, vector<1x8xf32>
    %7 = vector.broadcast %6 : vector<1x8xf32> to vector<256x8xf32>
    %8 = arith.addf %5, %7 : vector<256x8xf32>
    %cst = arith.constant 0.000000e+00 : f32
    %9 = vector.broadcast %cst : f32 to vector<256x8xf32>
    %10 = arith.cmpf ogt, %8, %9 : vector<256x8xf32>
    %cst_6 = arith.constant 2.000000e-01 : f32
    %11 = vector.broadcast %cst_6 : f32 to vector<256x8xf32>
    %12 = arith.mulf %11, %8 : vector<256x8xf32>
    %13 = arith.select %10, %8, %12 : vector<256x8xi1>, vector<256x8xf32>
    %14 = tpu.iota {dimensions = array<i32: 0>} : vector<256x1xi32>
    %c16_i32 = arith.constant 16 : i32
    %c0_i32 = arith.constant 0 : i32
    %15 = arith.cmpi eq, %c16_i32, %c0_i32 : i32
    %c1_i32 = arith.constant 1 : i32
    %16 = arith.select %15, %c1_i32, %c16_i32 : i32
    %17 = vector.broadcast %16 : i32 to vector<256x1xi32>
    %18 = arith.remsi %14, %17 : vector<256x1xi32>
    %c0_i32_7 = arith.constant 0 : i32
    %19 = vector.broadcast %c0_i32_7 : i32 to vector<256x1xi32>
    %20 = arith.cmpi ne, %18, %19 : vector<256x1xi32>
    %c0_i32_8 = arith.constant 0 : i32
    %21 = vector.broadcast %c0_i32_8 : i32 to vector<256x1xi32>
    %22 = arith.cmpi slt, %18, %21 : vector<256x1xi32>
    %c0_i32_9 = arith.constant 0 : i32
    %23 = arith.cmpi slt, %16, %c0_i32_9 : i32
    %24 = vector.broadcast %23 : i1 to vector<256x1xi1>
    %25 = vector.broadcast %24 : vector<256x1xi1> to vector<256x1xi1>
    %26 = arith.xori %22, %25 : vector<256x1xi1>
    %27 = arith.andi %26, %20 : vector<256x1xi1>
    %28 = vector.broadcast %16 : i32 to vector<256x1xi32>
    %29 = arith.addi %18, %28 : vector<256x1xi32>
    %30 = arith.select %27, %29, %18 : vector<256x1xi1>, vector<256x1xi32>
    %c1_i32_10 = arith.constant 1 : i32
    %31 = vector.broadcast %c1_i32_10 : i32 to vector<256x1xi32>
    %32 = arith.cmpi sge, %30, %31 : vector<256x1xi32>
    %c14_i32 = arith.constant 14 : i32
    %33 = vector.broadcast %c14_i32 : i32 to vector<256x1xi32>
    %34 = arith.cmpi sle, %30, %33 : vector<256x1xi32>
    %cst_11 = arith.constant 0.000000e+00 : f32
    %35 = vector.broadcast %cst_11 : f32 to vector<17x8xf32>
    %36 = vector.extract_strided_slice %13 {offsets = [0, 0], sizes = [239, 8], strides = [1, 1]} : vector<256x8xf32> to vector<239x8xf32>
    %37 = tpu.concatenate %35, %36 in 0 : vector<17x8xf32>, vector<239x8xf32> -> vector<256x8xf32>
    %cst_12 = arith.constant 0.000000e+00 : f32
    %38 = vector.shape_cast %32 : vector<256x1xi1> to vector<256x1xi1>
    %39 = vector.broadcast %38 : vector<256x1xi1> to vector<256x8xi1>
    %40 = vector.broadcast %cst_12 : f32 to vector<256x8xf32>
    %41 = arith.select %39, %37, %40 : vector<256x8xi1>, vector<256x8xf32>
    %cst_13 = arith.constant 0.000000e+00 : f32
    %42 = vector.broadcast %cst_13 : f32 to vector<16x8xf32>
    %43 = vector.extract_strided_slice %13 {offsets = [0, 0], sizes = [240, 8], strides = [1, 1]} : vector<256x8xf32> to vector<240x8xf32>
    %44 = tpu.concatenate %42, %43 in 0 : vector<16x8xf32>, vector<240x8xf32> -> vector<256x8xf32>
    %cst_14 = arith.constant 0.000000e+00 : f32
    %45 = vector.broadcast %cst_14 : f32 to vector<15x8xf32>
    %46 = vector.extract_strided_slice %13 {offsets = [0, 0], sizes = [241, 8], strides = [1, 1]} : vector<256x8xf32> to vector<241x8xf32>
    %47 = tpu.concatenate %45, %46 in 0 : vector<15x8xf32>, vector<241x8xf32> -> vector<256x8xf32>
    %cst_15 = arith.constant 0.000000e+00 : f32
    %48 = vector.shape_cast %34 : vector<256x1xi1> to vector<256x1xi1>
    %49 = vector.broadcast %48 : vector<256x1xi1> to vector<256x8xi1>
    %50 = vector.broadcast %cst_15 : f32 to vector<256x8xf32>
    %51 = arith.select %49, %47, %50 : vector<256x8xi1>, vector<256x8xf32>
    %cst_16 = arith.constant 0.000000e+00 : f32
    %52 = vector.broadcast %cst_16 : f32 to vector<1x8xf32>
    %53 = vector.extract_strided_slice %13 {offsets = [0, 0], sizes = [255, 8], strides = [1, 1]} : vector<256x8xf32> to vector<255x8xf32>
    %54 = tpu.concatenate %52, %53 in 0 : vector<1x8xf32>, vector<255x8xf32> -> vector<256x8xf32>
    %cst_17 = arith.constant 0.000000e+00 : f32
    %55 = vector.shape_cast %32 : vector<256x1xi1> to vector<256x1xi1>
    %56 = vector.broadcast %55 : vector<256x1xi1> to vector<256x8xi1>
    %57 = vector.broadcast %cst_17 : f32 to vector<256x8xf32>
    %58 = arith.select %56, %54, %57 : vector<256x8xi1>, vector<256x8xf32>
    %cst_18 = arith.constant 0.000000e+00 : f32
    %59 = vector.broadcast %cst_18 : f32 to vector<1x8xf32>
    %60 = vector.extract_strided_slice %13 {offsets = [1, 0], sizes = [255, 8], strides = [1, 1]} : vector<256x8xf32> to vector<255x8xf32>
    %61 = tpu.concatenate %60, %59 in 0 : vector<255x8xf32>, vector<1x8xf32> -> vector<256x8xf32>
    %cst_19 = arith.constant 0.000000e+00 : f32
    %62 = vector.shape_cast %34 : vector<256x1xi1> to vector<256x1xi1>
    %63 = vector.broadcast %62 : vector<256x1xi1> to vector<256x8xi1>
    %64 = vector.broadcast %cst_19 : f32 to vector<256x8xf32>
    %65 = arith.select %63, %61, %64 : vector<256x8xi1>, vector<256x8xf32>
    %cst_20 = arith.constant 0.000000e+00 : f32
    %66 = vector.broadcast %cst_20 : f32 to vector<15x8xf32>
    %67 = vector.extract_strided_slice %13 {offsets = [15, 0], sizes = [241, 8], strides = [1, 1]} : vector<256x8xf32> to vector<241x8xf32>
    %68 = tpu.concatenate %67, %66 in 0 : vector<241x8xf32>, vector<15x8xf32> -> vector<256x8xf32>
    %cst_21 = arith.constant 0.000000e+00 : f32
    %69 = vector.shape_cast %32 : vector<256x1xi1> to vector<256x1xi1>
    %70 = vector.broadcast %69 : vector<256x1xi1> to vector<256x8xi1>
    %71 = vector.broadcast %cst_21 : f32 to vector<256x8xf32>
    %72 = arith.select %70, %68, %71 : vector<256x8xi1>, vector<256x8xf32>
    %cst_22 = arith.constant 0.000000e+00 : f32
    %73 = vector.broadcast %cst_22 : f32 to vector<16x8xf32>
    %74 = vector.extract_strided_slice %13 {offsets = [16, 0], sizes = [240, 8], strides = [1, 1]} : vector<256x8xf32> to vector<240x8xf32>
    %75 = tpu.concatenate %74, %73 in 0 : vector<240x8xf32>, vector<16x8xf32> -> vector<256x8xf32>
    %cst_23 = arith.constant 0.000000e+00 : f32
    %76 = vector.broadcast %cst_23 : f32 to vector<17x8xf32>
    %77 = vector.extract_strided_slice %13 {offsets = [17, 0], sizes = [239, 8], strides = [1, 1]} : vector<256x8xf32> to vector<239x8xf32>
    %78 = tpu.concatenate %77, %76 in 0 : vector<239x8xf32>, vector<17x8xf32> -> vector<256x8xf32>
    %cst_24 = arith.constant 0.000000e+00 : f32
    %79 = vector.shape_cast %34 : vector<256x1xi1> to vector<256x1xi1>
    %80 = vector.broadcast %79 : vector<256x1xi1> to vector<256x8xi1>
    %81 = vector.broadcast %cst_24 : f32 to vector<256x8xf32>
    %82 = arith.select %80, %78, %81 : vector<256x8xi1>, vector<256x8xf32>
    %83 = tpu.concatenate %41, %44, %51, %58, %13, %65, %72, %75, %82 in 1 : vector<256x8xf32>, vector<256x8xf32>, vector<256x8xf32>, vector<256x8xf32>, vector<256x8xf32>, vector<256x8xf32>, vector<256x8xf32>, vector<256x8xf32>, vector<256x8xf32> -> vector<256x72xf32>
    %84 = arith.truncf %83 : vector<256x72xf32> to vector<256x72xbf16>
    %c0_25 = arith.constant 0 : index
    %c0_26 = arith.constant 0 : index
    %85 = vector.load %arg4[%c0_25, %c0_26] : memref<72x16xbf16, #tpu.memory_space<vmem>>, vector<72x16xbf16>
    %cst_27 = arith.constant dense<0.000000e+00> : vector<256x16xf32>
    %86 = tpu.matmul %84, %85, %cst_27 {dimension_numbers = #tpu.dot_dimension_numbers<[1], [0], [0], [1], [0, 0, 1, 1], [], []>} : vector<256x72xbf16>, vector<72x16xbf16>, vector<256x16xf32> -> vector<256x16xf32>
    %c0_28 = arith.constant 0 : index
    %c0_29 = arith.constant 0 : index
    %87 = vector.load %arg5[%c0_28, %c0_29] : memref<1x16xf32, #tpu.memory_space<vmem>>, vector<1x16xf32>
    %88 = vector.broadcast %87 : vector<1x16xf32> to vector<256x16xf32>
    %89 = arith.addf %86, %88 : vector<256x16xf32>
    %90 = arith.truncf %89 : vector<256x16xf32> to vector<256x16xbf16>
    %c0_30 = arith.constant 0 : index
    %c0_31 = arith.constant 0 : index
    %c0_32 = arith.constant 0 : index
    %91 = vector.load %arg6[%c0_30, %c0_31, %c0_32] : memref<1x256x16xbf16, #tpu.memory_space<vmem>>, vector<1x256x16xbf16>
    %92 = vector.shape_cast %91 : vector<1x256x16xbf16> to vector<256x16xbf16>
    %93 = vector.shape_cast %90 : vector<256x16xbf16> to vector<1x256x16xbf16>
    tpu.vector_store %arg6[%c0_30, %c0_31, %c0_32], %93 {strides = array<i32>} : memref<1x256x16xbf16, #tpu.memory_space<vmem>>, vector<1x256x16xbf16>,
    %cst_33 = arith.constant dense<0.000000e+00> : vector<16xf32>
    %94 = vector.multi_reduction <add>, %89, %cst_33 [0] : vector<256x16xf32> to vector<16xf32>
    %95 = vector.shape_cast %94 : vector<16xf32> to vector<1x16xf32>
    %96 = arith.mulf %89, %89 : vector<256x16xf32>
    %cst_34 = arith.constant dense<0.000000e+00> : vector<16xf32>
    %97 = vector.multi_reduction <add>, %96, %cst_34 [0] : vector<256x16xf32> to vector<16xf32>
    %98 = vector.shape_cast %97 : vector<16xf32> to vector<1x16xf32>
    %99 = tpu.concatenate %95, %98 in 0 : vector<1x16xf32>, vector<1x16xf32> -> vector<2x16xf32>
    %c0_35 = arith.constant 0 : index
    %c0_36 = arith.constant 0 : index
    %c0_37 = arith.constant 0 : index
    %100 = vector.load %arg7[%c0_35, %c0_36, %c0_37] : memref<1x2x16xf32, #tpu.memory_space<vmem>>, vector<1x2x16xf32>
    %101 = vector.shape_cast %100 : vector<1x2x16xf32> to vector<2x16xf32>
    %102 = vector.shape_cast %99 : vector<2x16xf32> to vector<1x2x16xf32>
    tpu.vector_store %arg7[%c0_35, %c0_36, %c0_37], %102 {strides = array<i32>} : memref<1x2x16xf32, #tpu.memory_space<vmem>>, vector<1x2x16xf32>,
    return
  }
  func.func @transform_0(%arg0: i32) -> (i32, i32, i32) {
    %c0_i32 = arith.constant 0 : i32
    %c0_i32_0 = arith.constant 0 : i32
    %c0_i32_1 = arith.constant 0 : i32
    return %arg0, %c0_i32, %c0_i32_0 : i32, i32, i32
  }
  func.func @transform_1(%arg0: i32) -> (i32, i32) {
    %c0_i32 = arith.constant 0 : i32
    %c0_i32_0 = arith.constant 0 : i32
    %c0_i32_1 = arith.constant 0 : i32
    return %c0_i32, %c0_i32_0 : i32, i32
  }
  func.func @transform_2(%arg0: i32) -> (i32, i32) {
    %c0_i32 = arith.constant 0 : i32
    %c0_i32_0 = arith.constant 0 : i32
    %c0_i32_1 = arith.constant 0 : i32
    return %c0_i32, %c0_i32_0 : i32, i32
  }
  func.func @transform_3(%arg0: i32) -> (i32, i32) {
    %c0_i32 = arith.constant 0 : i32
    %c0_i32_0 = arith.constant 0 : i32
    %c0_i32_1 = arith.constant 0 : i32
    return %c0_i32, %c0_i32_0 : i32, i32
  }
  func.func @transform_4(%arg0: i32) -> (i32, i32) {
    %c0_i32 = arith.constant 0 : i32
    %c0_i32_0 = arith.constant 0 : i32
    %c0_i32_1 = arith.constant 0 : i32
    return %c0_i32, %c0_i32_0 : i32, i32
  }
  func.func @transform_5(%arg0: i32) -> (i32, i32, i32) {
    %c0_i32 = arith.constant 0 : i32
    %c0_i32_0 = arith.constant 0 : i32
    %c0_i32_1 = arith.constant 0 : i32
    return %arg0, %c0_i32, %c0_i32_0 : i32, i32, i32
  }
  func.func @transform_6(%arg0: i32) -> (i32, i32, i32) {
    %c0_i32 = arith.constant 0 : i32
    %c0_i32_0 = arith.constant 0 : i32
    %c0_i32_1 = arith.constant 0 : i32
    return %arg0, %c0_i32, %c0_i32_0 : i32, i32, i32
  }
}

module attributes {stable_mosaic.version = 11 : i64} {
  func.func @_finalize_kernel(%arg0: i32, %arg1: memref<32x256xbf16, #tpu.memory_space<vmem>>, %arg2: memref<1x256xf32, #tpu.memory_space<vmem>>, %arg3: memref<1x256xf32, #tpu.memory_space<vmem>>, %arg4: memref<32x256xf32, #tpu.memory_space<vmem>>) attributes {dimension_semantics = [#tpu.dimension_semantics<parallel>], iteration_bounds = array<i64: 1>, scalar_prefetch = 0 : i64, scratch_operands = 0 : i64, tpu.core_type = #tpu.core_type<tc>, window_params = [{transform_indices = @transform_0, window_bounds = array<i64: 32, 256>}, {pipeline_mode = #tpu.pipeline_mode<synchronous>, transform_indices = @transform_1, window_bounds = array<i64: 1, 256>}, {pipeline_mode = #tpu.pipeline_mode<synchronous>, transform_indices = @transform_2, window_bounds = array<i64: 1, 256>}, {transform_indices = @transform_3, window_bounds = array<i64: 32, 256>}]} {
    %c0 = arith.constant 0 : index
    %c0_0 = arith.constant 0 : index
    %0 = vector.load %arg1[%c0, %c0_0] : memref<32x256xbf16, #tpu.memory_space<vmem>>, vector<32x256xbf16>
    %1 = arith.extf %0 : vector<32x256xbf16> to vector<32x256xf32>
    %c0_1 = arith.constant 0 : index
    %c0_2 = arith.constant 0 : index
    %2 = vector.load %arg2[%c0_1, %c0_2] : memref<1x256xf32, #tpu.memory_space<vmem>>, vector<1x256xf32>
    %3 = vector.broadcast %2 : vector<1x256xf32> to vector<32x256xf32>
    %4 = arith.mulf %1, %3 : vector<32x256xf32>
    %c0_3 = arith.constant 0 : index
    %c0_4 = arith.constant 0 : index
    %5 = vector.load %arg3[%c0_3, %c0_4] : memref<1x256xf32, #tpu.memory_space<vmem>>, vector<1x256xf32>
    %6 = vector.broadcast %5 : vector<1x256xf32> to vector<32x256xf32>
    %7 = arith.addf %4, %6 : vector<32x256xf32>
    %cst = arith.constant 0.000000e+00 : f32
    %8 = vector.broadcast %cst : f32 to vector<32x256xf32>
    %9 = arith.cmpf ogt, %7, %8 : vector<32x256xf32>
    %cst_5 = arith.constant 2.000000e-01 : f32
    %10 = vector.broadcast %cst_5 : f32 to vector<32x256xf32>
    %11 = arith.mulf %10, %7 : vector<32x256xf32>
    %12 = arith.select %9, %7, %11 : vector<32x256xi1>, vector<32x256xf32>
    %c0_6 = arith.constant 0 : index
    %c0_7 = arith.constant 0 : index
    %13 = vector.load %arg4[%c0_6, %c0_7] : memref<32x256xf32, #tpu.memory_space<vmem>>, vector<32x256xf32>
    tpu.vector_store %arg4[%c0_6, %c0_7], %12 {strides = array<i32>} : memref<32x256xf32, #tpu.memory_space<vmem>>, vector<32x256xf32>,
    return
  }
  func.func @transform_0(%arg0: i32) -> (i32, i32) {
    %c0_i32 = arith.constant 0 : i32
    %c0_i32_0 = arith.constant 0 : i32
    return %arg0, %c0_i32 : i32, i32
  }
  func.func @transform_1(%arg0: i32) -> (i32, i32) {
    %c0_i32 = arith.constant 0 : i32
    %c0_i32_0 = arith.constant 0 : i32
    %c0_i32_1 = arith.constant 0 : i32
    return %c0_i32, %c0_i32_0 : i32, i32
  }
  func.func @transform_2(%arg0: i32) -> (i32, i32) {
    %c0_i32 = arith.constant 0 : i32
    %c0_i32_0 = arith.constant 0 : i32
    %c0_i32_1 = arith.constant 0 : i32
    return %c0_i32, %c0_i32_0 : i32, i32
  }
  func.func @transform_3(%arg0: i32) -> (i32, i32) {
    %c0_i32 = arith.constant 0 : i32
    %c0_i32_0 = arith.constant 0 : i32
    return %arg0, %c0_i32 : i32, i32
  }
}

</mosaic_0001>

<llo_original>
// kernel: fire_forward.5
$region0: #{fire_forward.5}
  #allocation0 [shape = 'u32[]', space=smem, size = 0x4, offset = 0x4, fixed_abs, tag = 'smem constant byte address 0x4 - core index']
  #allocation1 [shape = 'u32[144,128]{1,0:T(1,128)}', space=vmem, size = 0x12000, scoped, tag = 'internal scratch']
  %s0 = inlined_call_operand.vmem [shape: bf16[32,256], index: 0, kind: input, shape index: {}]
  %s1 = inlined_call_operand.vmem [shape: f32[1,256], index: 1, kind: input, shape index: {}]
  %s2 = inlined_call_operand.vmem [shape: f32[1,256], index: 2, kind: input, shape index: {}]
  %s3 = inlined_call_operand.vmem [shape: f32[32,256], index: 3, kind: output, shape index: {}]
  %s4 = sld [smem:[#allocation0]]
  $region22: #{fire_forward.5} parent=0
    _
  %s6 = ssub.s32 1, %s4
  %s7 = scalar_select 0, %s6, %s4
  // Predicated region
  $region2: #{fire_forward.5} parent=0 // pred_check
    _
  $region3: #{fire_forward.5} parent=0 // pred_check_branch
    %9 = sbr.rel (0) target = $region5
  $region4: #{fire_forward.5} parent=0 // pred_region
    _
  $region5: #{fire_forward.5} parent=0 // pred_fallthru
    _
  // Predicated region
  $region6: #{fire_forward.5} parent=0 // pred_check
    _
  $region7: #{fire_forward.5} parent=0 // pred_check_branch
    %11 = sbr.rel (0) target = $region9
  $region8: #{fire_forward.5} parent=0 // pred_region
    _
  $region9: #{fire_forward.5} parent=0 // pred_fallthru
    _
  // Predicated region
  $region10: #{fire_forward.5} parent=0 // pred_check
    _
  $region11: #{fire_forward.5} parent=0 // pred_check_branch
    %13 = sbr.rel (0) target = $region13
  $region12: #{fire_forward.5} parent=0 // pred_region
    _
  $region13: #{fire_forward.5} parent=0 // pred_fallthru
    _
  %v14 = vld [vmem:[%s0] sm:$0xff]
  %v15 = vld [vmem:[%s0 + $0x8] sm:$0xff]
  %v16 = vld [vmem:[%s0 + $0x10] sm:$0xff]
  %v17 = vld [vmem:[%s0 + $0x18] sm:$0xff]
  %v18 = vunpack.c.l.bf16 %v14
  %v19 = vunpack.c.h.bf16 %v14
  %v20 = vunpack.c.l.bf16 %v15
  %v21 = vunpack.c.h.bf16 %v15
  %v22 = vunpack.c.l.bf16 %v16
  %v23 = vunpack.c.h.bf16 %v16
  %v24 = vunpack.c.l.bf16 %v17
  %v25 = vunpack.c.h.bf16 %v17
  %v26 = vld [vmem:[%s1] sm:$0x3]
  %v28 = vlaneseq
  %v29 = vshrl.u32 %v28, 7
  %v30 = vsub.s32 0, %v29
  %v31 = vrot.slane %v26, %v30
  %v32 = vlaneseq
  %v33 = vshrl.u32 %v32, 7
  %v34 = vsub.s32 1, %v33
  %v35 = vrot.slane %v26, %v34
  %v38 = vmul.f32 %v18, %v31
  %v39 = vmul.f32 %v19, %v35
  %v40 = vmul.f32 %v20, %v31
  %v41 = vmul.f32 %v21, %v35
  %v42 = vmul.f32 %v22, %v31
  %v43 = vmul.f32 %v23, %v35
  %v44 = vmul.f32 %v24, %v31
  %v45 = vmul.f32 %v25, %v35
  %v46 = vld [vmem:[%s2] sm:$0x3]
  %v48 = vlaneseq
  %v49 = vshrl.u32 %v48, 7
  %v50 = vsub.s32 0, %v49
  %v51 = vrot.slane %v46, %v50
  %v52 = vlaneseq
  %v53 = vshrl.u32 %v52, 7
  %v54 = vsub.s32 1, %v53
  %v55 = vrot.slane %v46, %v54
  %v58 = vadd.f32 %v38, %v51
  %v59 = vadd.f32 %v39, %v55
  %v60 = vadd.f32 %v40, %v51
  %v61 = vadd.f32 %v41, %v55
  %v62 = vadd.f32 %v42, %v51
  %v63 = vadd.f32 %v43, %v55
  %v64 = vadd.f32 %v44, %v51
  %v65 = vadd.f32 %v45, %v55
  %vm66 = vcmp.gt.f32.partialorder %v58, 0.0
  %vm67 = vcmp.gt.f32.partialorder %v59, 0.0
  %vm68 = vcmp.gt.f32.partialorder %v60, 0.0
  %vm69 = vcmp.gt.f32.partialorder %v61, 0.0
  %vm70 = vcmp.gt.f32.partialorder %v62, 0.0
  %vm71 = vcmp.gt.f32.partialorder %v63, 0.0
  %vm72 = vcmp.gt.f32.partialorder %v64, 0.0
  %vm73 = vcmp.gt.f32.partialorder %v65, 0.0
  %v74 = vmul.f32 %v58, 0.2
  %v75 = vmul.f32 %v59, 0.2
  %v76 = vmul.f32 %v60, 0.2
  %v77 = vmul.f32 %v61, 0.2
  %v78 = vmul.f32 %v62, 0.2
  %v79 = vmul.f32 %v63, 0.2
  %v80 = vmul.f32 %v64, 0.2
  %v81 = vmul.f32 %v65, 0.2
  %v82 = vsel %vm66, %v58, %v74
  %v83 = vsel %vm67, %v59, %v75
  %v84 = vsel %vm68, %v60, %v76
  %v85 = vsel %vm69, %v61, %v77
  %v86 = vsel %vm70, %v62, %v78
  %v87 = vsel %vm71, %v63, %v79
  %v88 = vsel %vm72, %v64, %v80
  %v89 = vsel %vm73, %v65, %v81
  %90 = vst [vmem:[%s3] sm:$0xff] %v82
  %91 = vst [vmem:[%s3 + $0x8] sm:$0xff] %v83
  %92 = vst [vmem:[%s3 + $0x10] sm:$0xff] %v84
  %93 = vst [vmem:[%s3 + $0x18] sm:$0xff] %v85
  %94 = vst [vmem:[%s3 + $0x20] sm:$0xff] %v86
  %95 = vst [vmem:[%s3 + $0x28] sm:$0xff] %v87
  %96 = vst [vmem:[%s3 + $0x30] sm:$0xff] %v88
  %97 = vst [vmem:[%s3 + $0x38] sm:$0xff] %v89
  // Predicated region
  $region14: #{fire_forward.5} parent=0 // pred_check
    _
  $region15: #{fire_forward.5} parent=0 // pred_check_branch
    %99 = sbr.rel (0) target = $region17
  $region16: #{fire_forward.5} parent=0 // pred_region
    _
  $region17: #{fire_forward.5} parent=0 // pred_fallthru
    _
  // Predicated region
  $region18: #{fire_forward.5} parent=0 // pred_check
    _
  $region19: #{fire_forward.5} parent=0 // pred_check_branch
    %101 = sbr.rel (0) target = $region21
  $region20: #{fire_forward.5} parent=0 // pred_region
    _
  $region21: #{fire_forward.5} parent=0 // pred_fallthru
    _

// kernel: fire_forward.3
$region0: #{fire_forward.3}
  #allocation0 [shape = 'u32[]', space=smem, size = 0x4, offset = 0x4, fixed_abs, tag = 'smem constant byte address 0x4 - core index']
  #allocation1 [shape = 'u32[144,128]{1,0:T(1,128)}', space=vmem, size = 0x12000, scoped, tag = 'internal scratch']
  %s0 = inlined_call_operand.vmem [shape: bf16[512,4], index: 0, kind: input, shape index: {}]
  %s1 = inlined_call_operand.vmem [shape: bf16[4,8], index: 1, kind: input, shape index: {}]
  %s2 = inlined_call_operand.vmem [shape: f32[1,8], index: 2, kind: input, shape index: {}]
  %s3 = inlined_call_operand.vmem [shape: bf16[512,8], index: 3, kind: output, shape index: {0}]
  %s4 = inlined_call_operand.vmem [shape: f32[2,2,8], index: 4, kind: output, shape index: {1}]
  %5 = xla_tuple %s3, %s4
  %s6 = sld [smem:[#allocation0]]
  $region53: #{fire_forward.3} parent=0
    _
  %s8 = ssub.s32 1, %s6
  %s9 = scalar_select 0, %s8, %s6
  loop: start=0, step=1, limit=4
  $region2: #{fire_forward.3} parent=0 // loop_pre_header
    _
  $region3: #{fire_forward.3} parent=0 // loop_header
    %s11 = sphi 0, %s15
    %p12 = scmp.ge.s32.totalorder %s11, 4
    %s21 = sphi 0, %s23
    %s24 = sphi 0, %s21
    %s25 = sphi 0, %s24
    %s41 = sphi 0, %s25
    %s45 = sphi 0, %s45
    %s47 = sphi 0, %s45
    %s48 = sphi 0, %s47
    %s62 = sphi 0, %s48
    %s66 = sphi 0, %s66
    %s68 = sphi 0, %s66
    %s69 = sphi 0, %s68
    %s83 = sphi 0, %s69
    %s89 = sphi 0, %s91
    %s92 = sphi 0, %s89
    %s93 = sphi 0, %s92
    %s109 = sphi 0, %s93
    %s115 = sphi 0, %s117
    %s118 = sphi 0, %s115
    %s119 = sphi 0, %s118
    %s135 = sphi 0, %s119
  $region4: #{fire_forward.3} parent=0 // loop_header_branch
    %14 = sbr.rel (%p12) target = $region8
  $region5: #{fire_forward.3} parent=0 // loop_body
    %s16 = ssub.s32 %s11, 1
    %s17 = ssub.s32 %s11, 2
    %s18 = sadd.s32 %s11, 1
    %s19 = ssub.s32 %s11, %s18
    %p20 = scmp.eq.s32.totalorder %s19, 0
    %s22 = sadd.s32 %s21, 1
    %s23 = scalar_select %p20, %s21, %s22
    %p26 = pneg %p20
    %p27 = scmp.eq.s32.totalorder %s11, 1
    %p28 = por %p26, %p27
    %p29 = scmp.ne.s32.totalorder %s21, %s24
    %p30 = scmp.eq.s32.totalorder %s11, 0
    %p31 = por %p29, %p30
    %p32 = scmp.ne.s32.totalorder %s21, %s24
    %p33 = scmp.eq.s32.totalorder %s16, 1
    %p34 = por %p32, %p33
    %p35 = scmp.ne.s32.totalorder %s24, %s25
    %p36 = scmp.eq.s32.totalorder %s16, 0
    %p37 = por %p35, %p36
    %p38 = scmp.ne.s32.totalorder %s24, %s25
    %p39 = scmp.eq.s32.totalorder %s17, 1
    %p40 = por %p38, %p39
    %p42 = scmp.ne.s32.totalorder %s25, %s41
    %p43 = scmp.eq.s32.totalorder %s17, 0
    %p44 = por %p42, %p43
    %s46 = sadd.s32 %s45, 1
    %p49 = scmp.eq.s32.totalorder %s11, 1
    %p50 = scmp.ne.s32.totalorder %s45, %s47
    %p51 = scmp.eq.s32.totalorder %s11, 0
    %p52 = por %p50, %p51
    %p53 = scmp.ne.s32.totalorder %s45, %s47
    %p54 = scmp.eq.s32.totalorder %s16, 1
    %p55 = por %p53, %p54
    %p56 = scmp.ne.s32.totalorder %s47, %s48
    %p57 = scmp.eq.s32.totalorder %s16, 0
    %p58 = por %p56, %p57
    %p59 = scmp.ne.s32.totalorder %s47, %s48
    %p60 = scmp.eq.s32.totalorder %s17, 1
    %p61 = por %p59, %p60
    %p63 = scmp.ne.s32.totalorder %s48, %s62
    %p64 = scmp.eq.s32.totalorder %s17, 0
    %p65 = por %p63, %p64
    %s67 = sadd.s32 %s66, 1
    %p70 = scmp.eq.s32.totalorder %s11, 1
    %p71 = scmp.ne.s32.totalorder %s66, %s68
    %p72 = scmp.eq.s32.totalorder %s11, 0
    %p73 = por %p71, %p72
    %p74 = scmp.ne.s32.totalorder %s66, %s68
    %p75 = scmp.eq.s32.totalorder %s16, 1
    %p76 = por %p74, %p75
    %p77 = scmp.ne.s32.totalorder %s68, %s69
    %p78 = scmp.eq.s32.totalorder %s16, 0
    %p79 = por %p77, %p78
    %p80 = scmp.ne.s32.totalorder %s68, %s69
    %p81 = scmp.eq.s32.totalorder %s17, 1
    %p82 = por %p80, %p81
    %p84 = scmp.ne.s32.totalorder %s69, %s83
    %p85 = scmp.eq.s32.totalorder %s17, 0
    %p86 = por %p84, %p85
    %s87 = ssub.s32 %s11, %s18
    %p88 = scmp.eq.s32.totalorder %s87, 0
    %s90 = sadd.s32 %s89, 1
    %s91 = scalar_select %p88, %s89, %s90
    %p94 = pneg %p88
    %p95 = scmp.eq.s32.totalorder %s11, 1
    %p96 = por %p94, %p95
    %p97 = scmp.ne.s32.totalorder %s89, %s92
    %p98 = scmp.eq.s32.totalorder %s11, 0
    %p99 = por %p97, %p98
    %p100 = scmp.ne.s32.totalorder %s89, %s92
    %p101 = scmp.eq.s32.totalorder %s16, 1
    %p102 = por %p100, %p101
    %p103 = scmp.ne.s32.totalorder %s92, %s93
    %p104 = scmp.eq.s32.totalorder %s16, 0
    %p105 = por %p103, %p104
    %p106 = scmp.ne.s32.totalorder %s92, %s93
    %p107 = scmp.eq.s32.totalorder %s17, 1
    %p108 = por %p106, %p107
    %p110 = scmp.ne.s32.totalorder %s93, %s109
    %p111 = scmp.eq.s32.totalorder %s17, 0
    %p112 = por %p110, %p111
    %s113 = ssub.s32 %s11, %s18
    %p114 = scmp.eq.s32.totalorder %s113, 0
    %s116 = sadd.s32 %s115, 1
    %s117 = scalar_select %p114, %s115, %s116
    %p120 = pneg %p114
    %p121 = scmp.eq.s32.totalorder %s11, 1
    %p122 = por %p120, %p121
    %p123 = scmp.ne.s32.totalorder %s115, %s118
    %p124 = scmp.eq.s32.totalorder %s11, 0
    %p125 = por %p123, %p124
    %p126 = scmp.ne.s32.totalorder %s115, %s118
    %p127 = scmp.eq.s32.totalorder %s16, 1
    %p128 = por %p126, %p127
    %p129 = scmp.ne.s32.totalorder %s118, %s119
    %p130 = scmp.eq.s32.totalorder %s16, 0
    %p131 = por %p129, %p130
    %p132 = scmp.ne.s32.totalorder %s118, %s119
    %p133 = scmp.eq.s32.totalorder %s17, 1
    %p134 = por %p132, %p133
    %p136 = scmp.ne.s32.totalorder %s119, %s135
    %p137 = scmp.eq.s32.totalorder %s17, 0
    %p138 = por %p136, %p137
    %p139 = scmp.le.s32.totalorder 1, %s11
    %p140 = scmp.lt.s32.totalorder %s11, 3
    %p141 = pnand %p139, %p140
    %p142 = pneg %p141
    // Predicated region
    $region9: #{fire_forward.3} parent=5 // pred_check
      _
    $region10: #{fire_forward.3} parent=5 // pred_check_branch
      %144 = sbr.rel (%p141) target = $region12
    $region11: #{fire_forward.3} parent=5 // pred_region
      %s145 = ssub.s32 %s11, 1
      // Predicated region
      $region13: #{fire_forward.3} parent=11 // pred_check
        %p146 = pneg %p58
      $region14: #{fire_forward.3} parent=11 // pred_check_branch
        %148 = sbr.rel (%p146) target = $region16
      $region15: #{fire_forward.3} parent=11 // pred_region
        _
      $region16: #{fire_forward.3} parent=11 // pred_fallthru
        _
      // Predicated region
      $region17: #{fire_forward.3} parent=11 // pred_check
        %p149 = pneg %p79
      $region18: #{fire_forward.3} parent=11 // pred_check_branch
        %151 = sbr.rel (%p149) target = $region20
      $region19: #{fire_forward.3} parent=11 // pred_region
        _
      $region20: #{fire_forward.3} parent=11 // pred_fallthru
        _
    $region12: #{fire_forward.3} parent=5 // pred_fallthru
      _
    %p152 = scmp.lt.s32.totalorder %s11, 2
    // Predicated region
    $region21: #{fire_forward.3} parent=5 // pred_check
      %p153 = pneg %p152
    $region22: #{fire_forward.3} parent=5 // pred_check_branch
      %155 = sbr.rel (%p153) target = $region24
    $region23: #{fire_forward.3} parent=5 // pred_region
      // Predicated region
      $region25: #{fire_forward.3} parent=23 // pred_check
        %p156 = pneg %p31
      $region26: #{fire_forward.3} parent=23 // pred_check_branch
        %158 = sbr.rel (%p156) target = $region28
      $region27: #{fire_forward.3} parent=23 // pred_region
        %s159 = smul.u32 32, %s11
        %p160 = scmp.lt.s32.totalorder %s159, 63
        %s161 = scalar_select %p160, %s159, 63
        %s162 = smul.addr %s161, 4
        %s163 = scalar_lea.vmem %s0, %s162
        %s164 = smul.u32 32, %s11
      $region28: #{fire_forward.3} parent=23 // pred_fallthru
        _
    $region24: #{fire_forward.3} parent=5 // pred_fallthru
      _
    %p165 = scmp.le.s32.totalorder 1, %s11
    %p166 = scmp.lt.s32.totalorder %s11, 3
    %p167 = pnand %p165, %p166
    %p168 = pneg %p167
    // Predicated region
    $region29: #{fire_forward.3} parent=5 // pred_check
      _
    $region30: #{fire_forward.3} parent=5 // pred_check_branch
      %170 = sbr.rel (%p167) target = $region32
    $region31: #{fire_forward.3} parent=5 // pred_region
      %s171 = ssub.s32 %s11, 1
      %s172 = smul.u32 32, %s16
      %p173 = scmp.lt.s32.totalorder %s172, 63
      %s174 = scalar_select %p173, %s172, 63
      %s175 = smul.addr %s174, 4
      %s176 = scalar_lea.vmem %s0, %s175
      %p177 = pneg %p37
      %p178 = pneg %p34
      %p179 = pneg %p58
      %p180 = pneg %p55
      %p181 = pneg %p79
      %p182 = pneg %p76
      %p183 = pneg %p105
      %p184 = pneg %p102
      %s185 = smul.u32 32, %s16
      %p186 = scmp.lt.s32.totalorder %s185, 63
      %s187 = scalar_select %p186, %s185, 63
      %s188 = smul.addr %s187, 4
      %s189 = scalar_lea.vmem %s3, %s188
      %p190 = pneg %p131
      %p191 = pneg %p128
      %p192 = scmp.lt.s32.totalorder %s16, 1
      %s193 = scalar_select %p192, %s16, 1
      %s194 = smul.addr %s193, 2
      %s195 = scalar_lea.vmem %s4, %s194
      %s196 = smul.u32 32, %s16
      %p197 = scmp.lt.s32.totalorder %s196, 63
      %s198 = scalar_select %p197, %s196, 63
      %s199 = smul.addr %s198, 4
      %s200 = scalar_lea.vmem %s0, %s199
      %s201 = smul.u32 32, %s16
      %s202 = smul.u32 32, %s16
      %p203 = scmp.lt.s32.totalorder %s202, 63
      %s204 = scalar_select %p203, %s202, 63
      %s205 = smul.addr %s204, 4
      %s206 = scalar_lea.vmem %s3, %s205
      %s207 = smul.u32 32, %s16
      %p208 = scmp.lt.s32.totalorder %s16, 1
      %s209 = scalar_select %p208, %s16, 1
      %s210 = smul.addr %s209, 2
      %s211 = scalar_lea.vmem %s4, %s210
      %v213 = vld [vmem:[%s200] sm:$0xf]
      %v214 = vld [vmem:[%s200 + $0x4] sm:$0xf]
      %v215 = vld [vmem:[%s200 + $0x8] sm:$0xf]
      %v216 = vld [vmem:[%s200 + $0xc] sm:$0xf]
      %v217 = vld [vmem:[%s200 + $0x10] sm:$0xf]
      %v218 = vld [vmem:[%s200 + $0x14] sm:$0xf]
      %v219 = vld [vmem:[%s200 + $0x18] sm:$0xf]
      %v220 = vld [vmem:[%s200 + $0x1c] sm:$0xf]
      %v221 = vld [vmem:[%s200 + $0x20] sm:$0xf]
      %v222 = vld [vmem:[%s200 + $0x24] sm:$0xf]
      %v223 = vld [vmem:[%s200 + $0x28] sm:$0xf]
      %v224 = vld [vmem:[%s200 + $0x2c] sm:$0xf]
      %v225 = vld [vmem:[%s200 + $0x30] sm:$0xf]
      %v226 = vld [vmem:[%s200 + $0x34] sm:$0xf]
      %v227 = vld [vmem:[%s200 + $0x38] sm:$0xf]
      %v228 = vld [vmem:[%s200 + $0x3c] sm:$0xf]
      %v229 = vld [vmem:[%s200 + $0x40] sm:$0xf]
      %v230 = vld [vmem:[%s200 + $0x44] sm:$0xf]
      %v231 = vld [vmem:[%s200 + $0x48] sm:$0xf]
      %v232 = vld [vmem:[%s200 + $0x4c] sm:$0xf]
      %v233 = vld [vmem:[%s200 + $0x50] sm:$0xf]
      %v234 = vld [vmem:[%s200 + $0x54] sm:$0xf]
      %v235 = vld [vmem:[%s200 + $0x58] sm:$0xf]
      %v236 = vld [vmem:[%s200 + $0x5c] sm:$0xf]
      %v237 = vld [vmem:[%s200 + $0x60] sm:$0xf]
      %v238 = vld [vmem:[%s200 + $0x64] sm:$0xf]
      %v239 = vld [vmem:[%s200 + $0x68] sm:$0xf]
      %v240 = vld [vmem:[%s200 + $0x6c] sm:$0xf]
      %v241 = vld [vmem:[%s200 + $0x70] sm:$0xf]
      %v242 = vld [vmem:[%s200 + $0x74] sm:$0xf]
      %v243 = vld [vmem:[%s200 + $0x78] sm:$0xf]
      %v244 = vld [vmem:[%s200 + $0x7c] sm:$0xf]
      %v245 = vld [vmem:[%s1] sm:$0x3]
      %v246 = vld [vmem:[%s2] sm:$0x1]
      %v248 = vlaneseq
      %v249 = vshrl.u32 %v248, 7
      %v250 = vsub.s32 0, %v249
      %v251 = vrot.slane %v246, %v250
      %v285 = vunpack.c.l.b16 %v213
      %v286 = vunpack.c.l.b16 %v214
      %v287 = vunpack.c.l.b16 %v215
      %v288 = vunpack.c.l.b16 %v216
      %v289 = vunpack.c.l.b16 %v217
      %v290 = vunpack.c.l.b16 %v218
      %v291 = vunpack.c.l.b16 %v219
      %v292 = vunpack.c.l.b16 %v220
      %v293 = vunpack.c.l.b16 %v221
      %v294 = vunpack.c.l.b16 %v222
      %v295 = vunpack.c.l.b16 %v223
      %v296 = vunpack.c.l.b16 %v224
      %v297 = vunpack.c.l.b16 %v225
      %v298 = vunpack.c.l.b16 %v226
      %v299 = vunpack.c.l.b16 %v227
      %v300 = vunpack.c.l.b16 %v228
      %v301 = vunpack.c.l.b16 %v229
      %v302 = vunpack.c.l.b16 %v230
      %v303 = vunpack.c.l.b16 %v231
      %v304 = vunpack.c.l.b16 %v232
      %v305 = vunpack.c.l.b16 %v233
      %v306 = vunpack.c.l.b16 %v234
      %v307 = vunpack.c.l.b16 %v235
      %v308 = vunpack.c.l.b16 %v236
      %v309 = vunpack.c.l.b16 %v237
      %v310 = vunpack.c.l.b16 %v238
      %v311 = vunpack.c.l.b16 %v239
      %v312 = vunpack.c.l.b16 %v240
      %v313 = vunpack.c.l.b16 %v241
      %v314 = vunpack.c.l.b16 %v242
      %v315 = vunpack.c.l.b16 %v243
      %v316 = vunpack.c.l.b16 %v244
      %v317 = vpack.c.b16 %v286, %v285
      %v318 = vpack.c.b16 %v288, %v287
      %v319 = vpack.c.b16 %v290, %v289
      %v320 = vpack.c.b16 %v292, %v291
      %v321 = vpack.c.b16 %v294, %v293
      %v322 = vpack.c.b16 %v296, %v295
      %v323 = vpack.c.b16 %v298, %v297
      %v324 = vpack.c.b16 %v300, %v299
      %v325 = vpack.c.b16 %v302, %v301
      %v326 = vpack.c.b16 %v304, %v303
      %v327 = vpack.c.b16 %v306, %v305
      %v328 = vpack.c.b16 %v308, %v307
      %v329 = vpack.c.b16 %v310, %v309
      %v330 = vpack.c.b16 %v312, %v311
      %v331 = vpack.c.b16 %v314, %v313
      %v332 = vpack.c.b16 %v316, %v315
      %vm333 = vcmask 31744
      %v335 = vsel %vm333, %v317, 0
      %v338 = vsel %vm333, %v318, 0
      %v341 = vsel %vm333, %v319, 0
      %v344 = vsel %vm333, %v320, 0
      %v347 = vsel %vm333, %v321, 0
      %v350 = vsel %vm333, %v322, 0
      %v353 = vsel %vm333, %v323, 0
      %v356 = vsel %vm333, %v324, 0
      %v359 = vsel %vm333, %v325, 0
      %v362 = vsel %vm333, %v326, 0
      %v365 = vsel %vm333, %v327, 0
      %v368 = vsel %vm333, %v328, 0
      %v371 = vsel %vm333, %v329, 0
      %v374 = vsel %vm333, %v330, 0
      %v377 = vsel %vm333, %v331, 0
      %v380 = vsel %vm333, %v332, 0
      %vm382 = vcmask 1041408
      %v384 = vsel %vm382, %v245, 0
      %386 = vmatprep.subr.bf16.mxu0 0
      %387 = vmatpush1.bf16.msra.mxu0 %v384
      %388 = vmatprep.subr.bf16.mxu0 0
      %389 = vmatpush1.bf16.msra.mxu0 0
      %390 = vmatprep.subr.bf16.mxu0 0
      %391 = vmatpush1.bf16.msra.mxu0 0
      %392 = vmatprep.subr.bf16.mxu0 0
      %393 = vmatpush1.bf16.msra.mxu0 0
      %394 = vmatprep.subr.bf16.mxu0 0
      %395 = vmatpush1.bf16.msra.mxu0 0
      %396 = vmatprep.subr.bf16.mxu0 0
      %397 = vmatpush1.bf16.msra.mxu0 0
      %398 = vmatprep.subr.bf16.mxu0 0
      %399 = vmatpush1.bf16.msra.mxu0 0
      %400 = vmatprep.subr.bf16.mxu0 0
      %401 = vmatpush1.bf16.msra.mxu0 0
      %402 = vmatprep.subr.bf16.mxu0 0
      %403 = vmatpush1.bf16.msra.mxu0 0
      %404 = vmatprep.subr.bf16.mxu0 0
      %405 = vmatpush1.bf16.msra.mxu0 0
      %406 = vmatprep.subr.bf16.mxu0 0
      %407 = vmatpush1.bf16.msra.mxu0 0
      %408 = vmatprep.subr.bf16.mxu0 0
      %409 = vmatpush1.bf16.msra.mxu0 0
      %410 = vmatprep.subr.bf16.mxu0 0
      %411 = vmatpush1.bf16.msra.mxu0 0
      %412 = vmatprep.subr.bf16.mxu0 0
      %413 = vmatpush1.bf16.msra.mxu0 0
      %414 = vmatprep.subr.bf16.mxu0 0
      %415 = vmatpush1.bf16.msra.mxu0 0
      %416 = vmatprep.subr.bf16.mxu0 0
      %417 = vmatpush1.bf16.msra.mxu0 0
      %418 = vmatprep.mubr.bf16.mxu0 0
      %419 = vmatmul.mubr.bf16.gmra.mrb[0].mxu0 %v335
      %v420 = vpop.f32.mrb[0].mxu0
      %v421 = vadd.f32 %v251, %v420
      %v422 = vpop.f32.mrb[0].mxu0
      %v423 = vpop.f32.mrb[0].mxu0
      %v424 = vadd.f32 %v251, %v423
      %v425 = vpop.f32.mrb[0].mxu0
      %426 = vmatprep.mubr.bf16.mxu0 0
      %427 = vmatmul.mubr.bf16.gmra.mrb[0].mxu0 %v338
      %v428 = vpop.f32.mrb[0].mxu0
      %v429 = vadd.f32 %v251, %v428
      %v430 = vpop.f32.mrb[0].mxu0
      %v431 = vpop.f32.mrb[0].mxu0
      %v432 = vadd.f32 %v251, %v431
      %v433 = vpop.f32.mrb[0].mxu0
      %434 = vmatprep.mubr.bf16.mxu0 0
      %435 = vmatmul.mubr.bf16.gmra.mrb[0].mxu0 %v341
      %v436 = vpop.f32.mrb[0].mxu0
      %v437 = vadd.f32 %v251, %v436
      %v438 = vpop.f32.mrb[0].mxu0
      %v439 = vpop.f32.mrb[0].mxu0
      %v440 = vadd.f32 %v251, %v439
      %v441 = vpop.f32.mrb[0].mxu0
      %442 = vmatprep.mubr.bf16.mxu0 0
      %443 = vmatmul.mubr.bf16.gmra.mrb[0].mxu0 %v344
      %v444 = vpop.f32.mrb[0].mxu0
      %v445 = vadd.f32 %v251, %v444
      %v446 = vpop.f32.mrb[0].mxu0
      %v447 = vpop.f32.mrb[0].mxu0
      %v448 = vadd.f32 %v251, %v447
      %v449 = vpop.f32.mrb[0].mxu0
      %450 = vmatprep.mubr.bf16.mxu0 0
      %451 = vmatmul.mubr.bf16.gmra.mrb[0].mxu0 %v347
      %v452 = vpop.f32.mrb[0].mxu0
      %v453 = vadd.f32 %v251, %v452
      %v454 = vpop.f32.mrb[0].mxu0
      %v455 = vpop.f32.mrb[0].mxu0
      %v456 = vadd.f32 %v251, %v455
      %v457 = vpop.f32.mrb[0].mxu0
      %458 = vmatprep.mubr.bf16.mxu0 0
      %459 = vmatmul.mubr.bf16.gmra.mrb[0].mxu0 %v350
      %v460 = vpop.f32.mrb[0].mxu0
      %v461 = vadd.f32 %v251, %v460
      %v462 = vpop.f32.mrb[0].mxu0
      %v463 = vpop.f32.mrb[0].mxu0
      %v464 = vadd.f32 %v251, %v463
      %v465 = vpop.f32.mrb[0].mxu0
      %466 = vmatprep.mubr.bf16.mxu0 0
      %467 = vmatmul.mubr.bf16.gmra.mrb[0].mxu0 %v353
      %v468 = vpop.f32.mrb[0].mxu0
      %v469 = vadd.f32 %v251, %v468
      %v470 = vpop.f32.mrb[0].mxu0
      %v471 = vpop.f32.mrb[0].mxu0
      %v472 = vadd.f32 %v251, %v471
      %v473 = vpop.f32.mrb[0].mxu0
      %474 = vmatprep.mubr.bf16.mxu0 0
      %475 = vmatmul.mubr.bf16.gmra.mrb[0].mxu0 %v356
      %v476 = vpop.f32.mrb[0].mxu0
      %v477 = vadd.f32 %v251, %v476
      %v478 = vpop.f32.mrb[0].mxu0
      %v479 = vpop.f32.mrb[0].mxu0
      %v480 = vadd.f32 %v251, %v479
      %v481 = vpop.f32.mrb[0].mxu0
      %482 = vmatprep.mubr.bf16.mxu0 0
      %483 = vmatmul.mubr.bf16.gmra.mrb[0].mxu0 %v359
      %v484 = vpop.f32.mrb[0].mxu0
      %v485 = vadd.f32 %v251, %v484
      %v486 = vpop.f32.mrb[0].mxu0
      %v487 = vpop.f32.mrb[0].mxu0
      %v488 = vadd.f32 %v251, %v487
      %v489 = vpop.f32.mrb[0].mxu0
      %490 = vmatprep.mubr.bf16.mxu0 0
      %491 = vmatmul.mubr.bf16.gmra.mrb[0].mxu0 %v362
      %v492 = vpop.f32.mrb[0].mxu0
      %v493 = vadd.f32 %v251, %v492
      %v494 = vpop.f32.mrb[0].mxu0
      %v495 = vpop.f32.mrb[0].mxu0
      %v496 = vadd.f32 %v251, %v495
      %v497 = vpop.f32.mrb[0].mxu0
      %498 = vmatprep.mubr.bf16.mxu0 0
      %499 = vmatmul.mubr.bf16.gmra.mrb[0].mxu0 %v365
      %v500 = vpop.f32.mrb[0].mxu0
      %v501 = vadd.f32 %v251, %v500
      %v502 = vpop.f32.mrb[0].mxu0
      %v503 = vpop.f32.mrb[0].mxu0
      %v504 = vadd.f32 %v251, %v503
      %v505 = vpop.f32.mrb[0].mxu0
      %506 = vmatprep.mubr.bf16.mxu0 0
      %507 = vmatmul.mubr.bf16.gmra.mrb[0].mxu0 %v368
      %v508 = vpop.f32.mrb[0].mxu0
      %v509 = vadd.f32 %v251, %v508
      %v510 = vpop.f32.mrb[0].mxu0
      %v511 = vpop.f32.mrb[0].mxu0
      %v512 = vadd.f32 %v251, %v511
      %v513 = vpop.f32.mrb[0].mxu0
      %514 = vmatprep.mubr.bf16.mxu0 0
      %515 = vmatmul.mubr.bf16.gmra.mrb[0].mxu0 %v371
      %v516 = vpop.f32.mrb[0].mxu0
      %v517 = vadd.f32 %v251, %v516
      %v518 = vpop.f32.mrb[0].mxu0
      %v519 = vpop.f32.mrb[0].mxu0
      %v520 = vadd.f32 %v251, %v519
      %v521 = vpop.f32.mrb[0].mxu0
      %522 = vmatprep.mubr.bf16.mxu0 0
      %523 = vmatmul.mubr.bf16.gmra.mrb[0].mxu0 %v374
      %v524 = vpop.f32.mrb[0].mxu0
      %v525 = vadd.f32 %v251, %v524
      %v526 = vpop.f32.mrb[0].mxu0
      %v527 = vpop.f32.mrb[0].mxu0
      %v528 = vadd.f32 %v251, %v527
      %v529 = vpop.f32.mrb[0].mxu0
      %530 = vmatprep.mubr.bf16.mxu0 0
      %531 = vmatmul.mubr.bf16.gmra.mrb[0].mxu0 %v377
      %v532 = vpop.f32.mrb[0].mxu0
      %v533 = vadd.f32 %v251, %v532
      %v534 = vpop.f32.mrb[0].mxu0
      %v535 = vpop.f32.mrb[0].mxu0
      %v536 = vadd.f32 %v251, %v535
      %v537 = vpop.f32.mrb[0].mxu0
      %538 = vmatprep.mubr.bf16.mxu0 0
      %539 = vmatmul.mubr.bf16.gmra.mrb[0].mxu0 %v380
      %v540 = vpop.f32.mrb[0].mxu0
      %v541 = vadd.f32 %v251, %v540
      %v542 = vpop.f32.mrb[0].mxu0
      %v543 = vpop.f32.mrb[0].mxu0
      %v544 = vadd.f32 %v251, %v543
      %v545 = vpop.f32.mrb[0].mxu0
      %546 = vdwg.mxu0
      %v547 = vpack.c.bf16 %v424, %v421
      %v548 = vpack.c.bf16 %v432, %v429
      %v549 = vpack.c.bf16 %v440, %v437
      %v550 = vpack.c.bf16 %v448, %v445
      %v551 = vpack.c.bf16 %v456, %v453
      %v552 = vpack.c.bf16 %v464, %v461
      %v553 = vpack.c.bf16 %v472, %v469
      %v554 = vpack.c.bf16 %v480, %v477
      %v555 = vpack.c.bf16 %v488, %v485
      %v556 = vpack.c.bf16 %v496, %v493
      %v557 = vpack.c.bf16 %v504, %v501
      %v558 = vpack.c.bf16 %v512, %v509
      %v559 = vpack.c.bf16 %v520, %v517
      %v560 = vpack.c.bf16 %v528, %v525
      %v561 = vpack.c.bf16 %v536, %v533
      %v562 = vpack.c.bf16 %v544, %v541
      %v579 = vunpack.c.l.b16 %v547
      %v580 = vunpack.c.h.b16 %v547
      %v581 = vunpack.c.l.b16 %v548
      %v582 = vunpack.c.h.b16 %v548
      %v583 = vunpack.c.l.b16 %v549
      %v584 = vunpack.c.h.b16 %v549
      %v585 = vunpack.c.l.b16 %v550
      %v586 = vunpack.c.h.b16 %v550
      %v587 = vunpack.c.l.b16 %v551
      %v588 = vunpack.c.h.b16 %v551
      %v589 = vunpack.c.l.b16 %v552
      %v590 = vunpack.c.h.b16 %v552
      %v591 = vunpack.c.l.b16 %v553
      %v592 = vunpack.c.h.b16 %v553
      %v593 = vunpack.c.l.b16 %v554
      %v594 = vunpack.c.h.b16 %v554
      %v595 = vunpack.c.l.b16 %v555
      %v596 = vunpack.c.h.b16 %v555
      %v597 = vunpack.c.l.b16 %v556
      %v598 = vunpack.c.h.b16 %v556
      %v599 = vunpack.c.l.b16 %v557
      %v600 = vunpack.c.h.b16 %v557
      %v601 = vunpack.c.l.b16 %v558
      %v602 = vunpack.c.h.b16 %v558
      %v603 = vunpack.c.l.b16 %v559
      %v604 = vunpack.c.h.b16 %v559
      %v605 = vunpack.c.l.b16 %v560
      %v606 = vunpack.c.h.b16 %v560
      %v607 = vunpack.c.l.b16 %v561
      %v608 = vunpack.c.h.b16 %v561
      %v609 = vunpack.c.l.b16 %v562
      %v610 = vunpack.c.h.b16 %v562
      %v611 = vpack.c.b16 %v579, %v579
      %v612 = vpack.c.b16 %v580, %v580
      %v613 = vpack.c.b16 %v581, %v581
      %v614 = vpack.c.b16 %v582, %v582
      %v615 = vpack.c.b16 %v583, %v583
      %v616 = vpack.c.b16 %v584, %v584
      %v617 = vpack.c.b16 %v585, %v585
      %v618 = vpack.c.b16 %v586, %v586
      %v619 = vpack.c.b16 %v587, %v587
      %v620 = vpack.c.b16 %v588, %v588
      %v621 = vpack.c.b16 %v589, %v589
      %v622 = vpack.c.b16 %v590, %v590
      %v623 = vpack.c.b16 %v591, %v591
      %v624 = vpack.c.b16 %v592, %v592
      %v625 = vpack.c.b16 %v593, %v593
      %v626 = vpack.c.b16 %v594, %v594
      %v627 = vpack.c.b16 %v595, %v595
      %v628 = vpack.c.b16 %v596, %v596
      %v629 = vpack.c.b16 %v597, %v597
      %v630 = vpack.c.b16 %v598, %v598
      %v631 = vpack.c.b16 %v599, %v599
      %v632 = vpack.c.b16 %v600, %v600
      %v633 = vpack.c.b16 %v601, %v601
      %v634 = vpack.c.b16 %v602, %v602
      %v635 = vpack.c.b16 %v603, %v603
      %v636 = vpack.c.b16 %v604, %v604
      %v637 = vpack.c.b16 %v605, %v605
      %v638 = vpack.c.b16 %v606, %v606
      %v639 = vpack.c.b16 %v607, %v607
      %v640 = vpack.c.b16 %v608, %v608
      %v641 = vpack.c.b16 %v609, %v609
      %v642 = vpack.c.b16 %v610, %v610
      %vm675 = vcmask 60416
      %676 = vst.msk [vmem:[%s206] sm:$0xf] %vm675, %v611
      %677 = vst.msk [vmem:[%s206 + $0x4] sm:$0xf] %vm675, %v612
      %678 = vst.msk [vmem:[%s206 + $0x8] sm:$0xf] %vm675, %v613
      %679 = vst.msk [vmem:[%s206 + $0xc] sm:$0xf] %vm675, %v614
      %680 = vst.msk [vmem:[%s206 + $0x10] sm:$0xf] %vm675, %v615
      %681 = vst.msk [vmem:[%s206 + $0x14] sm:$0xf] %vm675, %v616
      %682 = vst.msk [vmem:[%s206 + $0x18] sm:$0xf] %vm675, %v617
      %683 = vst.msk [vmem:[%s206 + $0x1c] sm:$0xf] %vm675, %v618
      %684 = vst.msk [vmem:[%s206 + $0x20] sm:$0xf] %vm675, %v619
      %685 = vst.msk [vmem:[%s206 + $0x24] sm:$0xf] %vm675, %v620
      %686 = vst.msk [vmem:[%s206 + $0x28] sm:$0xf] %vm675, %v621
      %687 = vst.msk [vmem:[%s206 + $0x2c] sm:$0xf] %vm675, %v622
      %688 = vst.msk [vmem:[%s206 + $0x30] sm:$0xf] %vm675, %v623
      %689 = vst.msk [vmem:[%s206 + $0x34] sm:$0xf] %vm675, %v624
      %690 = vst.msk [vmem:[%s206 + $0x38] sm:$0xf] %vm675, %v625
      %691 = vst.msk [vmem:[%s206 + $0x3c] sm:$0xf] %vm675, %v626
      %692 = vst.msk [vmem:[%s206 + $0x40] sm:$0xf] %vm675, %v627
      %693 = vst.msk [vmem:[%s206 + $0x44] sm:$0xf] %vm675, %v628
      %694 = vst.msk [vmem:[%s206 + $0x48] sm:$0xf] %vm675, %v629
      %695 = vst.msk [vmem:[%s206 + $0x4c] sm:$0xf] %vm675, %v630
      %696 = vst.msk [vmem:[%s206 + $0x50] sm:$0xf] %vm675, %v631
      %697 = vst.msk [vmem:[%s206 + $0x54] sm:$0xf] %vm675, %v632
      %698 = vst.msk [vmem:[%s206 + $0x58] sm:$0xf] %vm675, %v633
      %699 = vst.msk [vmem:[%s206 + $0x5c] sm:$0xf] %vm675, %v634
      %700 = vst.msk [vmem:[%s206 + $0x60] sm:$0xf] %vm675, %v635
      %701 = vst.msk [vmem:[%s206 + $0x64] sm:$0xf] %vm675, %v636
      %702 = vst.msk [vmem:[%s206 + $0x68] sm:$0xf] %vm675, %v637
      %703 = vst.msk [vmem:[%s206 + $0x6c] sm:$0xf] %vm675, %v638
      %704 = vst.msk [vmem:[%s206 + $0x70] sm:$0xf] %vm675, %v639
      %705 = vst.msk [vmem:[%s206 + $0x74] sm:$0xf] %vm675, %v640
      %706 = vst.msk [vmem:[%s206 + $0x78] sm:$0xf] %vm675, %v641
      %707 = vst.msk [vmem:[%s206 + $0x7c] sm:$0xf] %vm675, %v642
      %vm708 = vcmask 64512
      %v709 = vsel %vm708, %v421, 0.0
      %v710 = vsel %vm708, %v424, 0.0
      %v711 = vadd.f32 %v709, %v710
      %v712 = vsel %vm708, %v429, 0.0
      %v713 = vadd.f32 %v711, %v712
      %v714 = vsel %vm708, %v432, 0.0
      %v715 = vadd.f32 %v713, %v714
      %v716 = vsel %vm708, %v437, 0.0
      %v717 = vadd.f32 %v715, %v716
      %v718 = vsel %vm708, %v440, 0.0
      %v719 = vadd.f32 %v717, %v718
      %v720 = vsel %vm708, %v445, 0.0
      %v721 = vadd.f32 %v719, %v720
      %v722 = vsel %vm708, %v448, 0.0
      %v723 = vadd.f32 %v721, %v722
      %v724 = vsel %vm708, %v453, 0.0
      %v725 = vadd.f32 %v723, %v724
      %v726 = vsel %vm708, %v456, 0.0
      %v727 = vadd.f32 %v725, %v726
      %v728 = vsel %vm708, %v461, 0.0
      %v729 = vadd.f32 %v727, %v728
      %v730 = vsel %vm708, %v464, 0.0
      %v731 = vadd.f32 %v729, %v730
      %v732 = vsel %vm708, %v469, 0.0
      %v733 = vadd.f32 %v731, %v732
      %v734 = vsel %vm708, %v472, 0.0
      %v735 = vadd.f32 %v733, %v734
      %v736 = vsel %vm708, %v477, 0.0
      %v737 = vadd.f32 %v735, %v736
      %v738 = vsel %vm708, %v480, 0.0
      %v739 = vadd.f32 %v737, %v738
      %v740 = vsel %vm708, %v485, 0.0
      %v741 = vadd.f32 %v739, %v740
      %v742 = vsel %vm708, %v488, 0.0
      %v743 = vadd.f32 %v741, %v742
      %v744 = vsel %vm708, %v493, 0.0
      %v745 = vadd.f32 %v743, %v744
      %v746 = vsel %vm708, %v496, 0.0
      %v747 = vadd.f32 %v745, %v746
      %v748 = vsel %vm708, %v501, 0.0
      %v749 = vadd.f32 %v747, %v748
      %v750 = vsel %vm708, %v504, 0.0
      %v751 = vadd.f32 %v749, %v750
      %v752 = vsel %vm708, %v509, 0.0
      %v753 = vadd.f32 %v751, %v752
      %v754 = vsel %vm708, %v512, 0.0
      %v755 = vadd.f32 %v753, %v754
      %v756 = vsel %vm708, %v517, 0.0
      %v757 = vadd.f32 %v755, %v756
      %v758 = vsel %vm708, %v520, 0.0
      %v759 = vadd.f32 %v757, %v758
      %v760 = vsel %vm708, %v525, 0.0
      %v761 = vadd.f32 %v759, %v760
      %v762 = vsel %vm708, %v528, 0.0
      %v763 = vadd.f32 %v761, %v762
      %v764 = vsel %vm708, %v533, 0.0
      %v765 = vadd.f32 %v763, %v764
      %v766 = vsel %vm708, %v536, 0.0
      %v767 = vadd.f32 %v765, %v766
      %v768 = vsel %vm708, %v541, 0.0
      %v769 = vadd.f32 %v767, %v768
      %v770 = vsel %vm708, %v544, 0.0
      %v771 = vadd.f32 %v769, %v770
      %v772 = vrot.slane %v771, 4
      %v773 = vadd.f32 %v771, %v772
      %v774 = vrot.slane %v773, 2
      %v775 = vadd.f32 %v773, %v774
      %v776 = vrot.slane %v775, 1
      %v777 = vadd.f32 %v775, %v776
      %v778 = vmul.f32 %v421, %v421
      %v779 = vmul.f32 %v424, %v424
      %v780 = vmul.f32 %v429, %v429
      %v781 = vmul.f32 %v432, %v432
      %v782 = vmul.f32 %v437, %v437
      %v783 = vmul.f32 %v440, %v440
      %v784 = vmul.f32 %v445, %v445
      %v785 = vmul.f32 %v448, %v448
      %v786 = vmul.f32 %v453, %v453
      %v787 = vmul.f32 %v456, %v456
      %v788 = vmul.f32 %v461, %v461
      %v789 = vmul.f32 %v464, %v464
      %v790 = vmul.f32 %v469, %v469
      %v791 = vmul.f32 %v472, %v472
      %v792 = vmul.f32 %v477, %v477
      %v793 = vmul.f32 %v480, %v480
      %v794 = vmul.f32 %v485, %v485
      %v795 = vmul.f32 %v488, %v488
      %v796 = vmul.f32 %v493, %v493
      %v797 = vmul.f32 %v496, %v496
      %v798 = vmul.f32 %v501, %v501
      %v799 = vmul.f32 %v504, %v504
      %v800 = vmul.f32 %v509, %v509
      %v801 = vmul.f32 %v512, %v512
      %v802 = vmul.f32 %v517, %v517
      %v803 = vmul.f32 %v520, %v520
      %v804 = vmul.f32 %v525, %v525
      %v805 = vmul.f32 %v528, %v528
      %v806 = vmul.f32 %v533, %v533
      %v807 = vmul.f32 %v536, %v536
      %v808 = vmul.f32 %v541, %v541
      %v809 = vmul.f32 %v544, %v544
      %v810 = vsel %vm708, %v778, 0.0
      %v811 = vsel %vm708, %v779, 0.0
      %v812 = vadd.f32 %v810, %v811
      %v813 = vsel %vm708, %v780, 0.0
      %v814 = vadd.f32 %v812, %v813
      %v815 = vsel %vm708, %v781, 0.0
      %v816 = vadd.f32 %v814, %v815
      %v817 = vsel %vm708, %v782, 0.0
      %v818 = vadd.f32 %v816, %v817
      %v819 = vsel %vm708, %v783, 0.0
      %v820 = vadd.f32 %v818, %v819
      %v821 = vsel %vm708, %v784, 0.0
      %v822 = vadd.f32 %v820, %v821
      %v823 = vsel %vm708, %v785, 0.0
      %v824 = vadd.f32 %v822, %v823
      %v825 = vsel %vm708, %v786, 0.0
      %v826 = vadd.f32 %v824, %v825
      %v827 = vsel %vm708, %v787, 0.0
      %v828 = vadd.f32 %v826, %v827
      %v829 = vsel %vm708, %v788, 0.0
      %v830 = vadd.f32 %v828, %v829
      %v831 = vsel %vm708, %v789, 0.0
      %v832 = vadd.f32 %v830, %v831
      %v833 = vsel %vm708, %v790, 0.0
      %v834 = vadd.f32 %v832, %v833
      %v835 = vsel %vm708, %v791, 0.0
      %v836 = vadd.f32 %v834, %v835
      %v837 = vsel %vm708, %v792, 0.0
      %v838 = vadd.f32 %v836, %v837
      %v839 = vsel %vm708, %v793, 0.0
      %v840 = vadd.f32 %v838, %v839
      %v841 = vsel %vm708, %v794, 0.0
      %v842 = vadd.f32 %v840, %v841
      %v843 = vsel %vm708, %v795, 0.0
      %v844 = vadd.f32 %v842, %v843
      %v845 = vsel %vm708, %v796, 0.0
      %v846 = vadd.f32 %v844, %v845
      %v847 = vsel %vm708, %v797, 0.0
      %v848 = vadd.f32 %v846, %v847
      %v849 = vsel %vm708, %v798, 0.0
      %v850 = vadd.f32 %v848, %v849
      %v851 = vsel %vm708, %v799, 0.0
      %v852 = vadd.f32 %v850, %v851
      %v853 = vsel %vm708, %v800, 0.0
      %v854 = vadd.f32 %v852, %v853
      %v855 = vsel %vm708, %v801, 0.0
      %v856 = vadd.f32 %v854, %v855
      %v857 = vsel %vm708, %v802, 0.0
      %v858 = vadd.f32 %v856, %v857
      %v859 = vsel %vm708, %v803, 0.0
      %v860 = vadd.f32 %v858, %v859
      %v861 = vsel %vm708, %v804, 0.0
      %v862 = vadd.f32 %v860, %v861
      %v863 = vsel %vm708, %v805, 0.0
      %v864 = vadd.f32 %v862, %v863
      %v865 = vsel %vm708, %v806, 0.0
      %v866 = vadd.f32 %v864, %v865
      %v867 = vsel %vm708, %v807, 0.0
      %v868 = vadd.f32 %v866, %v867
      %v869 = vsel %vm708, %v808, 0.0
      %v870 = vadd.f32 %v868, %v869
      %v871 = vsel %vm708, %v809, 0.0
      %v872 = vadd.f32 %v870, %v871
      %v873 = vrot.slane %v872, 4
      %v874 = vadd.f32 %v872, %v873
      %v875 = vrot.slane %v874, 2
      %v876 = vadd.f32 %v874, %v875
      %v877 = vrot.slane %v876, 1
      %v878 = vadd.f32 %v876, %v877
      %vm879 = vcmask 1040384
      %v880 = vsel %vm879, %v777, %v878
      %vm881 = vcmask 58368
      %882 = vst.msk [vmem:[%s211] sm:$0x3] %vm881, %v880
      %s883 = smul.u32 32, %s16
      %p884 = scmp.lt.s32.totalorder %s883, 63
      %s885 = scalar_select %p884, %s883, 63
      %s886 = smul.addr %s885, 4
      %s887 = scalar_lea.vmem %s3, %s886
      %p888 = scmp.lt.s32.totalorder %s16, 1
      %s889 = scalar_select %p888, %s16, 1
      %s890 = smul.addr %s889, 2
      %s891 = scalar_lea.vmem %s4, %s890
      // Predicated region
      $region33: #{fire_forward.3} parent=31 // pred_check
        %p892 = pneg %p102
      $region34: #{fire_forward.3} parent=31 // pred_check_branch
        %894 = sbr.rel (%p892) target = $region36
      $region35: #{fire_forward.3} parent=31 // pred_region
        %s895 = smul.u32 32, %s16
      $region36: #{fire_forward.3} parent=31 // pred_fallthru
        _
      // Predicated region
      $region37: #{fire_forward.3} parent=31 // pred_check
        %p896 = pneg %p128
      $region38: #{fire_forward.3} parent=31 // pred_check_branch
        %898 = sbr.rel (%p896) target = $region40
      $region39: #{fire_forward.3} parent=31 // pred_region
        _
      $region40: #{fire_forward.3} parent=31 // pred_fallthru
        _
    $region32: #{fire_forward.3} parent=5 // pred_fallthru
      _
    %p899 = scmp.le.s32.totalorder 2, %s11
    // Predicated region
    $region41: #{fire_forward.3} parent=5 // pred_check
      %p900 = pneg %p899
    $region42: #{fire_forward.3} parent=5 // pred_check_branch
      %902 = sbr.rel (%p900) target = $region44
    $region43: #{fire_forward.3} parent=5 // pred_region
      %s903 = ssub.s32 %s11, 2
      // Predicated region
      $region45: #{fire_forward.3} parent=43 // pred_check
        %p904 = pneg %p108
      $region46: #{fire_forward.3} parent=43 // pred_check_branch
        %906 = sbr.rel (%p904) target = $region48
      $region47: #{fire_forward.3} parent=43 // pred_region
        %s907 = smul.u32 32, %s17
        %p908 = scmp.lt.s32.totalorder %s907, 63
        %s909 = scalar_select %p908, %s907, 63
        %s910 = smul.addr %s909, 4
        %s911 = scalar_lea.vmem %s3, %s910
      $region48: #{fire_forward.3} parent=43 // pred_fallthru
        _
      // Predicated region
      $region49: #{fire_forward.3} parent=43 // pred_check
        %p912 = pneg %p134
      $region50: #{fire_forward.3} parent=43 // pred_check_branch
        %914 = sbr.rel (%p912) target = $region52
      $region51: #{fire_forward.3} parent=43 // pred_region
        %p915 = scmp.lt.s32.totalorder %s17, 1
        %s916 = scalar_select %p915, %s17, 1
        %s917 = smul.addr %s916, 2
        %s918 = scalar_lea.vmem %s4, %s917
      $region52: #{fire_forward.3} parent=43 // pred_fallthru
        _
    $region44: #{fire_forward.3} parent=5 // pred_fallthru
      _
  $region6: #{fire_forward.3} parent=0 // loop_footer
    %s15 = sadd.s32 1, %s11
  $region7: #{fire_forward.3} parent=0 // loop_footer_branch
    %10 = sbr.rel target = $region3
  $region8: #{fire_forward.3} parent=0 // loop_exit
    _

// kernel: fire_forward.4
$region0: #{fire_forward.4}
  #allocation0 [shape = 'u32[]', space=smem, size = 0x4, offset = 0x4, fixed_abs, tag = 'smem constant byte address 0x4 - core index']
  #allocation1 [shape = 'u32[144,128]{1,0:T(1,128)}', space=vmem, size = 0x12000, scoped, tag = 'internal scratch']
  %s0 = inlined_call_operand.vmem [shape: bf16[2,256,8], index: 0, kind: input, shape index: {}]
  %s1 = inlined_call_operand.vmem [shape: f32[1,8], index: 1, kind: input, shape index: {}]
  %s2 = inlined_call_operand.vmem [shape: f32[1,8], index: 2, kind: input, shape index: {}]
  %s3 = inlined_call_operand.vmem [shape: bf16[72,16], index: 3, kind: input, shape index: {}]
  %s4 = inlined_call_operand.vmem [shape: f32[1,16], index: 4, kind: input, shape index: {}]
  %s5 = inlined_call_operand.vmem [shape: bf16[2,256,16], index: 5, kind: output, shape index: {0}]
  %s6 = inlined_call_operand.vmem [shape: f32[2,2,16], index: 6, kind: output, shape index: {1}]
  %7 = xla_tuple %s5, %s6
  %s8 = sld [smem:[#allocation0]]
  $region61: #{fire_forward.4} parent=0
    _
  %s10 = ssub.s32 1, %s8
  %s11 = scalar_select 0, %s10, %s8
  loop: start=0, step=1, limit=4
  $region2: #{fire_forward.4} parent=0 // loop_pre_header
    _
  $region3: #{fire_forward.4} parent=0 // loop_header
    %s13 = sphi 0, %s17
    %p14 = scmp.ge.s32.totalorder %s13, 4
    %s23 = sphi 0, %s25
    %s26 = sphi 0, %s23
    %s27 = sphi 0, %s26
    %s43 = sphi 0, %s27
    %s47 = sphi 0, %s47
    %s49 = sphi 0, %s47
    %s50 = sphi 0, %s49
    %s64 = sphi 0, %s50
    %s68 = sphi 0, %s68
    %s70 = sphi 0, %s68
    %s71 = sphi 0, %s70
    %s85 = sphi 0, %s71
    %s89 = sphi 0, %s89
    %s91 = sphi 0, %s89
    %s92 = sphi 0, %s91
    %s106 = sphi 0, %s92
    %s110 = sphi 0, %s110
    %s112 = sphi 0, %s110
    %s113 = sphi 0, %s112
    %s127 = sphi 0, %s113
    %s133 = sphi 0, %s135
    %s136 = sphi 0, %s133
    %s137 = sphi 0, %s136
    %s153 = sphi 0, %s137
    %s159 = sphi 0, %s161
    %s162 = sphi 0, %s159
    %s163 = sphi 0, %s162
    %s179 = sphi 0, %s163
  $region4: #{fire_forward.4} parent=0 // loop_header_branch
    %16 = sbr.rel (%p14) target = $region8
  $region5: #{fire_forward.4} parent=0 // loop_body
    %s18 = ssub.s32 %s13, 1
    %s19 = ssub.s32 %s13, 2
    %s20 = sadd.s32 %s13, 1
    %s21 = ssub.s32 %s13, %s20
    %p22 = scmp.eq.s32.totalorder %s21, 0
    %s24 = sadd.s32 %s23, 1
    %s25 = scalar_select %p22, %s23, %s24
    %p28 = pneg %p22
    %p29 = scmp.eq.s32.totalorder %s13, 1
    %p30 = por %p28, %p29
    %p31 = scmp.ne.s32.totalorder %s23, %s26
    %p32 = scmp.eq.s32.totalorder %s13, 0
    %p33 = por %p31, %p32
    %p34 = scmp.ne.s32.totalorder %s23, %s26
    %p35 = scmp.eq.s32.totalorder %s18, 1
    %p36 = por %p34, %p35
    %p37 = scmp.ne.s32.totalorder %s26, %s27
    %p38 = scmp.eq.s32.totalorder %s18, 0
    %p39 = por %p37, %p38
    %p40 = scmp.ne.s32.totalorder %s26, %s27
    %p41 = scmp.eq.s32.totalorder %s19, 1
    %p42 = por %p40, %p41
    %p44 = scmp.ne.s32.totalorder %s27, %s43
    %p45 = scmp.eq.s32.totalorder %s19, 0
    %p46 = por %p44, %p45
    %s48 = sadd.s32 %s47, 1
    %p51 = scmp.eq.s32.totalorder %s13, 1
    %p52 = scmp.ne.s32.totalorder %s47, %s49
    %p53 = scmp.eq.s32.totalorder %s13, 0
    %p54 = por %p52, %p53
    %p55 = scmp.ne.s32.totalorder %s47, %s49
    %p56 = scmp.eq.s32.totalorder %s18, 1
    %p57 = por %p55, %p56
    %p58 = scmp.ne.s32.totalorder %s49, %s50
    %p59 = scmp.eq.s32.totalorder %s18, 0
    %p60 = por %p58, %p59
    %p61 = scmp.ne.s32.totalorder %s49, %s50
    %p62 = scmp.eq.s32.totalorder %s19, 1
    %p63 = por %p61, %p62
    %p65 = scmp.ne.s32.totalorder %s50, %s64
    %p66 = scmp.eq.s32.totalorder %s19, 0
    %p67 = por %p65, %p66
    %s69 = sadd.s32 %s68, 1
    %p72 = scmp.eq.s32.totalorder %s13, 1
    %p73 = scmp.ne.s32.totalorder %s68, %s70
    %p74 = scmp.eq.s32.totalorder %s13, 0
    %p75 = por %p73, %p74
    %p76 = scmp.ne.s32.totalorder %s68, %s70
    %p77 = scmp.eq.s32.totalorder %s18, 1
    %p78 = por %p76, %p77
    %p79 = scmp.ne.s32.totalorder %s70, %s71
    %p80 = scmp.eq.s32.totalorder %s18, 0
    %p81 = por %p79, %p80
    %p82 = scmp.ne.s32.totalorder %s70, %s71
    %p83 = scmp.eq.s32.totalorder %s19, 1
    %p84 = por %p82, %p83
    %p86 = scmp.ne.s32.totalorder %s71, %s85
    %p87 = scmp.eq.s32.totalorder %s19, 0
    %p88 = por %p86, %p87
    %s90 = sadd.s32 %s89, 1
    %p93 = scmp.eq.s32.totalorder %s13, 1
    %p94 = scmp.ne.s32.totalorder %s89, %s91
    %p95 = scmp.eq.s32.totalorder %s13, 0
    %p96 = por %p94, %p95
    %p97 = scmp.ne.s32.totalorder %s89, %s91
    %p98 = scmp.eq.s32.totalorder %s18, 1
    %p99 = por %p97, %p98
    %p100 = scmp.ne.s32.totalorder %s91, %s92
    %p101 = scmp.eq.s32.totalorder %s18, 0
    %p102 = por %p100, %p101
    %p103 = scmp.ne.s32.totalorder %s91, %s92
    %p104 = scmp.eq.s32.totalorder %s19, 1
    %p105 = por %p103, %p104
    %p107 = scmp.ne.s32.totalorder %s92, %s106
    %p108 = scmp.eq.s32.totalorder %s19, 0
    %p109 = por %p107, %p108
    %s111 = sadd.s32 %s110, 1
    %p114 = scmp.eq.s32.totalorder %s13, 1
    %p115 = scmp.ne.s32.totalorder %s110, %s112
    %p116 = scmp.eq.s32.totalorder %s13, 0
    %p117 = por %p115, %p116
    %p118 = scmp.ne.s32.totalorder %s110, %s112
    %p119 = scmp.eq.s32.totalorder %s18, 1
    %p120 = por %p118, %p119
    %p121 = scmp.ne.s32.totalorder %s112, %s113
    %p122 = scmp.eq.s32.totalorder %s18, 0
    %p123 = por %p121, %p122
    %p124 = scmp.ne.s32.totalorder %s112, %s113
    %p125 = scmp.eq.s32.totalorder %s19, 1
    %p126 = por %p124, %p125
    %p128 = scmp.ne.s32.totalorder %s113, %s127
    %p129 = scmp.eq.s32.totalorder %s19, 0
    %p130 = por %p128, %p129
    %s131 = ssub.s32 %s13, %s20
    %p132 = scmp.eq.s32.totalorder %s131, 0
    %s134 = sadd.s32 %s133, 1
    %s135 = scalar_select %p132, %s133, %s134
    %p138 = pneg %p132
    %p139 = scmp.eq.s32.totalorder %s13, 1
    %p140 = por %p138, %p139
    %p141 = scmp.ne.s32.totalorder %s133, %s136
    %p142 = scmp.eq.s32.totalorder %s13, 0
    %p143 = por %p141, %p142
    %p144 = scmp.ne.s32.totalorder %s133, %s136
    %p145 = scmp.eq.s32.totalorder %s18, 1
    %p146 = por %p144, %p145
    %p147 = scmp.ne.s32.totalorder %s136, %s137
    %p148 = scmp.eq.s32.totalorder %s18, 0
    %p149 = por %p147, %p148
    %p150 = scmp.ne.s32.totalorder %s136, %s137
    %p151 = scmp.eq.s32.totalorder %s19, 1
    %p152 = por %p150, %p151
    %p154 = scmp.ne.s32.totalorder %s137, %s153
    %p155 = scmp.eq.s32.totalorder %s19, 0
    %p156 = por %p154, %p155
    %s157 = ssub.s32 %s13, %s20
    %p158 = scmp.eq.s32.totalorder %s157, 0
    %s160 = sadd.s32 %s159, 1
    %s161 = scalar_select %p158, %s159, %s160
    %p164 = pneg %p158
    %p165 = scmp.eq.s32.totalorder %s13, 1
    %p166 = por %p164, %p165
    %p167 = scmp.ne.s32.totalorder %s159, %s162
    %p168 = scmp.eq.s32.totalorder %s13, 0
    %p169 = por %p167, %p168
    %p170 = scmp.ne.s32.totalorder %s159, %s162
    %p171 = scmp.eq.s32.totalorder %s18, 1
    %p172 = por %p170, %p171
    %p173 = scmp.ne.s32.totalorder %s162, %s163
    %p174 = scmp.eq.s32.totalorder %s18, 0
    %p175 = por %p173, %p174
    %p176 = scmp.ne.s32.totalorder %s162, %s163
    %p177 = scmp.eq.s32.totalorder %s19, 1
    %p178 = por %p176, %p177
    %p180 = scmp.ne.s32.totalorder %s163, %s179
    %p181 = scmp.eq.s32.totalorder %s19, 0
    %p182 = por %p180, %p181
    %p183 = scmp.le.s32.totalorder 1, %s13
    %p184 = scmp.lt.s32.totalorder %s13, 3
    %p185 = pnand %p183, %p184
    %p186 = pneg %p185
    // Predicated region
    $region9: #{fire_forward.4} parent=5 // pred_check
      _
    $region10: #{fire_forward.4} parent=5 // pred_check_branch
      %188 = sbr.rel (%p185) target = $region12
    $region11: #{fire_forward.4} parent=5 // pred_region
      %s189 = ssub.s32 %s13, 1
      // Predicated region
      $region13: #{fire_forward.4} parent=11 // pred_check
        %p190 = pneg %p60
      $region14: #{fire_forward.4} parent=11 // pred_check_branch
        %192 = sbr.rel (%p190) target = $region16
      $region15: #{fire_forward.4} parent=11 // pred_region
        _
      $region16: #{fire_forward.4} parent=11 // pred_fallthru
        _
      // Predicated region
      $region17: #{fire_forward.4} parent=11 // pred_check
        %p193 = pneg %p81
      $region18: #{fire_forward.4} parent=11 // pred_check_branch
        %195 = sbr.rel (%p193) target = $region20
      $region19: #{fire_forward.4} parent=11 // pred_region
        _
      $region20: #{fire_forward.4} parent=11 // pred_fallthru
        _
      // Predicated region
      $region21: #{fire_forward.4} parent=11 // pred_check
        %p196 = pneg %p102
      $region22: #{fire_forward.4} parent=11 // pred_check_branch
        %198 = sbr.rel (%p196) target = $region24
      $region23: #{fire_forward.4} parent=11 // pred_region
        _
      $region24: #{fire_forward.4} parent=11 // pred_fallthru
        _
      // Predicated region
      $region25: #{fire_forward.4} parent=11 // pred_check
        %p199 = pneg %p123
      $region26: #{fire_forward.4} parent=11 // pred_check_branch
        %201 = sbr.rel (%p199) target = $region28
      $region27: #{fire_forward.4} parent=11 // pred_region
        _
      $region28: #{fire_forward.4} parent=11 // pred_fallthru
        _
    $region12: #{fire_forward.4} parent=5 // pred_fallthru
      _
    %p202 = scmp.lt.s32.totalorder %s13, 2
    // Predicated region
    $region29: #{fire_forward.4} parent=5 // pred_check
      %p203 = pneg %p202
    $region30: #{fire_forward.4} parent=5 // pred_check_branch
      %205 = sbr.rel (%p203) target = $region32
    $region31: #{fire_forward.4} parent=5 // pred_region
      // Predicated region
      $region33: #{fire_forward.4} parent=31 // pred_check
        %p206 = pneg %p33
      $region34: #{fire_forward.4} parent=31 // pred_check_branch
        %208 = sbr.rel (%p206) target = $region36
      $region35: #{fire_forward.4} parent=31 // pred_region
        %p209 = scmp.lt.s32.totalorder %s13, 1
        %s210 = scalar_select %p209, %s13, 1
        %s211 = smul.addr %s210, 32
        %s212 = smul.addr %s211, 4
        %s213 = scalar_lea.vmem %s0, %s212
      $region36: #{fire_forward.4} parent=31 // pred_fallthru
        _
    $region32: #{fire_forward.4} parent=5 // pred_fallthru
      _
    %p214 = scmp.le.s32.totalorder 1, %s13
    %p215 = scmp.lt.s32.totalorder %s13, 3
    %p216 = pnand %p214, %p215
    %p217 = pneg %p216
    // Predicated region
    $region37: #{fire_forward.4} parent=5 // pred_check
      _
    $region38: #{fire_forward.4} parent=5 // pred_check_branch
      %219 = sbr.rel (%p216) target = $region40
    $region39: #{fire_forward.4} parent=5 // pred_region
      %s220 = ssub.s32 %s13, 1
      %p221 = scmp.lt.s32.totalorder %s18, 1
      %s222 = scalar_select %p221, %s18, 1
      %s223 = smul.addr %s222, 32
      %s224 = smul.addr %s223, 4
      %s225 = scalar_lea.vmem %s0, %s224
      %p226 = pneg %p39
      %p227 = pneg %p36
      %p228 = pneg %p60
      %p229 = pneg %p57
      %p230 = pneg %p81
      %p231 = pneg %p78
      %p232 = pneg %p102
      %p233 = pneg %p99
      %p234 = pneg %p123
      %p235 = pneg %p120
      %p236 = pneg %p149
      %p237 = pneg %p146
      %p238 = scmp.lt.s32.totalorder %s18, 1
      %s239 = scalar_select %p238, %s18, 1
      %s240 = smul.addr %s239, 32
      %s241 = smul.addr %s240, 4
      %s242 = scalar_lea.vmem %s5, %s241
      %p243 = pneg %p175
      %p244 = pneg %p172
      %p245 = scmp.lt.s32.totalorder %s18, 1
      %s246 = scalar_select %p245, %s18, 1
      %s247 = smul.addr %s246, 2
      %s248 = scalar_lea.vmem %s6, %s247
      %p249 = scmp.lt.s32.totalorder %s18, 1
      %s250 = scalar_select %p249, %s18, 1
      %s251 = smul.addr %s250, 32
      %s252 = smul.addr %s251, 4
      %s253 = scalar_lea.vmem %s0, %s252
      %p254 = scmp.lt.s32.totalorder %s18, 1
      %s255 = scalar_select %p254, %s18, 1
      %s256 = smul.addr %s255, 32
      %s257 = smul.addr %s256, 4
      %s258 = scalar_lea.vmem %s5, %s257
      %p259 = scmp.lt.s32.totalorder %s18, 1
      %s260 = scalar_select %p259, %s18, 1
      %s261 = smul.addr %s260, 2
      %s262 = scalar_lea.vmem %s6, %s261
      %v264 = vld [vmem:[%s253] sm:$0xf]
      %v265 = vld [vmem:[%s253 + $0x4] sm:$0xf]
      %v266 = vld [vmem:[%s253 + $0x8] sm:$0xf]
      %v267 = vld [vmem:[%s253 + $0xc] sm:$0xf]
      %v268 = vld [vmem:[%s253 + $0x10] sm:$0xf]
      %v269 = vld [vmem:[%s253 + $0x14] sm:$0xf]
      %v270 = vld [vmem:[%s253 + $0x18] sm:$0xf]
      %v271 = vld [vmem:[%s253 + $0x1c] sm:$0xf]
      %v272 = vld [vmem:[%s253 + $0x20] sm:$0xf]
      %v273 = vld [vmem:[%s253 + $0x24] sm:$0xf]
      %v274 = vld [vmem:[%s253 + $0x28] sm:$0xf]
      %v275 = vld [vmem:[%s253 + $0x2c] sm:$0xf]
      %v276 = vld [vmem:[%s253 + $0x30] sm:$0xf]
      %v277 = vld [vmem:[%s253 + $0x34] sm:$0xf]
      %v278 = vld [vmem:[%s253 + $0x38] sm:$0xf]
      %v279 = vld [vmem:[%s253 + $0x3c] sm:$0xf]
      %v280 = vld [vmem:[%s253 + $0x40] sm:$0xf]
      %v281 = vld [vmem:[%s253 + $0x44] sm:$0xf]
      %v282 = vld [vmem:[%s253 + $0x48] sm:$0xf]
      %v283 = vld [vmem:[%s253 + $0x4c] sm:$0xf]
      %v284 = vld [vmem:[%s253 + $0x50] sm:$0xf]
      %v285 = vld [vmem:[%s253 + $0x54] sm:$0xf]
      %v286 = vld [vmem:[%s253 + $0x58] sm:$0xf]
      %v287 = vld [vmem:[%s253 + $0x5c] sm:$0xf]
      %v288 = vld [vmem:[%s253 + $0x60] sm:$0xf]
      %v289 = vld [vmem:[%s253 + $0x64] sm:$0xf]
      %v290 = vld [vmem:[%s253 + $0x68] sm:$0xf]
      %v291 = vld [vmem:[%s253 + $0x6c] sm:$0xf]
      %v292 = vld [vmem:[%s253 + $0x70] sm:$0xf]
      %v293 = vld [vmem:[%s253 + $0x74] sm:$0xf]
      %v294 = vld [vmem:[%s253 + $0x78] sm:$0xf]
      %v295 = vld [vmem:[%s253 + $0x7c] sm:$0xf]
      %v296 = vunpack.c.l.bf16 %v264
      %v297 = vunpack.c.l.bf16 %v265
      %v298 = vunpack.c.l.bf16 %v266
      %v299 = vunpack.c.l.bf16 %v267
      %v300 = vunpack.c.l.bf16 %v268
      %v301 = vunpack.c.l.bf16 %v269
      %v302 = vunpack.c.l.bf16 %v270
      %v303 = vunpack.c.l.bf16 %v271
      %v304 = vunpack.c.l.bf16 %v272
      %v305 = vunpack.c.l.bf16 %v273
      %v306 = vunpack.c.l.bf16 %v274
      %v307 = vunpack.c.l.bf16 %v275
      %v308 = vunpack.c.l.bf16 %v276
      %v309 = vunpack.c.l.bf16 %v277
      %v310 = vunpack.c.l.bf16 %v278
      %v311 = vunpack.c.l.bf16 %v279
      %v312 = vunpack.c.l.bf16 %v280
      %v313 = vunpack.c.l.bf16 %v281
      %v314 = vunpack.c.l.bf16 %v282
      %v315 = vunpack.c.l.bf16 %v283
      %v316 = vunpack.c.l.bf16 %v284
      %v317 = vunpack.c.l.bf16 %v285
      %v318 = vunpack.c.l.bf16 %v286
      %v319 = vunpack.c.l.bf16 %v287
      %v320 = vunpack.c.l.bf16 %v288
      %v321 = vunpack.c.l.bf16 %v289
      %v322 = vunpack.c.l.bf16 %v290
      %v323 = vunpack.c.l.bf16 %v291
      %v324 = vunpack.c.l.bf16 %v292
      %v325 = vunpack.c.l.bf16 %v293
      %v326 = vunpack.c.l.bf16 %v294
      %v327 = vunpack.c.l.bf16 %v295
      %v328 = vld [vmem:[%s1] sm:$0x1]
      %v330 = vlaneseq
      %v331 = vshrl.u32 %v330, 7
      %v332 = vsub.s32 0, %v331
      %v333 = vrot.slane %v328, %v332
      %v335 = vmul.f32 %v296, %v333
      %v336 = vmul.f32 %v297, %v333
      %v337 = vmul.f32 %v298, %v333
      %v338 = vmul.f32 %v299, %v333
      %v339 = vmul.f32 %v300, %v333
      %v340 = vmul.f32 %v301, %v333
      %v341 = vmul.f32 %v302, %v333
      %v342 = vmul.f32 %v303, %v333
      %v343 = vmul.f32 %v304, %v333
      %v344 = vmul.f32 %v305, %v333
      %v345 = vmul.f32 %v306, %v333
      %v346 = vmul.f32 %v307, %v333
      %v347 = vmul.f32 %v308, %v333
      %v348 = vmul.f32 %v309, %v333
      %v349 = vmul.f32 %v310, %v333
      %v350 = vmul.f32 %v311, %v333
      %v351 = vmul.f32 %v312, %v333
      %v352 = vmul.f32 %v313, %v333
      %v353 = vmul.f32 %v314, %v333
      %v354 = vmul.f32 %v315, %v333
      %v355 = vmul.f32 %v316, %v333
      %v356 = vmul.f32 %v317, %v333
      %v357 = vmul.f32 %v318, %v333
      %v358 = vmul.f32 %v319, %v333
      %v359 = vmul.f32 %v320, %v333
      %v360 = vmul.f32 %v321, %v333
      %v361 = vmul.f32 %v322, %v333
      %v362 = vmul.f32 %v323, %v333
      %v363 = vmul.f32 %v324, %v333
      %v364 = vmul.f32 %v325, %v333
      %v365 = vmul.f32 %v326, %v333
      %v366 = vmul.f32 %v327, %v333
      %v367 = vld [vmem:[%s2] sm:$0x1]
      %v369 = vlaneseq
      %v370 = vshrl.u32 %v369, 7
      %v371 = vsub.s32 0, %v370
      %v372 = vrot.slane %v367, %v371
      %v374 = vadd.f32 %v335, %v372
      %v375 = vadd.f32 %v336, %v372
      %v376 = vadd.f32 %v337, %v372
      %v377 = vadd.f32 %v338, %v372
      %v378 = vadd.f32 %v339, %v372
      %v379 = vadd.f32 %v340, %v372
      %v380 = vadd.f32 %v341, %v372
      %v381 = vadd.f32 %v342, %v372
      %v382 = vadd.f32 %v343, %v372
      %v383 = vadd.f32 %v344, %v372
      %v384 = vadd.f32 %v345, %v372
      %v385 = vadd.f32 %v346, %v372
      %v386 = vadd.f32 %v347, %v372
      %v387 = vadd.f32 %v348, %v372
      %v388 = vadd.f32 %v349, %v372
      %v389 = vadd.f32 %v350, %v372
      %v390 = vadd.f32 %v351, %v372
      %v391 = vadd.f32 %v352, %v372
      %v392 = vadd.f32 %v353, %v372
      %v393 = vadd.f32 %v354, %v372
      %v394 = vadd.f32 %v355, %v372
      %v395 = vadd.f32 %v356, %v372
      %v396 = vadd.f32 %v357, %v372
      %v397 = vadd.f32 %v358, %v372
      %v398 = vadd.f32 %v359, %v372
      %v399 = vadd.f32 %v360, %v372
      %v400 = vadd.f32 %v361, %v372
      %v401 = vadd.f32 %v362, %v372
      %v402 = vadd.f32 %v363, %v372
      %v403 = vadd.f32 %v364, %v372
      %v404 = vadd.f32 %v365, %v372
      %v405 = vadd.f32 %v366, %v372
      %vm406 = vcmp.gt.f32.partialorder %v374, 0.0
      %vm407 = vcmp.gt.f32.partialorder %v375, 0.0
      %vm408 = vcmp.gt.f32.partialorder %v376, 0.0
      %vm409 = vcmp.gt.f32.partialorder %v377, 0.0
      %vm410 = vcmp.gt.f32.partialorder %v378, 0.0
      %vm411 = vcmp.gt.f32.partialorder %v379, 0.0
      %vm412 = vcmp.gt.f32.partialorder %v380, 0.0
      %vm413 = vcmp.gt.f32.partialorder %v381, 0.0
      %vm414 = vcmp.gt.f32.partialorder %v382, 0.0
      %vm415 = vcmp.gt.f32.partialorder %v383, 0.0
      %vm416 = vcmp.gt.f32.partialorder %v384, 0.0
      %vm417 = vcmp.gt.f32.partialorder %v385, 0.0
      %vm418 = vcmp.gt.f32.partialorder %v386, 0.0
      %vm419 = vcmp.gt.f32.partialorder %v387, 0.0
      %vm420 = vcmp.gt.f32.partialorder %v388, 0.0
      %vm421 = vcmp.gt.f32.partialorder %v389, 0.0
      %vm422 = vcmp.gt.f32.partialorder %v390, 0.0
      %vm423 = vcmp.gt.f32.partialorder %v391, 0.0
      %vm424 = vcmp.gt.f32.partialorder %v392, 0.0
      %vm425 = vcmp.gt.f32.partialorder %v393, 0.0
      %vm426 = vcmp.gt.f32.partialorder %v394, 0.0
      %vm427 = vcmp.gt.f32.partialorder %v395, 0.0
      %vm428 = vcmp.gt.f32.partialorder %v396, 0.0
      %vm429 = vcmp.gt.f32.partialorder %v397, 0.0
      %vm430 = vcmp.gt.f32.partialorder %v398, 0.0
      %vm431 = vcmp.gt.f32.partialorder %v399, 0.0
      %vm432 = vcmp.gt.f32.partialorder %v400, 0.0
      %vm433 = vcmp.gt.f32.partialorder %v401, 0.0
      %vm434 = vcmp.gt.f32.partialorder %v402, 0.0
      %vm435 = vcmp.gt.f32.partialorder %v403, 0.0
      %vm436 = vcmp.gt.f32.partialorder %v404, 0.0
      %vm437 = vcmp.gt.f32.partialorder %v405, 0.0
      %v438 = vmul.f32 %v374, 0.2
      %v439 = vmul.f32 %v375, 0.2
      %v440 = vmul.f32 %v376, 0.2
      %v441 = vmul.f32 %v377, 0.2
      %v442 = vmul.f32 %v378, 0.2
      %v443 = vmul.f32 %v379, 0.2
      %v444 = vmul.f32 %v380, 0.2
      %v445 = vmul.f32 %v381, 0.2
      %v446 = vmul.f32 %v382, 0.2
      %v447 = vmul.f32 %v383, 0.2
      %v448 = vmul.f32 %v384, 0.2
      %v449 = vmul.f32 %v385, 0.2
      %v450 = vmul.f32 %v386, 0.2
      %v451 = vmul.f32 %v387, 0.2
      %v452 = vmul.f32 %v388, 0.2
      %v453 = vmul.f32 %v389, 0.2
      %v454 = vmul.f32 %v390, 0.2
      %v455 = vmul.f32 %v391, 0.2
      %v456 = vmul.f32 %v392, 0.2
      %v457 = vmul.f32 %v393, 0.2
      %v458 = vmul.f32 %v394, 0.2
      %v459 = vmul.f32 %v395, 0.2
      %v460 = vmul.f32 %v396, 0.2
      %v461 = vmul.f32 %v397, 0.2
      %v462 = vmul.f32 %v398, 0.2
      %v463 = vmul.f32 %v399, 0.2
      %v464 = vmul.f32 %v400, 0.2
      %v465 = vmul.f32 %v401, 0.2
      %v466 = vmul.f32 %v402, 0.2
      %v467 = vmul.f32 %v403, 0.2
      %v468 = vmul.f32 %v404, 0.2
      %v469 = vmul.f32 %v405, 0.2
      %v470 = vsel %vm406, %v374, %v438
      %v471 = vsel %vm407, %v375, %v439
      %v472 = vsel %vm408, %v376, %v440
      %v473 = vsel %vm409, %v377, %v441
      %v474 = vsel %vm410, %v378, %v442
      %v475 = vsel %vm411, %v379, %v443
      %v476 = vsel %vm412, %v380, %v444
      %v477 = vsel %vm413, %v381, %v445
      %v478 = vsel %vm414, %v382, %v446
      %v479 = vsel %vm415, %v383, %v447
      %v480 = vsel %vm416, %v384, %v448
      %v481 = vsel %vm417, %v385, %v449
      %v482 = vsel %vm418, %v386, %v450
      %v483 = vsel %vm419, %v387, %v451
      %v484 = vsel %vm420, %v388, %v452
      %v485 = vsel %vm421, %v389, %v453
      %v486 = vsel %vm422, %v390, %v454
      %v487 = vsel %vm423, %v391, %v455
      %v488 = vsel %vm424, %v392, %v456
      %v489 = vsel %vm425, %v393, %v457
      %v490 = vsel %vm426, %v394, %v458
      %v491 = vsel %vm427, %v395, %v459
      %v492 = vsel %vm428, %v396, %v460
      %v493 = vsel %vm429, %v397, %v461
      %v494 = vsel %vm430, %v398, %v462
      %v495 = vsel %vm431, %v399, %v463
      %v496 = vsel %vm432, %v400, %v464
      %v497 = vsel %vm433, %v401, %v465
      %v498 = vsel %vm434, %v402, %v466
      %v499 = vsel %vm435, %v403, %v467
      %v500 = vsel %vm436, %v404, %v468
      %v501 = vsel %vm437, %v405, %v469
      %v502 = vlaneseq
      %v503 = vshrl.u32 %v502, 7
      %v504 = vadd.s32 %v503, 8
      %v505 = vadd.s32 %v503, 16
      %v506 = vadd.s32 %v503, 24
      %v507 = vadd.s32 %v503, 32
      %v508 = vadd.s32 %v503, 40
      %v509 = vadd.s32 %v503, 48
      %v510 = vadd.s32 %v503, 56
      %v511 = vadd.s32 %v503, 64
      %v512 = vadd.s32 %v503, 72
      %v513 = vadd.s32 %v503, 80
      %v514 = vadd.s32 %v503, 88
      %v515 = vadd.s32 %v503, 96
      %v516 = vadd.s32 %v503, 104
      %v517 = vadd.s32 %v503, 112
      %v518 = vadd.s32 %v503, 120
      %v519 = vadd.s32 %v503, 128
      %v520 = vadd.s32 %v503, 136
      %v521 = vadd.s32 %v503, 144
      %v522 = vadd.s32 %v503, 152
      %v523 = vadd.s32 %v503, 160
      %v524 = vadd.s32 %v503, 168
      %v525 = vadd.s32 %v503, 176
      %v526 = vadd.s32 %v503, 184
      %v527 = vadd.s32 %v503, 192
      %v528 = vadd.s32 %v503, 200
      %v529 = vadd.s32 %v503, 208
      %v530 = vadd.s32 %v503, 216
      %v531 = vadd.s32 %v503, 224
      %v532 = vadd.s32 %v503, 232
      %v533 = vadd.s32 %v503, 240
      %v534 = vadd.s32 %v503, 248
      %vm535 = vcmp.lt.s32.totalorder %v503, 0
      %v536 = vsub.s32 0, %v503
      %v537 = vsel %vm535, %v536, %v503
      %v538 = vshrl.u32 %v537, 4
      %v539 = vand.u32 %v537, 15
      %v540 = vsub.s32 0, %v539
      %v541 = vsel %vm535, %v540, %v539
      %vm542 = vcmp.lt.s32.totalorder %v504, 0
      %v543 = vsub.s32 0, %v504
      %v544 = vsel %vm542, %v543, %v504
      %v545 = vshrl.u32 %v544, 4
      %v546 = vand.u32 %v544, 15
      %v547 = vsub.s32 0, %v546
      %v548 = vsel %vm542, %v547, %v546
      %vm549 = vcmp.lt.s32.totalorder %v505, 0
      %v550 = vsub.s32 0, %v505
      %v551 = vsel %vm549, %v550, %v505
      %v552 = vshrl.u32 %v551, 4
      %v553 = vand.u32 %v551, 15
      %v554 = vsub.s32 0, %v553
      %v555 = vsel %vm549, %v554, %v553
      %vm556 = vcmp.lt.s32.totalorder %v506, 0
      %v557 = vsub.s32 0, %v506
      %v558 = vsel %vm556, %v557, %v506
      %v559 = vshrl.u32 %v558, 4
      %v560 = vand.u32 %v558, 15
      %v561 = vsub.s32 0, %v560
      %v562 = vsel %vm556, %v561, %v560
      %vm563 = vcmp.lt.s32.totalorder %v507, 0
      %v564 = vsub.s32 0, %v507
      %v565 = vsel %vm563, %v564, %v507
      %v566 = vshrl.u32 %v565, 4
      %v567 = vand.u32 %v565, 15
      %v568 = vsub.s32 0, %v567
      %v569 = vsel %vm563, %v568, %v567
      %vm570 = vcmp.lt.s32.totalorder %v508, 0
      %v571 = vsub.s32 0, %v508
      %v572 = vsel %vm570, %v571, %v508
      %v573 = vshrl.u32 %v572, 4
      %v574 = vand.u32 %v572, 15
      %v575 = vsub.s32 0, %v574
      %v576 = vsel %vm570, %v575, %v574
      %vm577 = vcmp.lt.s32.totalorder %v509, 0
      %v578 = vsub.s32 0, %v509
      %v579 = vsel %vm577, %v578, %v509
      %v580 = vshrl.u32 %v579, 4
      %v581 = vand.u32 %v579, 15
      %v582 = vsub.s32 0, %v581
      %v583 = vsel %vm577, %v582, %v581
      %vm584 = vcmp.lt.s32.totalorder %v510, 0
      %v585 = vsub.s32 0, %v510
      %v586 = vsel %vm584, %v585, %v510
      %v587 = vshrl.u32 %v586, 4
      %v588 = vand.u32 %v586, 15
      %v589 = vsub.s32 0, %v588
      %v590 = vsel %vm584, %v589, %v588
      %vm591 = vcmp.lt.s32.totalorder %v511, 0
      %v592 = vsub.s32 0, %v511
      %v593 = vsel %vm591, %v592, %v511
      %v594 = vshrl.u32 %v593, 4
      %v595 = vand.u32 %v593, 15
      %v596 = vsub.s32 0, %v595
      %v597 = vsel %vm591, %v596, %v595
      %vm598 = vcmp.lt.s32.totalorder %v512, 0
      %v599 = vsub.s32 0, %v512
      %v600 = vsel %vm598, %v599, %v512
      %v601 = vshrl.u32 %v600, 4
      %v602 = vand.u32 %v600, 15
      %v603 = vsub.s32 0, %v602
      %v604 = vsel %vm598, %v603, %v602
      %vm605 = vcmp.lt.s32.totalorder %v513, 0
      %v606 = vsub.s32 0, %v513
      %v607 = vsel %vm605, %v606, %v513
      %v608 = vshrl.u32 %v607, 4
      %v609 = vand.u32 %v607, 15
      %v610 = vsub.s32 0, %v609
      %v611 = vsel %vm605, %v610, %v609
      %vm612 = vcmp.lt.s32.totalorder %v514, 0
      %v613 = vsub.s32 0, %v514
      %v614 = vsel %vm612, %v613, %v514
      %v615 = vshrl.u32 %v614, 4
      %v616 = vand.u32 %v614, 15
      %v617 = vsub.s32 0, %v616
      %v618 = vsel %vm612, %v617, %v616
      %vm619 = vcmp.lt.s32.totalorder %v515, 0
      %v620 = vsub.s32 0, %v515
      %v621 = vsel %vm619, %v620, %v515
      %v622 = vshrl.u32 %v621, 4
      %v623 = vand.u32 %v621, 15
      %v624 = vsub.s32 0, %v623
      %v625 = vsel %vm619, %v624, %v623
      %vm626 = vcmp.lt.s32.totalorder %v516, 0
      %v627 = vsub.s32 0, %v516
      %v628 = vsel %vm626, %v627, %v516
      %v629 = vshrl.u32 %v628, 4
      %v630 = vand.u32 %v628, 15
      %v631 = vsub.s32 0, %v630
      %v632 = vsel %vm626, %v631, %v630
      %vm633 = vcmp.lt.s32.totalorder %v517, 0
      %v634 = vsub.s32 0, %v517
      %v635 = vsel %vm633, %v634, %v517
      %v636 = vshrl.u32 %v635, 4
      %v637 = vand.u32 %v635, 15
      %v638 = vsub.s32 0, %v637
      %v639 = vsel %vm633, %v638, %v637
      %vm640 = vcmp.lt.s32.totalorder %v518, 0
      %v641 = vsub.s32 0, %v518
      %v642 = vsel %vm640, %v641, %v518
      %v643 = vshrl.u32 %v642, 4
      %v644 = vand.u32 %v642, 15
      %v645 = vsub.s32 0, %v644
      %v646 = vsel %vm640, %v645, %v644
      %vm647 = vcmp.lt.s32.totalorder %v519, 0
      %v648 = vsub.s32 0, %v519
      %v649 = vsel %vm647, %v648, %v519
      %v650 = vshrl.u32 %v649, 4
      %v651 = vand.u32 %v649, 15
      %v652 = vsub.s32 0, %v651
      %v653 = vsel %vm647, %v652, %v651
      %vm654 = vcmp.lt.s32.totalorder %v520, 0
      %v655 = vsub.s32 0, %v520
      %v656 = vsel %vm654, %v655, %v520
      %v657 = vshrl.u32 %v656, 4
      %v658 = vand.u32 %v656, 15
      %v659 = vsub.s32 0, %v658
      %v660 = vsel %vm654, %v659, %v658
      %vm661 = vcmp.lt.s32.totalorder %v521, 0
      %v662 = vsub.s32 0, %v521
      %v663 = vsel %vm661, %v662, %v521
      %v664 = vshrl.u32 %v663, 4
      %v665 = vand.u32 %v663, 15
      %v666 = vsub.s32 0, %v665
      %v667 = vsel %vm661, %v666, %v665
      %vm668 = vcmp.lt.s32.totalorder %v522, 0
      %v669 = vsub.s32 0, %v522
      %v670 = vsel %vm668, %v669, %v522
      %v671 = vshrl.u32 %v670, 4
      %v672 = vand.u32 %v670, 15
      %v673 = vsub.s32 0, %v672
      %v674 = vsel %vm668, %v673, %v672
      %vm675 = vcmp.lt.s32.totalorder %v523, 0
      %v676 = vsub.s32 0, %v523
      %v677 = vsel %vm675, %v676, %v523
      %v678 = vshrl.u32 %v677, 4
      %v679 = vand.u32 %v677, 15
      %v680 = vsub.s32 0, %v679
      %v681 = vsel %vm675, %v680, %v679
      %vm682 = vcmp.lt.s32.totalorder %v524, 0
      %v683 = vsub.s32 0, %v524
      %v684 = vsel %vm682, %v683, %v524
      %v685 = vshrl.u32 %v684, 4
      %v686 = vand.u32 %v684, 15
      %v687 = vsub.s32 0, %v686
      %v688 = vsel %vm682, %v687, %v686
      %vm689 = vcmp.lt.s32.totalorder %v525, 0
      %v690 = vsub.s32 0, %v525
      %v691 = vsel %vm689, %v690, %v525
      %v692 = vshrl.u32 %v691, 4
      %v693 = vand.u32 %v691, 15
      %v694 = vsub.s32 0, %v693
      %v695 = vsel %vm689, %v694, %v693
      %vm696 = vcmp.lt.s32.totalorder %v526, 0
      %v697 = vsub.s32 0, %v526
      %v698 = vsel %vm696, %v697, %v526
      %v699 = vshrl.u32 %v698, 4
      %v700 = vand.u32 %v698, 15
      %v701 = vsub.s32 0, %v700
      %v702 = vsel %vm696, %v701, %v700
      %vm703 = vcmp.lt.s32.totalorder %v527, 0
      %v704 = vsub.s32 0, %v527
      %v705 = vsel %vm703, %v704, %v527
      %v706 = vshrl.u32 %v705, 4
      %v707 = vand.u32 %v705, 15
      %v708 = vsub.s32 0, %v707
      %v709 = vsel %vm703, %v708, %v707
      %vm710 = vcmp.lt.s32.totalorder %v528, 0
      %v711 = vsub.s32 0, %v528
      %v712 = vsel %vm710, %v711, %v528
      %v713 = vshrl.u32 %v712, 4
      %v714 = vand.u32 %v712, 15
      %v715 = vsub.s32 0, %v714
      %v716 = vsel %vm710, %v715, %v714
      %vm717 = vcmp.lt.s32.totalorder %v529, 0
      %v718 = vsub.s32 0, %v529
      %v719 = vsel %vm717, %v718, %v529
      %v720 = vshrl.u32 %v719, 4
      %v721 = vand.u32 %v719, 15
      %v722 = vsub.s32 0, %v721
      %v723 = vsel %vm717, %v722, %v721
      %vm724 = vcmp.lt.s32.totalorder %v530, 0
      %v725 = vsub.s32 0, %v530
      %v726 = vsel %vm724, %v725, %v530
      %v727 = vshrl.u32 %v726, 4
      %v728 = vand.u32 %v726, 15
      %v729 = vsub.s32 0, %v728
      %v730 = vsel %vm724, %v729, %v728
      %vm731 = vcmp.lt.s32.totalorder %v531, 0
      %v732 = vsub.s32 0, %v531
      %v733 = vsel %vm731, %v732, %v531
      %v734 = vshrl.u32 %v733, 4
      %v735 = vand.u32 %v733, 15
      %v736 = vsub.s32 0, %v735
      %v737 = vsel %vm731, %v736, %v735
      %vm738 = vcmp.lt.s32.totalorder %v532, 0
      %v739 = vsub.s32 0, %v532
      %v740 = vsel %vm738, %v739, %v532
      %v741 = vshrl.u32 %v740, 4
      %v742 = vand.u32 %v740, 15
      %v743 = vsub.s32 0, %v742
      %v744 = vsel %vm738, %v743, %v742
      %vm745 = vcmp.lt.s32.totalorder %v533, 0
      %v746 = vsub.s32 0, %v533
      %v747 = vsel %vm745, %v746, %v533
      %v748 = vshrl.u32 %v747, 4
      %v749 = vand.u32 %v747, 15
      %v750 = vsub.s32 0, %v749
      %v751 = vsel %vm745, %v750, %v749
      %vm752 = vcmp.lt.s32.totalorder %v534, 0
      %v753 = vsub.s32 0, %v534
      %v754 = vsel %vm752, %v753, %v534
      %v755 = vshrl.u32 %v754, 4
      %v756 = vand.u32 %v754, 15
      %v757 = vsub.s32 0, %v756
      %v758 = vsel %vm752, %v757, %v756
      %vm759 = vcmp.ne.s32.totalorder %v541, 0
      %vm760 = vcmp.ne.s32.totalorder %v548, 0
      %vm761 = vcmp.ne.s32.totalorder %v555, 0
      %vm762 = vcmp.ne.s32.totalorder %v562, 0
      %vm763 = vcmp.ne.s32.totalorder %v569, 0
      %vm764 = vcmp.ne.s32.totalorder %v576, 0
      %vm765 = vcmp.ne.s32.totalorder %v583, 0
      %vm766 = vcmp.ne.s32.totalorder %v590, 0
      %vm767 = vcmp.ne.s32.totalorder %v597, 0
      %vm768 = vcmp.ne.s32.totalorder %v604, 0
      %vm769 = vcmp.ne.s32.totalorder %v611, 0
      %vm770 = vcmp.ne.s32.totalorder %v618, 0
      %vm771 = vcmp.ne.s32.totalorder %v625, 0
      %vm772 = vcmp.ne.s32.totalorder %v632, 0
      %vm773 = vcmp.ne.s32.totalorder %v639, 0
      %vm774 = vcmp.ne.s32.totalorder %v646, 0
      %vm775 = vcmp.ne.s32.totalorder %v653, 0
      %vm776 = vcmp.ne.s32.totalorder %v660, 0
      %vm777 = vcmp.ne.s32.totalorder %v667, 0
      %vm778 = vcmp.ne.s32.totalorder %v674, 0
      %vm779 = vcmp.ne.s32.totalorder %v681, 0
      %vm780 = vcmp.ne.s32.totalorder %v688, 0
      %vm781 = vcmp.ne.s32.totalorder %v695, 0
      %vm782 = vcmp.ne.s32.totalorder %v702, 0
      %vm783 = vcmp.ne.s32.totalorder %v709, 0
      %vm784 = vcmp.ne.s32.totalorder %v716, 0
      %vm785 = vcmp.ne.s32.totalorder %v723, 0
      %vm786 = vcmp.ne.s32.totalorder %v730, 0
      %vm787 = vcmp.ne.s32.totalorder %v737, 0
      %vm788 = vcmp.ne.s32.totalorder %v744, 0
      %vm789 = vcmp.ne.s32.totalorder %v751, 0
      %vm790 = vcmp.ne.s32.totalorder %v758, 0
      %vm791 = vcmp.lt.s32.totalorder %v541, 0
      %vm792 = vcmp.lt.s32.totalorder %v548, 0
      %vm793 = vcmp.lt.s32.totalorder %v555, 0
      %vm794 = vcmp.lt.s32.totalorder %v562, 0
      %vm795 = vcmp.lt.s32.totalorder %v569, 0
      %vm796 = vcmp.lt.s32.totalorder %v576, 0
      %vm797 = vcmp.lt.s32.totalorder %v583, 0
      %vm798 = vcmp.lt.s32.totalorder %v590, 0
      %vm799 = vcmp.lt.s32.totalorder %v597, 0
      %vm800 = vcmp.lt.s32.totalorder %v604, 0
      %vm801 = vcmp.lt.s32.totalorder %v611, 0
      %vm802 = vcmp.lt.s32.totalorder %v618, 0
      %vm803 = vcmp.lt.s32.totalorder %v625, 0
      %vm804 = vcmp.lt.s32.totalorder %v632, 0
      %vm805 = vcmp.lt.s32.totalorder %v639, 0
      %vm806 = vcmp.lt.s32.totalorder %v646, 0
      %vm807 = vcmp.lt.s32.totalorder %v653, 0
      %vm808 = vcmp.lt.s32.totalorder %v660, 0
      %vm809 = vcmp.lt.s32.totalorder %v667, 0
      %vm810 = vcmp.lt.s32.totalorder %v674, 0
      %vm811 = vcmp.lt.s32.totalorder %v681, 0
      %vm812 = vcmp.lt.s32.totalorder %v688, 0
      %vm813 = vcmp.lt.s32.totalorder %v695, 0
      %vm814 = vcmp.lt.s32.totalorder %v702, 0
      %vm815 = vcmp.lt.s32.totalorder %v709, 0
      %vm816 = vcmp.lt.s32.totalorder %v716, 0
      %vm817 = vcmp.lt.s32.totalorder %v723, 0
      %vm818 = vcmp.lt.s32.totalorder %v730, 0
      %vm819 = vcmp.lt.s32.totalorder %v737, 0
      %vm820 = vcmp.lt.s32.totalorder %v744, 0
      %vm821 = vcmp.lt.s32.totalorder %v751, 0
      %vm822 = vcmp.lt.s32.totalorder %v758, 0
      %vm823 = vmand %vm791, %vm759
      %vm824 = vmand %vm792, %vm760
      %vm825 = vmand %vm793, %vm761
      %vm826 = vmand %vm794, %vm762
      %vm827 = vmand %vm795, %vm763
      %vm828 = vmand %vm796, %vm764
      %vm829 = vmand %vm797, %vm765
      %vm830 = vmand %vm798, %vm766
      %vm831 = vmand %vm799, %vm767
      %vm832 = vmand %vm800, %vm768
      %vm833 = vmand %vm801, %vm769
      %vm834 = vmand %vm802, %vm770
      %vm835 = vmand %vm803, %vm771
      %vm836 = vmand %vm804, %vm772
      %vm837 = vmand %vm805, %vm773
      %vm838 = vmand %vm806, %vm774
      %vm839 = vmand %vm807, %vm775
      %vm840 = vmand %vm808, %vm776
      %vm841 = vmand %vm809, %vm777
      %vm842 = vmand %vm810, %vm778
      %vm843 = vmand %vm811, %vm779
      %vm844 = vmand %vm812, %vm780
      %vm845 = vmand %vm813, %vm781
      %vm846 = vmand %vm814, %vm782
      %vm847 = vmand %vm815, %vm783
      %vm848 = vmand %vm816, %vm784
      %vm849 = vmand %vm817, %vm785
      %vm850 = vmand %vm818, %vm786
      %vm851 = vmand %vm819, %vm787
      %vm852 = vmand %vm820, %vm788
      %vm853 = vmand %vm821, %vm789
      %vm854 = vmand %vm822, %vm790
      %v855 = vadd.s32 %v541, 16
      %v856 = vadd.s32 %v548, 16
      %v857 = vadd.s32 %v555, 16
      %v858 = vadd.s32 %v562, 16
      %v859 = vadd.s32 %v569, 16
      %v860 = vadd.s32 %v576, 16
      %v861 = vadd.s32 %v583, 16
      %v862 = vadd.s32 %v590, 16
      %v863 = vadd.s32 %v597, 16
      %v864 = vadd.s32 %v604, 16
      %v865 = vadd.s32 %v611, 16
      %v866 = vadd.s32 %v618, 16
      %v867 = vadd.s32 %v625, 16
      %v868 = vadd.s32 %v632, 16
      %v869 = vadd.s32 %v639, 16
      %v870 = vadd.s32 %v646, 16
      %v871 = vadd.s32 %v653, 16
      %v872 = vadd.s32 %v660, 16
      %v873 = vadd.s32 %v667, 16
      %v874 = vadd.s32 %v674, 16
      %v875 = vadd.s32 %v681, 16
      %v876 = vadd.s32 %v688, 16
      %v877 = vadd.s32 %v695, 16
      %v878 = vadd.s32 %v702, 16
      %v879 = vadd.s32 %v709, 16
      %v880 = vadd.s32 %v716, 16
      %v881 = vadd.s32 %v723, 16
      %v882 = vadd.s32 %v730, 16
      %v883 = vadd.s32 %v737, 16
      %v884 = vadd.s32 %v744, 16
      %v885 = vadd.s32 %v751, 16
      %v886 = vadd.s32 %v758, 16
      %v887 = vsel %vm823, %v855, %v541
      %v888 = vsel %vm824, %v856, %v548
      %v889 = vsel %vm825, %v857, %v555
      %v890 = vsel %vm826, %v858, %v562
      %v891 = vsel %vm827, %v859, %v569
      %v892 = vsel %vm828, %v860, %v576
      %v893 = vsel %vm829, %v861, %v583
      %v894 = vsel %vm830, %v862, %v590
      %v895 = vsel %vm831, %v863, %v597
      %v896 = vsel %vm832, %v864, %v604
      %v897 = vsel %vm833, %v865, %v611
      %v898 = vsel %vm834, %v866, %v618
      %v899 = vsel %vm835, %v867, %v625
      %v900 = vsel %vm836, %v868, %v632
      %v901 = vsel %vm837, %v869, %v639
      %v902 = vsel %vm838, %v870, %v646
      %v903 = vsel %vm839, %v871, %v653
      %v904 = vsel %vm840, %v872, %v660
      %v905 = vsel %vm841, %v873, %v667
      %v906 = vsel %vm842, %v874, %v674
      %v907 = vsel %vm843, %v875, %v681
      %v908 = vsel %vm844, %v876, %v688
      %v909 = vsel %vm845, %v877, %v695
      %v910 = vsel %vm846, %v878, %v702
      %v911 = vsel %vm847, %v879, %v709
      %v912 = vsel %vm848, %v880, %v716
      %v913 = vsel %vm849, %v881, %v723
      %v914 = vsel %vm850, %v882, %v730
      %v915 = vsel %vm851, %v883, %v737
      %v916 = vsel %vm852, %v884, %v744
      %v917 = vsel %vm853, %v885, %v751
      %v918 = vsel %vm854, %v886, %v758
      %vm919 = vcmp.ge.s32.totalorder %v887, 1
      %vm920 = vcmp.ge.s32.totalorder %v888, 1
      %vm921 = vcmp.ge.s32.totalorder %v889, 1
      %vm922 = vcmp.ge.s32.totalorder %v890, 1
      %vm923 = vcmp.ge.s32.totalorder %v891, 1
      %vm924 = vcmp.ge.s32.totalorder %v892, 1
      %vm925 = vcmp.ge.s32.totalorder %v893, 1
      %vm926 = vcmp.ge.s32.totalorder %v894, 1
      %vm927 = vcmp.ge.s32.totalorder %v895, 1
      %vm928 = vcmp.ge.s32.totalorder %v896, 1
      %vm929 = vcmp.ge.s32.totalorder %v897, 1
      %vm930 = vcmp.ge.s32.totalorder %v898, 1
      %vm931 = vcmp.ge.s32.totalorder %v899, 1
      %vm932 = vcmp.ge.s32.totalorder %v900, 1
      %vm933 = vcmp.ge.s32.totalorder %v901, 1
      %vm934 = vcmp.ge.s32.totalorder %v902, 1
      %vm935 = vcmp.ge.s32.totalorder %v903, 1
      %vm936 = vcmp.ge.s32.totalorder %v904, 1
      %vm937 = vcmp.ge.s32.totalorder %v905, 1
      %vm938 = vcmp.ge.s32.totalorder %v906, 1
      %vm939 = vcmp.ge.s32.totalorder %v907, 1
      %vm940 = vcmp.ge.s32.totalorder %v908, 1
      %vm941 = vcmp.ge.s32.totalorder %v909, 1
      %vm942 = vcmp.ge.s32.totalorder %v910, 1
      %vm943 = vcmp.ge.s32.totalorder %v911, 1
      %vm944 = vcmp.ge.s32.totalorder %v912, 1
      %vm945 = vcmp.ge.s32.totalorder %v913, 1
      %vm946 = vcmp.ge.s32.totalorder %v914, 1
      %vm947 = vcmp.ge.s32.totalorder %v915, 1
      %vm948 = vcmp.ge.s32.totalorder %v916, 1
      %vm949 = vcmp.ge.s32.totalorder %v917, 1
      %vm950 = vcmp.ge.s32.totalorder %v918, 1
      %vm951 = vcmp.le.s32.totalorder %v887, 14
      %vm952 = vcmp.le.s32.totalorder %v888, 14
      %vm953 = vcmp.le.s32.totalorder %v889, 14
      %vm954 = vcmp.le.s32.totalorder %v890, 14
      %vm955 = vcmp.le.s32.totalorder %v891, 14
      %vm956 = vcmp.le.s32.totalorder %v892, 14
      %vm957 = vcmp.le.s32.totalorder %v893, 14
      %vm958 = vcmp.le.s32.totalorder %v894, 14
      %vm959 = vcmp.le.s32.totalorder %v895, 14
      %vm960 = vcmp.le.s32.totalorder %v896, 14
      %vm961 = vcmp.le.s32.totalorder %v897, 14
      %vm962 = vcmp.le.s32.totalorder %v898, 14
      %vm963 = vcmp.le.s32.totalorder %v899, 14
      %vm964 = vcmp.le.s32.totalorder %v900, 14
      %vm965 = vcmp.le.s32.totalorder %v901, 14
      %vm966 = vcmp.le.s32.totalorder %v902, 14
      %vm967 = vcmp.le.s32.totalorder %v903, 14
      %vm968 = vcmp.le.s32.totalorder %v904, 14
      %vm969 = vcmp.le.s32.totalorder %v905, 14
      %vm970 = vcmp.le.s32.totalorder %v906, 14
      %vm971 = vcmp.le.s32.totalorder %v907, 14
      %vm972 = vcmp.le.s32.totalorder %v908, 14
      %vm973 = vcmp.le.s32.totalorder %v909, 14
      %vm974 = vcmp.le.s32.totalorder %v910, 14
      %vm975 = vcmp.le.s32.totalorder %v911, 14
      %vm976 = vcmp.le.s32.totalorder %v912, 14
      %vm977 = vcmp.le.s32.totalorder %v913, 14
      %vm978 = vcmp.le.s32.totalorder %v914, 14
      %vm979 = vcmp.le.s32.totalorder %v915, 14
      %vm980 = vcmp.le.s32.totalorder %v916, 14
      %vm981 = vcmp.le.s32.totalorder %v917, 14
      %vm982 = vcmp.le.s32.totalorder %v918, 14
      %vm1013 = vcmask 1040384
      %v1014 = vrot.slane %v470, 7
      %v1015 = vrot.slane %v471, 7
      %v1016 = vsel %vm1013, %v1014, %v1015
      %v1017 = vrot.slane %v472, 7
      %v1018 = vsel %vm1013, %v1015, %v1017
      %v1019 = vrot.slane %v473, 7
      %v1020 = vsel %vm1013, %v1017, %v1019
      %v1021 = vrot.slane %v474, 7
      %v1022 = vsel %vm1013, %v1019, %v1021
      %v1023 = vrot.slane %v475, 7
      %v1024 = vsel %vm1013, %v1021, %v1023
      %v1025 = vrot.slane %v476, 7
      %v1026 = vsel %vm1013, %v1023, %v1025
      %v1027 = vrot.slane %v477, 7
      %v1028 = vsel %vm1013, %v1025, %v1027
      %v1029 = vrot.slane %v478, 7
      %v1030 = vsel %vm1013, %v1027, %v1029
      %v1031 = vrot.slane %v479, 7
      %v1032 = vsel %vm1013, %v1029, %v1031
      %v1033 = vrot.slane %v480, 7
      %v1034 = vsel %vm1013, %v1031, %v1033
      %v1035 = vrot.slane %v481, 7
      %v1036 = vsel %vm1013, %v1033, %v1035
      %v1037 = vrot.slane %v482, 7
      %v1038 = vsel %vm1013, %v1035, %v1037
      %v1039 = vrot.slane %v483, 7
      %v1040 = vsel %vm1013, %v1037, %v1039
      %v1041 = vrot.slane %v484, 7
      %v1042 = vsel %vm1013, %v1039, %v1041
      %v1043 = vrot.slane %v485, 7
      %v1044 = vsel %vm1013, %v1041, %v1043
      %v1045 = vrot.slane %v486, 7
      %v1046 = vsel %vm1013, %v1043, %v1045
      %v1047 = vrot.slane %v487, 7
      %v1048 = vsel %vm1013, %v1045, %v1047
      %v1049 = vrot.slane %v488, 7
      %v1050 = vsel %vm1013, %v1047, %v1049
      %v1051 = vrot.slane %v489, 7
      %v1052 = vsel %vm1013, %v1049, %v1051
      %v1053 = vrot.slane %v490, 7
      %v1054 = vsel %vm1013, %v1051, %v1053
      %v1055 = vrot.slane %v491, 7
      %v1056 = vsel %vm1013, %v1053, %v1055
      %v1057 = vrot.slane %v492, 7
      %v1058 = vsel %vm1013, %v1055, %v1057
      %v1059 = vrot.slane %v493, 7
      %v1060 = vsel %vm1013, %v1057, %v1059
      %v1061 = vrot.slane %v494, 7
      %v1062 = vsel %vm1013, %v1059, %v1061
      %v1063 = vrot.slane %v495, 7
      %v1064 = vsel %vm1013, %v1061, %v1063
      %v1065 = vrot.slane %v496, 7
      %v1066 = vsel %vm1013, %v1063, %v1065
      %v1067 = vrot.slane %v497, 7
      %v1068 = vsel %vm1013, %v1065, %v1067
      %v1069 = vrot.slane %v498, 7
      %v1070 = vsel %vm1013, %v1067, %v1069
      %v1071 = vrot.slane %v499, 7
      %v1072 = vsel %vm1013, %v1069, %v1071
      %v1103 = vsel %vm1013, 0.0, %v1014
      %v1104 = vsel %vm919, 1, 0
      %v1105 = vsel %vm920, 1, 0
      %v1106 = vsel %vm921, 1, 0
      %v1107 = vsel %vm922, 1, 0
      %v1108 = vsel %vm923, 1, 0
      %v1109 = vsel %vm924, 1, 0
      %v1110 = vsel %vm925, 1, 0
      %v1111 = vsel %vm926, 1, 0
      %v1112 = vsel %vm927, 1, 0
      %v1113 = vsel %vm928, 1, 0
      %v1114 = vsel %vm929, 1, 0
      %v1115 = vsel %vm930, 1, 0
      %v1116 = vsel %vm931, 1, 0
      %v1117 = vsel %vm932, 1, 0
      %v1118 = vsel %vm933, 1, 0
      %v1119 = vsel %vm934, 1, 0
      %v1120 = vsel %vm935, 1, 0
      %v1121 = vsel %vm936, 1, 0
      %v1122 = vsel %vm937, 1, 0
      %v1123 = vsel %vm938, 1, 0
      %v1124 = vsel %vm939, 1, 0
      %v1125 = vsel %vm940, 1, 0
      %v1126 = vsel %vm941, 1, 0
      %v1127 = vsel %vm942, 1, 0
      %v1128 = vsel %vm943, 1, 0
      %v1129 = vsel %vm944, 1, 0
      %v1130 = vsel %vm945, 1, 0
      %v1131 = vsel %vm946, 1, 0
      %v1132 = vsel %vm947, 1, 0
      %v1133 = vsel %vm948, 1, 0
      %v1134 = vsel %vm949, 1, 0
      %v1135 = vsel %vm950, 1, 0
      %vm1136 = vcmp.eq.s32.totalorder %v1104, 1
      %vm1137 = vcmp.eq.s32.totalorder %v1105, 1
      %vm1138 = vcmp.eq.s32.totalorder %v1106, 1
      %vm1139 = vcmp.eq.s32.totalorder %v1107, 1
      %vm1140 = vcmp.eq.s32.totalorder %v1108, 1
      %vm1141 = vcmp.eq.s32.totalorder %v1109, 1
      %vm1142 = vcmp.eq.s32.totalorder %v1110, 1
      %vm1143 = vcmp.eq.s32.totalorder %v1111, 1
      %vm1144 = vcmp.eq.s32.totalorder %v1112, 1
      %vm1145 = vcmp.eq.s32.totalorder %v1113, 1
      %vm1146 = vcmp.eq.s32.totalorder %v1114, 1
      %vm1147 = vcmp.eq.s32.totalorder %v1115, 1
      %vm1148 = vcmp.eq.s32.totalorder %v1116, 1
      %vm1149 = vcmp.eq.s32.totalorder %v1117, 1
      %vm1150 = vcmp.eq.s32.totalorder %v1118, 1
      %vm1151 = vcmp.eq.s32.totalorder %v1119, 1
      %vm1152 = vcmp.eq.s32.totalorder %v1120, 1
      %vm1153 = vcmp.eq.s32.totalorder %v1121, 1
      %vm1154 = vcmp.eq.s32.totalorder %v1122, 1
      %vm1155 = vcmp.eq.s32.totalorder %v1123, 1
      %vm1156 = vcmp.eq.s32.totalorder %v1124, 1
      %vm1157 = vcmp.eq.s32.totalorder %v1125, 1
      %vm1158 = vcmp.eq.s32.totalorder %v1126, 1
      %vm1159 = vcmp.eq.s32.totalorder %v1127, 1
      %vm1160 = vcmp.eq.s32.totalorder %v1128, 1
      %vm1161 = vcmp.eq.s32.totalorder %v1129, 1
      %vm1162 = vcmp.eq.s32.totalorder %v1130, 1
      %vm1163 = vcmp.eq.s32.totalorder %v1131, 1
      %vm1164 = vcmp.eq.s32.totalorder %v1132, 1
      %vm1165 = vcmp.eq.s32.totalorder %v1133, 1
      %vm1166 = vcmp.eq.s32.totalorder %v1134, 1
      %vm1167 = vcmp.eq.s32.totalorder %v1135, 1
      %v1168 = vsel %vm1138, %v1103, 0.0
      %v1169 = vsel %vm1139, %v1016, 0.0
      %v1170 = vsel %vm1140, %v1018, 0.0
      %v1171 = vsel %vm1141, %v1020, 0.0
      %v1172 = vsel %vm1142, %v1022, 0.0
      %v1173 = vsel %vm1143, %v1024, 0.0
      %v1174 = vsel %vm1144, %v1026, 0.0
      %v1175 = vsel %vm1145, %v1028, 0.0
      %v1176 = vsel %vm1146, %v1030, 0.0
      %v1177 = vsel %vm1147, %v1032, 0.0
      %v1178 = vsel %vm1148, %v1034, 0.0
      %v1179 = vsel %vm1149, %v1036, 0.0
      %v1180 = vsel %vm1150, %v1038, 0.0
      %v1181 = vsel %vm1151, %v1040, 0.0
      %v1182 = vsel %vm1152, %v1042, 0.0
      %v1183 = vsel %vm1153, %v1044, 0.0
      %v1184 = vsel %vm1154, %v1046, 0.0
      %v1185 = vsel %vm1155, %v1048, 0.0
      %v1186 = vsel %vm1156, %v1050, 0.0
      %v1187 = vsel %vm1157, %v1052, 0.0
      %v1188 = vsel %vm1158, %v1054, 0.0
      %v1189 = vsel %vm1159, %v1056, 0.0
      %v1190 = vsel %vm1160, %v1058, 0.0
      %v1191 = vsel %vm1161, %v1060, 0.0
      %v1192 = vsel %vm1162, %v1062, 0.0
      %v1193 = vsel %vm1163, %v1064, 0.0
      %v1194 = vsel %vm1164, %v1066, 0.0
      %v1195 = vsel %vm1165, %v1068, 0.0
      %v1196 = vsel %vm1166, %v1070, 0.0
      %v1197 = vsel %vm1167, %v1072, 0.0
      %vm1199 = vcmask 1046528
      %v1200 = vrot.slane %v470, 1
      %v1201 = vrot.slane %v471, 1
      %v1202 = vsel %vm1199, %v1200, %v1201
      %v1203 = vrot.slane %v472, 1
      %v1204 = vsel %vm1199, %v1201, %v1203
      %v1205 = vrot.slane %v473, 1
      %v1206 = vsel %vm1199, %v1203, %v1205
      %v1207 = vrot.slane %v474, 1
      %v1208 = vsel %vm1199, %v1205, %v1207
      %v1209 = vrot.slane %v475, 1
      %v1210 = vsel %vm1199, %v1207, %v1209
      %v1211 = vrot.slane %v476, 1
      %v1212 = vsel %vm1199, %v1209, %v1211
      %v1213 = vrot.slane %v477, 1
      %v1214 = vsel %vm1199, %v1211, %v1213
      %v1215 = vrot.slane %v478, 1
      %v1216 = vsel %vm1199, %v1213, %v1215
      %v1217 = vrot.slane %v479, 1
      %v1218 = vsel %vm1199, %v1215, %v1217
      %v1219 = vrot.slane %v480, 1
      %v1220 = vsel %vm1199, %v1217, %v1219
      %v1221 = vrot.slane %v481, 1
      %v1222 = vsel %vm1199, %v1219, %v1221
      %v1223 = vrot.slane %v482, 1
      %v1224 = vsel %vm1199, %v1221, %v1223
      %v1225 = vrot.slane %v483, 1
      %v1226 = vsel %vm1199, %v1223, %v1225
      %v1227 = vrot.slane %v484, 1
      %v1228 = vsel %vm1199, %v1225, %v1227
      %v1229 = vrot.slane %v485, 1
      %v1230 = vsel %vm1199, %v1227, %v1229
      %v1231 = vrot.slane %v486, 1
      %v1232 = vsel %vm1199, %v1229, %v1231
      %v1233 = vrot.slane %v487, 1
      %v1234 = vsel %vm1199, %v1231, %v1233
      %v1235 = vrot.slane %v488, 1
      %v1236 = vsel %vm1199, %v1233, %v1235
      %v1237 = vrot.slane %v489, 1
      %v1238 = vsel %vm1199, %v1235, %v1237
      %v1239 = vrot.slane %v490, 1
      %v1240 = vsel %vm1199, %v1237, %v1239
      %v1241 = vrot.slane %v491, 1
      %v1242 = vsel %vm1199, %v1239, %v1241
      %v1243 = vrot.slane %v492, 1
      %v1244 = vsel %vm1199, %v1241, %v1243
      %v1245 = vrot.slane %v493, 1
      %v1246 = vsel %vm1199, %v1243, %v1245
      %v1247 = vrot.slane %v494, 1
      %v1248 = vsel %vm1199, %v1245, %v1247
      %v1249 = vrot.slane %v495, 1
      %v1250 = vsel %vm1199, %v1247, %v1249
      %v1251 = vrot.slane %v496, 1
      %v1252 = vsel %vm1199, %v1249, %v1251
      %v1253 = vrot.slane %v497, 1
      %v1254 = vsel %vm1199, %v1251, %v1253
      %v1255 = vrot.slane %v498, 1
      %v1256 = vsel %vm1199, %v1253, %v1255
      %v1257 = vrot.slane %v499, 1
      %v1258 = vsel %vm1199, %v1255, %v1257
      %v1259 = vrot.slane %v500, 1
      %v1260 = vsel %vm1199, %v1257, %v1259
      %v1292 = vsel %vm1199, 0.0, %v1200
      %v1293 = vsel %vm951, 1, 0
      %v1294 = vsel %vm952, 1, 0
      %v1295 = vsel %vm953, 1, 0
      %v1296 = vsel %vm954, 1, 0
      %v1297 = vsel %vm955, 1, 0
      %v1298 = vsel %vm956, 1, 0
      %v1299 = vsel %vm957, 1, 0
      %v1300 = vsel %vm958, 1, 0
      %v1301 = vsel %vm959, 1, 0
      %v1302 = vsel %vm960, 1, 0
      %v1303 = vsel %vm961, 1, 0
      %v1304 = vsel %vm962, 1, 0
      %v1305 = vsel %vm963, 1, 0
      %v1306 = vsel %vm964, 1, 0
      %v1307 = vsel %vm965, 1, 0
      %v1308 = vsel %vm966, 1, 0
      %v1309 = vsel %vm967, 1, 0
      %v1310 = vsel %vm968, 1, 0
      %v1311 = vsel %vm969, 1, 0
      %v1312 = vsel %vm970, 1, 0
      %v1313 = vsel %vm971, 1, 0
      %v1314 = vsel %vm972, 1, 0
      %v1315 = vsel %vm973, 1, 0
      %v1316 = vsel %vm974, 1, 0
      %v1317 = vsel %vm975, 1, 0
      %v1318 = vsel %vm976, 1, 0
      %v1319 = vsel %vm977, 1, 0
      %v1320 = vsel %vm978, 1, 0
      %v1321 = vsel %vm979, 1, 0
      %v1322 = vsel %vm980, 1, 0
      %v1323 = vsel %vm981, 1, 0
      %v1324 = vsel %vm982, 1, 0
      %vm1325 = vcmp.eq.s32.totalorder %v1293, 1
      %vm1326 = vcmp.eq.s32.totalorder %v1294, 1
      %vm1327 = vcmp.eq.s32.totalorder %v1295, 1
      %vm1328 = vcmp.eq.s32.totalorder %v1296, 1
      %vm1329 = vcmp.eq.s32.totalorder %v1297, 1
      %vm1330 = vcmp.eq.s32.totalorder %v1298, 1
      %vm1331 = vcmp.eq.s32.totalorder %v1299, 1
      %vm1332 = vcmp.eq.s32.totalorder %v1300, 1
      %vm1333 = vcmp.eq.s32.totalorder %v1301, 1
      %vm1334 = vcmp.eq.s32.totalorder %v1302, 1
      %vm1335 = vcmp.eq.s32.totalorder %v1303, 1
      %vm1336 = vcmp.eq.s32.totalorder %v1304, 1
      %vm1337 = vcmp.eq.s32.totalorder %v1305, 1
      %vm1338 = vcmp.eq.s32.totalorder %v1306, 1
      %vm1339 = vcmp.eq.s32.totalorder %v1307, 1
      %vm1340 = vcmp.eq.s32.totalorder %v1308, 1
      %vm1341 = vcmp.eq.s32.totalorder %v1309, 1
      %vm1342 = vcmp.eq.s32.totalorder %v1310, 1
      %vm1343 = vcmp.eq.s32.totalorder %v1311, 1
      %vm1344 = vcmp.eq.s32.totalorder %v1312, 1
      %vm1345 = vcmp.eq.s32.totalorder %v1313, 1
      %vm1346 = vcmp.eq.s32.totalorder %v1314, 1
      %vm1347 = vcmp.eq.s32.totalorder %v1315, 1
      %vm1348 = vcmp.eq.s32.totalorder %v1316, 1
      %vm1349 = vcmp.eq.s32.totalorder %v1317, 1
      %vm1350 = vcmp.eq.s32.totalorder %v1318, 1
      %vm1351 = vcmp.eq.s32.totalorder %v1319, 1
      %vm1352 = vcmp.eq.s32.totalorder %v1320, 1
      %vm1353 = vcmp.eq.s32.totalorder %v1321, 1
      %vm1354 = vcmp.eq.s32.totalorder %v1322, 1
      %vm1355 = vcmp.eq.s32.totalorder %v1323, 1
      %vm1356 = vcmp.eq.s32.totalorder %v1324, 1
      %v1357 = vsel %vm1326, %v1292, 0.0
      %v1358 = vsel %vm1327, %v1202, 0.0
      %v1359 = vsel %vm1328, %v1204, 0.0
      %v1360 = vsel %vm1329, %v1206, 0.0
      %v1361 = vsel %vm1330, %v1208, 0.0
      %v1362 = vsel %vm1331, %v1210, 0.0
      %v1363 = vsel %vm1332, %v1212, 0.0
      %v1364 = vsel %vm1333, %v1214, 0.0
      %v1365 = vsel %vm1334, %v1216, 0.0
      %v1366 = vsel %vm1335, %v1218, 0.0
      %v1367 = vsel %vm1336, %v1220, 0.0
      %v1368 = vsel %vm1337, %v1222, 0.0
      %v1369 = vsel %vm1338, %v1224, 0.0
      %v1370 = vsel %vm1339, %v1226, 0.0
      %v1371 = vsel %vm1340, %v1228, 0.0
      %v1372 = vsel %vm1341, %v1230, 0.0
      %v1373 = vsel %vm1342, %v1232, 0.0
      %v1374 = vsel %vm1343, %v1234, 0.0
      %v1375 = vsel %vm1344, %v1236, 0.0
      %v1376 = vsel %vm1345, %v1238, 0.0
      %v1377 = vsel %vm1346, %v1240, 0.0
      %v1378 = vsel %vm1347, %v1242, 0.0
      %v1379 = vsel %vm1348, %v1244, 0.0
      %v1380 = vsel %vm1349, %v1246, 0.0
      %v1381 = vsel %vm1350, %v1248, 0.0
      %v1382 = vsel %vm1351, %v1250, 0.0
      %v1383 = vsel %vm1352, %v1252, 0.0
      %v1384 = vsel %vm1353, %v1254, 0.0
      %v1385 = vsel %vm1354, %v1256, 0.0
      %v1386 = vsel %vm1355, %v1258, 0.0
      %v1387 = vsel %vm1356, %v1260, 0.0
      %v1389 = vrot.slane %v500, 7
      %v1390 = vsel %vm1013, %v1071, %v1389
      %v1391 = vrot.slane %v501, 7
      %v1392 = vsel %vm1013, %v1389, %v1391
      %v1395 = vsel %vm1136, %v1103, 0.0
      %v1396 = vsel %vm1137, %v1016, 0.0
      %v1397 = vsel %vm1138, %v1018, 0.0
      %v1398 = vsel %vm1139, %v1020, 0.0
      %v1399 = vsel %vm1140, %v1022, 0.0
      %v1400 = vsel %vm1141, %v1024, 0.0
      %v1401 = vsel %vm1142, %v1026, 0.0
      %v1402 = vsel %vm1143, %v1028, 0.0
      %v1403 = vsel %vm1144, %v1030, 0.0
      %v1404 = vsel %vm1145, %v1032, 0.0
      %v1405 = vsel %vm1146, %v1034, 0.0
      %v1406 = vsel %vm1147, %v1036, 0.0
      %v1407 = vsel %vm1148, %v1038, 0.0
      %v1408 = vsel %vm1149, %v1040, 0.0
      %v1409 = vsel %vm1150, %v1042, 0.0
      %v1410 = vsel %vm1151, %v1044, 0.0
      %v1411 = vsel %vm1152, %v1046, 0.0
      %v1412 = vsel %vm1153, %v1048, 0.0
      %v1413 = vsel %vm1154, %v1050, 0.0
      %v1414 = vsel %vm1155, %v1052, 0.0
      %v1415 = vsel %vm1156, %v1054, 0.0
      %v1416 = vsel %vm1157, %v1056, 0.0
      %v1417 = vsel %vm1158, %v1058, 0.0
      %v1418 = vsel %vm1159, %v1060, 0.0
      %v1419 = vsel %vm1160, %v1062, 0.0
      %v1420 = vsel %vm1161, %v1064, 0.0
      %v1421 = vsel %vm1162, %v1066, 0.0
      %v1422 = vsel %vm1163, %v1068, 0.0
      %v1423 = vsel %vm1164, %v1070, 0.0
      %v1424 = vsel %vm1165, %v1072, 0.0
      %v1425 = vsel %vm1166, %v1390, 0.0
      %v1426 = vsel %vm1167, %v1392, 0.0
      %v1427 = vrot.slane %v501, 1
      %v1428 = vsel %vm1199, %v1259, %v1427
      %v1431 = vsel %vm1199, %v1427, 0.0
      %v1432 = vsel %vm1325, %v1202, 0.0
      %v1433 = vsel %vm1326, %v1204, 0.0
      %v1434 = vsel %vm1327, %v1206, 0.0
      %v1435 = vsel %vm1328, %v1208, 0.0
      %v1436 = vsel %vm1329, %v1210, 0.0
      %v1437 = vsel %vm1330, %v1212, 0.0
      %v1438 = vsel %vm1331, %v1214, 0.0
      %v1439 = vsel %vm1332, %v1216, 0.0
      %v1440 = vsel %vm1333, %v1218, 0.0
      %v1441 = vsel %vm1334, %v1220, 0.0
      %v1442 = vsel %vm1335, %v1222, 0.0
      %v1443 = vsel %vm1336, %v1224, 0.0
      %v1444 = vsel %vm1337, %v1226, 0.0
      %v1445 = vsel %vm1338, %v1228, 0.0
      %v1446 = vsel %vm1339, %v1230, 0.0
      %v1447 = vsel %vm1340, %v1232, 0.0
      %v1448 = vsel %vm1341, %v1234, 0.0
      %v1449 = vsel %vm1342, %v1236, 0.0
      %v1450 = vsel %vm1343, %v1238, 0.0
      %v1451 = vsel %vm1344, %v1240, 0.0
      %v1452 = vsel %vm1345, %v1242, 0.0
      %v1453 = vsel %vm1346, %v1244, 0.0
      %v1454 = vsel %vm1347, %v1246, 0.0
      %v1455 = vsel %vm1348, %v1248, 0.0
      %v1456 = vsel %vm1349, %v1250, 0.0
      %v1457 = vsel %vm1350, %v1252, 0.0
      %v1458 = vsel %vm1351, %v1254, 0.0
      %v1459 = vsel %vm1352, %v1256, 0.0
      %v1460 = vsel %vm1353, %v1258, 0.0
      %v1461 = vsel %vm1354, %v1260, 0.0
      %v1462 = vsel %vm1355, %v1428, 0.0
      %v1463 = vsel %vm1356, %v1431, 0.0
      %v1465 = vsel %vm1013, %v1391, 0.0
      %v1466 = vsel %vm1136, %v1018, 0.0
      %v1467 = vsel %vm1137, %v1020, 0.0
      %v1468 = vsel %vm1138, %v1022, 0.0
      %v1469 = vsel %vm1139, %v1024, 0.0
      %v1470 = vsel %vm1140, %v1026, 0.0
      %v1471 = vsel %vm1141, %v1028, 0.0
      %v1472 = vsel %vm1142, %v1030, 0.0
      %v1473 = vsel %vm1143, %v1032, 0.0
      %v1474 = vsel %vm1144, %v1034, 0.0
      %v1475 = vsel %vm1145, %v1036, 0.0
      %v1476 = vsel %vm1146, %v1038, 0.0
      %v1477 = vsel %vm1147, %v1040, 0.0
      %v1478 = vsel %vm1148, %v1042, 0.0
      %v1479 = vsel %vm1149, %v1044, 0.0
      %v1480 = vsel %vm1150, %v1046, 0.0
      %v1481 = vsel %vm1151, %v1048, 0.0
      %v1482 = vsel %vm1152, %v1050, 0.0
      %v1483 = vsel %vm1153, %v1052, 0.0
      %v1484 = vsel %vm1154, %v1054, 0.0
      %v1485 = vsel %vm1155, %v1056, 0.0
      %v1486 = vsel %vm1156, %v1058, 0.0
      %v1487 = vsel %vm1157, %v1060, 0.0
      %v1488 = vsel %vm1158, %v1062, 0.0
      %v1489 = vsel %vm1159, %v1064, 0.0
      %v1490 = vsel %vm1160, %v1066, 0.0
      %v1491 = vsel %vm1161, %v1068, 0.0
      %v1492 = vsel %vm1162, %v1070, 0.0
      %v1493 = vsel %vm1163, %v1072, 0.0
      %v1494 = vsel %vm1164, %v1390, 0.0
      %v1495 = vsel %vm1165, %v1392, 0.0
      %v1496 = vsel %vm1166, %v1465, 0.0
      %v1497 = vsel %vm1325, %v1206, 0.0
      %v1498 = vsel %vm1326, %v1208, 0.0
      %v1499 = vsel %vm1327, %v1210, 0.0
      %v1500 = vsel %vm1328, %v1212, 0.0
      %v1501 = vsel %vm1329, %v1214, 0.0
      %v1502 = vsel %vm1330, %v1216, 0.0
      %v1503 = vsel %vm1331, %v1218, 0.0
      %v1504 = vsel %vm1332, %v1220, 0.0
      %v1505 = vsel %vm1333, %v1222, 0.0
      %v1506 = vsel %vm1334, %v1224, 0.0
      %v1507 = vsel %vm1335, %v1226, 0.0
      %v1508 = vsel %vm1336, %v1228, 0.0
      %v1509 = vsel %vm1337, %v1230, 0.0
      %v1510 = vsel %vm1338, %v1232, 0.0
      %v1511 = vsel %vm1339, %v1234, 0.0
      %v1512 = vsel %vm1340, %v1236, 0.0
      %v1513 = vsel %vm1341, %v1238, 0.0
      %v1514 = vsel %vm1342, %v1240, 0.0
      %v1515 = vsel %vm1343, %v1242, 0.0
      %v1516 = vsel %vm1344, %v1244, 0.0
      %v1517 = vsel %vm1345, %v1246, 0.0
      %v1518 = vsel %vm1346, %v1248, 0.0
      %v1519 = vsel %vm1347, %v1250, 0.0
      %v1520 = vsel %vm1348, %v1252, 0.0
      %v1521 = vsel %vm1349, %v1254, 0.0
      %v1522 = vsel %vm1350, %v1256, 0.0
      %v1523 = vsel %vm1351, %v1258, 0.0
      %v1524 = vsel %vm1352, %v1260, 0.0
      %v1525 = vsel %vm1353, %v1428, 0.0
      %v1526 = vsel %vm1354, %v1431, 0.0
      %1528 = vrot.lane.b32.xlu0 0.0, 8
      %v1529 = vpop.permute.xlu0 %1528
      %1530 = vrot.lane.b32.xlu0 %v470, 8
      %v1531 = vpop.permute.xlu0 %1530
      %1532 = vrot.lane.b32.xlu0 %v471, 8
      %v1533 = vpop.permute.xlu0 %1532
      %1534 = vrot.lane.b32.xlu0 %v472, 8
      %v1535 = vpop.permute.xlu0 %1534
      %1536 = vrot.lane.b32.xlu0 %v473, 8
      %v1537 = vpop.permute.xlu0 %1536
      %1538 = vrot.lane.b32.xlu0 %v474, 8
      %v1539 = vpop.permute.xlu0 %1538
      %1540 = vrot.lane.b32.xlu0 %v475, 8
      %v1541 = vpop.permute.xlu0 %1540
      %1542 = vrot.lane.b32.xlu0 %v476, 8
      %v1543 = vpop.permute.xlu0 %1542
      %1544 = vrot.lane.b32.xlu0 %v477, 8
      %v1545 = vpop.permute.xlu0 %1544
      %1546 = vrot.lane.b32.xlu0 %v478, 8
      %v1547 = vpop.permute.xlu0 %1546
      %1548 = vrot.lane.b32.xlu0 %v479, 8
      %v1549 = vpop.permute.xlu0 %1548
      %1550 = vrot.lane.b32.xlu0 %v480, 8
      %v1551 = vpop.permute.xlu0 %1550
      %1552 = vrot.lane.b32.xlu0 %v481, 8
      %v1553 = vpop.permute.xlu0 %1552
      %1554 = vrot.lane.b32.xlu0 %v482, 8
      %v1555 = vpop.permute.xlu0 %1554
      %1556 = vrot.lane.b32.xlu0 %v483, 8
      %v1557 = vpop.permute.xlu0 %1556
      %1558 = vrot.lane.b32.xlu0 %v484, 8
      %v1559 = vpop.permute.xlu0 %1558
      %1560 = vrot.lane.b32.xlu0 %v485, 8
      %v1561 = vpop.permute.xlu0 %1560
      %1562 = vrot.lane.b32.xlu0 %v486, 8
      %v1563 = vpop.permute.xlu0 %1562
      %1564 = vrot.lane.b32.xlu0 %v487, 8
      %v1565 = vpop.permute.xlu0 %1564
      %1566 = vrot.lane.b32.xlu0 %v488, 8
      %v1567 = vpop.permute.xlu0 %1566
      %1568 = vrot.lane.b32.xlu0 %v489, 8
      %v1569 = vpop.permute.xlu0 %1568
      %1570 = vrot.lane.b32.xlu0 %v490, 8
      %v1571 = vpop.permute.xlu0 %1570
      %1572 = vrot.lane.b32.xlu0 %v491, 8
      %v1573 = vpop.permute.xlu0 %1572
      %1574 = vrot.lane.b32.xlu0 %v492, 8
      %v1575 = vpop.permute.xlu0 %1574
      %1576 = vrot.lane.b32.xlu0 %v493, 8
      %v1577 = vpop.permute.xlu0 %1576
      %1578 = vrot.lane.b32.xlu0 %v494, 8
      %v1579 = vpop.permute.xlu0 %1578
      %1580 = vrot.lane.b32.xlu0 %v495, 8
      %v1581 = vpop.permute.xlu0 %1580
      %1582 = vrot.lane.b32.xlu0 %v496, 8
      %v1583 = vpop.permute.xlu0 %1582
      %1584 = vrot.lane.b32.xlu0 %v497, 8
      %v1585 = vpop.permute.xlu0 %1584
      %1586 = vrot.lane.b32.xlu0 %v498, 8
      %v1587 = vpop.permute.xlu0 %1586
      %1588 = vrot.lane.b32.xlu0 %v499, 8
      %v1589 = vpop.permute.xlu0 %1588
      %1652 = vrot.lane.b32.xlu0 0.0, 16
      %v1653 = vpop.permute.xlu0 %1652
      %1654 = vrot.lane.b32.xlu0 %v1357, 16
      %v1655 = vpop.permute.xlu0 %1654
      %1656 = vrot.lane.b32.xlu0 %v1358, 16
      %v1657 = vpop.permute.xlu0 %1656
      %1658 = vrot.lane.b32.xlu0 %v1359, 16
      %v1659 = vpop.permute.xlu0 %1658
      %1660 = vrot.lane.b32.xlu0 %v1360, 16
      %v1661 = vpop.permute.xlu0 %1660
      %1662 = vrot.lane.b32.xlu0 %v1361, 16
      %v1663 = vpop.permute.xlu0 %1662
      %1664 = vrot.lane.b32.xlu0 %v1362, 16
      %v1665 = vpop.permute.xlu0 %1664
      %1666 = vrot.lane.b32.xlu0 %v1363, 16
      %v1667 = vpop.permute.xlu0 %1666
      %1668 = vrot.lane.b32.xlu0 %v1364, 16
      %v1669 = vpop.permute.xlu0 %1668
      %1670 = vrot.lane.b32.xlu0 %v1365, 16
      %v1671 = vpop.permute.xlu0 %1670
      %1672 = vrot.lane.b32.xlu0 %v1366, 16
      %v1673 = vpop.permute.xlu0 %1672
      %1674 = vrot.lane.b32.xlu0 %v1367, 16
      %v1675 = vpop.permute.xlu0 %1674
      %1676 = vrot.lane.b32.xlu0 %v1368, 16
      %v1677 = vpop.permute.xlu0 %1676
      %1678 = vrot.lane.b32.xlu0 %v1369, 16
      %v1679 = vpop.permute.xlu0 %1678
      %1680 = vrot.lane.b32.xlu0 %v1370, 16
      %v1681 = vpop.permute.xlu0 %1680
      %1682 = vrot.lane.b32.xlu0 %v1371, 16
      %v1683 = vpop.permute.xlu0 %1682
      %1684 = vrot.lane.b32.xlu0 %v1372, 16
      %v1685 = vpop.permute.xlu0 %1684
      %1686 = vrot.lane.b32.xlu0 %v1373, 16
      %v1687 = vpop.permute.xlu0 %1686
      %1688 = vrot.lane.b32.xlu0 %v1374, 16
      %v1689 = vpop.permute.xlu0 %1688
      %1690 = vrot.lane.b32.xlu0 %v1375, 16
      %v1691 = vpop.permute.xlu0 %1690
      %1692 = vrot.lane.b32.xlu0 %v1376, 16
      %v1693 = vpop.permute.xlu0 %1692
      %1694 = vrot.lane.b32.xlu0 %v1377, 16
      %v1695 = vpop.permute.xlu0 %1694
      %1696 = vrot.lane.b32.xlu0 %v1378, 16
      %v1697 = vpop.permute.xlu0 %1696
      %1698 = vrot.lane.b32.xlu0 %v1379, 16
      %v1699 = vpop.permute.xlu0 %1698
      %1700 = vrot.lane.b32.xlu0 %v1380, 16
      %v1701 = vpop.permute.xlu0 %1700
      %1702 = vrot.lane.b32.xlu0 %v1381, 16
      %v1703 = vpop.permute.xlu0 %1702
      %1704 = vrot.lane.b32.xlu0 %v1382, 16
      %v1705 = vpop.permute.xlu0 %1704
      %1706 = vrot.lane.b32.xlu0 %v1383, 16
      %v1707 = vpop.permute.xlu0 %1706
      %1708 = vrot.lane.b32.xlu0 %v1384, 16
      %v1709 = vpop.permute.xlu0 %1708
      %1710 = vrot.lane.b32.xlu0 %v1385, 16
      %v1711 = vpop.permute.xlu0 %1710
      %1712 = vrot.lane.b32.xlu0 %v1386, 16
      %v1713 = vpop.permute.xlu0 %1712
      %1714 = vrot.lane.b32.xlu0 %v1387, 16
      %v1715 = vpop.permute.xlu0 %1714
      %1780 = vrot.lane.b32.xlu0 %v1395, 24
      %v1781 = vpop.permute.xlu0 %1780
      %1782 = vrot.lane.b32.xlu0 %v1396, 24
      %v1783 = vpop.permute.xlu0 %1782
      %1784 = vrot.lane.b32.xlu0 %v1397, 24
      %v1785 = vpop.permute.xlu0 %1784
      %1786 = vrot.lane.b32.xlu0 %v1398, 24
      %v1787 = vpop.permute.xlu0 %1786
      %1788 = vrot.lane.b32.xlu0 %v1399, 24
      %v1789 = vpop.permute.xlu0 %1788
      %1790 = vrot.lane.b32.xlu0 %v1400, 24
      %v1791 = vpop.permute.xlu0 %1790
      %1792 = vrot.lane.b32.xlu0 %v1401, 24
      %v1793 = vpop.permute.xlu0 %1792
      %1794 = vrot.lane.b32.xlu0 %v1402, 24
      %v1795 = vpop.permute.xlu0 %1794
      %1796 = vrot.lane.b32.xlu0 %v1403, 24
      %v1797 = vpop.permute.xlu0 %1796
      %1798 = vrot.lane.b32.xlu0 %v1404, 24
      %v1799 = vpop.permute.xlu0 %1798
      %1800 = vrot.lane.b32.xlu0 %v1405, 24
      %v1801 = vpop.permute.xlu0 %1800
      %1802 = vrot.lane.b32.xlu0 %v1406, 24
      %v1803 = vpop.permute.xlu0 %1802
      %1804 = vrot.lane.b32.xlu0 %v1407, 24
      %v1805 = vpop.permute.xlu0 %1804
      %1806 = vrot.lane.b32.xlu0 %v1408, 24
      %v1807 = vpop.permute.xlu0 %1806
      %1808 = vrot.lane.b32.xlu0 %v1409, 24
      %v1809 = vpop.permute.xlu0 %1808
      %1810 = vrot.lane.b32.xlu0 %v1410, 24
      %v1811 = vpop.permute.xlu0 %1810
      %1812 = vrot.lane.b32.xlu0 %v1411, 24
      %v1813 = vpop.permute.xlu0 %1812
      %1814 = vrot.lane.b32.xlu0 %v1412, 24
      %v1815 = vpop.permute.xlu0 %1814
      %1816 = vrot.lane.b32.xlu0 %v1413, 24
      %v1817 = vpop.permute.xlu0 %1816
      %1818 = vrot.lane.b32.xlu0 %v1414, 24
      %v1819 = vpop.permute.xlu0 %1818
      %1820 = vrot.lane.b32.xlu0 %v1415, 24
      %v1821 = vpop.permute.xlu0 %1820
      %1822 = vrot.lane.b32.xlu0 %v1416, 24
      %v1823 = vpop.permute.xlu0 %1822
      %1824 = vrot.lane.b32.xlu0 %v1417, 24
      %v1825 = vpop.permute.xlu0 %1824
      %1826 = vrot.lane.b32.xlu0 %v1418, 24
      %v1827 = vpop.permute.xlu0 %1826
      %1828 = vrot.lane.b32.xlu0 %v1419, 24
      %v1829 = vpop.permute.xlu0 %1828
      %1830 = vrot.lane.b32.xlu0 %v1420, 24
      %v1831 = vpop.permute.xlu0 %1830
      %1832 = vrot.lane.b32.xlu0 %v1421, 24
      %v1833 = vpop.permute.xlu0 %1832
      %1834 = vrot.lane.b32.xlu0 %v1422, 24
      %v1835 = vpop.permute.xlu0 %1834
      %1836 = vrot.lane.b32.xlu0 %v1423, 24
      %v1837 = vpop.permute.xlu0 %1836
      %1838 = vrot.lane.b32.xlu0 %v1424, 24
      %v1839 = vpop.permute.xlu0 %1838
      %1840 = vrot.lane.b32.xlu0 %v1425, 24
      %v1841 = vpop.permute.xlu0 %1840
      %1842 = vrot.lane.b32.xlu0 %v1426, 24
      %v1843 = vpop.permute.xlu0 %1842
      %1876 = vrot.lane.b32.xlu0 %v470, 32
      %v1877 = vpop.permute.xlu0 %1876
      %1878 = vrot.lane.b32.xlu0 %v471, 32
      %v1879 = vpop.permute.xlu0 %1878
      %1880 = vrot.lane.b32.xlu0 %v472, 32
      %v1881 = vpop.permute.xlu0 %1880
      %1882 = vrot.lane.b32.xlu0 %v473, 32
      %v1883 = vpop.permute.xlu0 %1882
      %1884 = vrot.lane.b32.xlu0 %v474, 32
      %v1885 = vpop.permute.xlu0 %1884
      %1886 = vrot.lane.b32.xlu0 %v475, 32
      %v1887 = vpop.permute.xlu0 %1886
      %1888 = vrot.lane.b32.xlu0 %v476, 32
      %v1889 = vpop.permute.xlu0 %1888
      %1890 = vrot.lane.b32.xlu0 %v477, 32
      %v1891 = vpop.permute.xlu0 %1890
      %1892 = vrot.lane.b32.xlu0 %v478, 32
      %v1893 = vpop.permute.xlu0 %1892
      %1894 = vrot.lane.b32.xlu0 %v479, 32
      %v1895 = vpop.permute.xlu0 %1894
      %1896 = vrot.lane.b32.xlu0 %v480, 32
      %v1897 = vpop.permute.xlu0 %1896
      %1898 = vrot.lane.b32.xlu0 %v481, 32
      %v1899 = vpop.permute.xlu0 %1898
      %1900 = vrot.lane.b32.xlu0 %v482, 32
      %v1901 = vpop.permute.xlu0 %1900
      %1902 = vrot.lane.b32.xlu0 %v483, 32
      %v1903 = vpop.permute.xlu0 %1902
      %1904 = vrot.lane.b32.xlu0 %v484, 32
      %v1905 = vpop.permute.xlu0 %1904
      %1906 = vrot.lane.b32.xlu0 %v485, 32
      %v1907 = vpop.permute.xlu0 %1906
      %1908 = vrot.lane.b32.xlu0 %v486, 32
      %v1909 = vpop.permute.xlu0 %1908
      %1910 = vrot.lane.b32.xlu0 %v487, 32
      %v1911 = vpop.permute.xlu0 %1910
      %1912 = vrot.lane.b32.xlu0 %v488, 32
      %v1913 = vpop.permute.xlu0 %1912
      %1914 = vrot.lane.b32.xlu0 %v489, 32
      %v1915 = vpop.permute.xlu0 %1914
      %1916 = vrot.lane.b32.xlu0 %v490, 32
      %v1917 = vpop.permute.xlu0 %1916
      %1918 = vrot.lane.b32.xlu0 %v491, 32
      %v1919 = vpop.permute.xlu0 %1918
      %1920 = vrot.lane.b32.xlu0 %v492, 32
      %v1921 = vpop.permute.xlu0 %1920
      %1922 = vrot.lane.b32.xlu0 %v493, 32
      %v1923 = vpop.permute.xlu0 %1922
      %1924 = vrot.lane.b32.xlu0 %v494, 32
      %v1925 = vpop.permute.xlu0 %1924
      %1926 = vrot.lane.b32.xlu0 %v495, 32
      %v1927 = vpop.permute.xlu0 %1926
      %1928 = vrot.lane.b32.xlu0 %v496, 32
      %v1929 = vpop.permute.xlu0 %1928
      %1930 = vrot.lane.b32.xlu0 %v497, 32
      %v1931 = vpop.permute.xlu0 %1930
      %1932 = vrot.lane.b32.xlu0 %v498, 32
      %v1933 = vpop.permute.xlu0 %1932
      %1934 = vrot.lane.b32.xlu0 %v499, 32
      %v1935 = vpop.permute.xlu0 %1934
      %1936 = vrot.lane.b32.xlu0 %v500, 32
      %v1937 = vpop.permute.xlu0 %1936
      %1938 = vrot.lane.b32.xlu0 %v501, 32
      %v1939 = vpop.permute.xlu0 %1938
      %2004 = vrot.lane.b32.xlu0 %v1432, 40
      %v2005 = vpop.permute.xlu0 %2004
      %2006 = vrot.lane.b32.xlu0 %v1433, 40
      %v2007 = vpop.permute.xlu0 %2006
      %2008 = vrot.lane.b32.xlu0 %v1434, 40
      %v2009 = vpop.permute.xlu0 %2008
      %2010 = vrot.lane.b32.xlu0 %v1435, 40
      %v2011 = vpop.permute.xlu0 %2010
      %2012 = vrot.lane.b32.xlu0 %v1436, 40
      %v2013 = vpop.permute.xlu0 %2012
      %2014 = vrot.lane.b32.xlu0 %v1437, 40
      %v2015 = vpop.permute.xlu0 %2014
      %2016 = vrot.lane.b32.xlu0 %v1438, 40
      %v2017 = vpop.permute.xlu0 %2016
      %2018 = vrot.lane.b32.xlu0 %v1439, 40
      %v2019 = vpop.permute.xlu0 %2018
      %2020 = vrot.lane.b32.xlu0 %v1440, 40
      %v2021 = vpop.permute.xlu0 %2020
      %2022 = vrot.lane.b32.xlu0 %v1441, 40
      %v2023 = vpop.permute.xlu0 %2022
      %2024 = vrot.lane.b32.xlu0 %v1442, 40
      %v2025 = vpop.permute.xlu0 %2024
      %2026 = vrot.lane.b32.xlu0 %v1443, 40
      %v2027 = vpop.permute.xlu0 %2026
      %2028 = vrot.lane.b32.xlu0 %v1444, 40
      %v2029 = vpop.permute.xlu0 %2028
      %2030 = vrot.lane.b32.xlu0 %v1445, 40
      %v2031 = vpop.permute.xlu0 %2030
      %2032 = vrot.lane.b32.xlu0 %v1446, 40
      %v2033 = vpop.permute.xlu0 %2032
      %2034 = vrot.lane.b32.xlu0 %v1447, 40
      %v2035 = vpop.permute.xlu0 %2034
      %2036 = vrot.lane.b32.xlu0 %v1448, 40
      %v2037 = vpop.permute.xlu0 %2036
      %2038 = vrot.lane.b32.xlu0 %v1449, 40
      %v2039 = vpop.permute.xlu0 %2038
      %2040 = vrot.lane.b32.xlu0 %v1450, 40
      %v2041 = vpop.permute.xlu0 %2040
      %2042 = vrot.lane.b32.xlu0 %v1451, 40
      %v2043 = vpop.permute.xlu0 %2042
      %2044 = vrot.lane.b32.xlu0 %v1452, 40
      %v2045 = vpop.permute.xlu0 %2044
      %2046 = vrot.lane.b32.xlu0 %v1453, 40
      %v2047 = vpop.permute.xlu0 %2046
      %2048 = vrot.lane.b32.xlu0 %v1454, 40
      %v2049 = vpop.permute.xlu0 %2048
      %2050 = vrot.lane.b32.xlu0 %v1455, 40
      %v2051 = vpop.permute.xlu0 %2050
      %2052 = vrot.lane.b32.xlu0 %v1456, 40
      %v2053 = vpop.permute.xlu0 %2052
      %2054 = vrot.lane.b32.xlu0 %v1457, 40
      %v2055 = vpop.permute.xlu0 %2054
      %2056 = vrot.lane.b32.xlu0 %v1458, 40
      %v2057 = vpop.permute.xlu0 %2056
      %2058 = vrot.lane.b32.xlu0 %v1459, 40
      %v2059 = vpop.permute.xlu0 %2058
      %2060 = vrot.lane.b32.xlu0 %v1460, 40
      %v2061 = vpop.permute.xlu0 %2060
      %2062 = vrot.lane.b32.xlu0 %v1461, 40
      %v2063 = vpop.permute.xlu0 %2062
      %2064 = vrot.lane.b32.xlu0 %v1462, 40
      %v2065 = vpop.permute.xlu0 %2064
      %2066 = vrot.lane.b32.xlu0 %v1463, 40
      %v2067 = vpop.permute.xlu0 %2066
      %2131 = vrot.lane.b32.xlu0 %v1466, 48
      %v2132 = vpop.permute.xlu0 %2131
      %2133 = vrot.lane.b32.xlu0 %v1467, 48
      %v2134 = vpop.permute.xlu0 %2133
      %2135 = vrot.lane.b32.xlu0 %v1468, 48
      %v2136 = vpop.permute.xlu0 %2135
      %2137 = vrot.lane.b32.xlu0 %v1469, 48
      %v2138 = vpop.permute.xlu0 %2137
      %2139 = vrot.lane.b32.xlu0 %v1470, 48
      %v2140 = vpop.permute.xlu0 %2139
      %2141 = vrot.lane.b32.xlu0 %v1471, 48
      %v2142 = vpop.permute.xlu0 %2141
      %2143 = vrot.lane.b32.xlu0 %v1472, 48
      %v2144 = vpop.permute.xlu0 %2143
      %2145 = vrot.lane.b32.xlu0 %v1473, 48
      %v2146 = vpop.permute.xlu0 %2145
      %2147 = vrot.lane.b32.xlu0 %v1474, 48
      %v2148 = vpop.permute.xlu0 %2147
      %2149 = vrot.lane.b32.xlu0 %v1475, 48
      %v2150 = vpop.permute.xlu0 %2149
      %2151 = vrot.lane.b32.xlu0 %v1476, 48
      %v2152 = vpop.permute.xlu0 %2151
      %2153 = vrot.lane.b32.xlu0 %v1477, 48
      %v2154 = vpop.permute.xlu0 %2153
      %2155 = vrot.lane.b32.xlu0 %v1478, 48
      %v2156 = vpop.permute.xlu0 %2155
      %2157 = vrot.lane.b32.xlu0 %v1479, 48
      %v2158 = vpop.permute.xlu0 %2157
      %2159 = vrot.lane.b32.xlu0 %v1480, 48
      %v2160 = vpop.permute.xlu0 %2159
      %2161 = vrot.lane.b32.xlu0 %v1481, 48
      %v2162 = vpop.permute.xlu0 %2161
      %2163 = vrot.lane.b32.xlu0 %v1482, 48
      %v2164 = vpop.permute.xlu0 %2163
      %2165 = vrot.lane.b32.xlu0 %v1483, 48
      %v2166 = vpop.permute.xlu0 %2165
      %2167 = vrot.lane.b32.xlu0 %v1484, 48
      %v2168 = vpop.permute.xlu0 %2167
      %2169 = vrot.lane.b32.xlu0 %v1485, 48
      %v2170 = vpop.permute.xlu0 %2169
      %2171 = vrot.lane.b32.xlu0 %v1486, 48
      %v2172 = vpop.permute.xlu0 %2171
      %2173 = vrot.lane.b32.xlu0 %v1487, 48
      %v2174 = vpop.permute.xlu0 %2173
      %2175 = vrot.lane.b32.xlu0 %v1488, 48
      %v2176 = vpop.permute.xlu0 %2175
      %2177 = vrot.lane.b32.xlu0 %v1489, 48
      %v2178 = vpop.permute.xlu0 %2177
      %2179 = vrot.lane.b32.xlu0 %v1490, 48
      %v2180 = vpop.permute.xlu0 %2179
      %2181 = vrot.lane.b32.xlu0 %v1491, 48
      %v2182 = vpop.permute.xlu0 %2181
      %2183 = vrot.lane.b32.xlu0 %v1492, 48
      %v2184 = vpop.permute.xlu0 %2183
      %2185 = vrot.lane.b32.xlu0 %v1493, 48
      %v2186 = vpop.permute.xlu0 %2185
      %2187 = vrot.lane.b32.xlu0 %v1494, 48
      %v2188 = vpop.permute.xlu0 %2187
      %2189 = vrot.lane.b32.xlu0 %v1495, 48
      %v2190 = vpop.permute.xlu0 %2189
      %2191 = vrot.lane.b32.xlu0 %v1496, 48
      %v2192 = vpop.permute.xlu0 %2191
      %2193 = vrot.lane.b32.xlu0 0.0, 48
      %v2194 = vpop.permute.xlu0 %2193
      %2227 = vrot.lane.b32.xlu0 %v472, 56
      %v2228 = vpop.permute.xlu0 %2227
      %2229 = vrot.lane.b32.xlu0 %v473, 56
      %v2230 = vpop.permute.xlu0 %2229
      %2231 = vrot.lane.b32.xlu0 %v474, 56
      %v2232 = vpop.permute.xlu0 %2231
      %2233 = vrot.lane.b32.xlu0 %v475, 56
      %v2234 = vpop.permute.xlu0 %2233
      %2235 = vrot.lane.b32.xlu0 %v476, 56
      %v2236 = vpop.permute.xlu0 %2235
      %2237 = vrot.lane.b32.xlu0 %v477, 56
      %v2238 = vpop.permute.xlu0 %2237
      %2239 = vrot.lane.b32.xlu0 %v478, 56
      %v2240 = vpop.permute.xlu0 %2239
      %2241 = vrot.lane.b32.xlu0 %v479, 56
      %v2242 = vpop.permute.xlu0 %2241
      %2243 = vrot.lane.b32.xlu0 %v480, 56
      %v2244 = vpop.permute.xlu0 %2243
      %2245 = vrot.lane.b32.xlu0 %v481, 56
      %v2246 = vpop.permute.xlu0 %2245
      %2247 = vrot.lane.b32.xlu0 %v482, 56
      %v2248 = vpop.permute.xlu0 %2247
      %2249 = vrot.lane.b32.xlu0 %v483, 56
      %v2250 = vpop.permute.xlu0 %2249
      %2251 = vrot.lane.b32.xlu0 %v484, 56
      %v2252 = vpop.permute.xlu0 %2251
      %2253 = vrot.lane.b32.xlu0 %v485, 56
      %v2254 = vpop.permute.xlu0 %2253
      %2255 = vrot.lane.b32.xlu0 %v486, 56
      %v2256 = vpop.permute.xlu0 %2255
      %2257 = vrot.lane.b32.xlu0 %v487, 56
      %v2258 = vpop.permute.xlu0 %2257
      %2259 = vrot.lane.b32.xlu0 %v488, 56
      %v2260 = vpop.permute.xlu0 %2259
      %2261 = vrot.lane.b32.xlu0 %v489, 56
      %v2262 = vpop.permute.xlu0 %2261
      %2263 = vrot.lane.b32.xlu0 %v490, 56
      %v2264 = vpop.permute.xlu0 %2263
      %2265 = vrot.lane.b32.xlu0 %v491, 56
      %v2266 = vpop.permute.xlu0 %2265
      %2267 = vrot.lane.b32.xlu0 %v492, 56
      %v2268 = vpop.permute.xlu0 %2267
      %2269 = vrot.lane.b32.xlu0 %v493, 56
      %v2270 = vpop.permute.xlu0 %2269
      %2271 = vrot.lane.b32.xlu0 %v494, 56
      %v2272 = vpop.permute.xlu0 %2271
      %2273 = vrot.lane.b32.xlu0 %v495, 56
      %v2274 = vpop.permute.xlu0 %2273
      %2275 = vrot.lane.b32.xlu0 %v496, 56
      %v2276 = vpop.permute.xlu0 %2275
      %2277 = vrot.lane.b32.xlu0 %v497, 56
      %v2278 = vpop.permute.xlu0 %2277
      %2279 = vrot.lane.b32.xlu0 %v498, 56
      %v2280 = vpop.permute.xlu0 %2279
      %2281 = vrot.lane.b32.xlu0 %v499, 56
      %v2282 = vpop.permute.xlu0 %2281
      %2283 = vrot.lane.b32.xlu0 %v500, 56
      %v2284 = vpop.permute.xlu0 %2283
      %2285 = vrot.lane.b32.xlu0 %v501, 56
      %v2286 = vpop.permute.xlu0 %2285
      %2287 = vrot.lane.b32.xlu0 0.0, 56
      %v2288 = vpop.permute.xlu0 %2287
      %2350 = vrot.lane.b32.xlu0 %v1497, 64
      %v2351 = vpop.permute.xlu0 %2350
      %2352 = vrot.lane.b32.xlu0 %v1498, 64
      %v2353 = vpop.permute.xlu0 %2352
      %2354 = vrot.lane.b32.xlu0 %v1499, 64
      %v2355 = vpop.permute.xlu0 %2354
      %2356 = vrot.lane.b32.xlu0 %v1500, 64
      %v2357 = vpop.permute.xlu0 %2356
      %2358 = vrot.lane.b32.xlu0 %v1501, 64
      %v2359 = vpop.permute.xlu0 %2358
      %2360 = vrot.lane.b32.xlu0 %v1502, 64
      %v2361 = vpop.permute.xlu0 %2360
      %2362 = vrot.lane.b32.xlu0 %v1503, 64
      %v2363 = vpop.permute.xlu0 %2362
      %2364 = vrot.lane.b32.xlu0 %v1504, 64
      %v2365 = vpop.permute.xlu0 %2364
      %2366 = vrot.lane.b32.xlu0 %v1505, 64
      %v2367 = vpop.permute.xlu0 %2366
      %2368 = vrot.lane.b32.xlu0 %v1506, 64
      %v2369 = vpop.permute.xlu0 %2368
      %2370 = vrot.lane.b32.xlu0 %v1507, 64
      %v2371 = vpop.permute.xlu0 %2370
      %2372 = vrot.lane.b32.xlu0 %v1508, 64
      %v2373 = vpop.permute.xlu0 %2372
      %2374 = vrot.lane.b32.xlu0 %v1509, 64
      %v2375 = vpop.permute.xlu0 %2374
      %2376 = vrot.lane.b32.xlu0 %v1510, 64
      %v2377 = vpop.permute.xlu0 %2376
      %2378 = vrot.lane.b32.xlu0 %v1511, 64
      %v2379 = vpop.permute.xlu0 %2378
      %2380 = vrot.lane.b32.xlu0 %v1512, 64
      %v2381 = vpop.permute.xlu0 %2380
      %2382 = vrot.lane.b32.xlu0 %v1513, 64
      %v2383 = vpop.permute.xlu0 %2382
      %2384 = vrot.lane.b32.xlu0 %v1514, 64
      %v2385 = vpop.permute.xlu0 %2384
      %2386 = vrot.lane.b32.xlu0 %v1515, 64
      %v2387 = vpop.permute.xlu0 %2386
      %2388 = vrot.lane.b32.xlu0 %v1516, 64
      %v2389 = vpop.permute.xlu0 %2388
      %2390 = vrot.lane.b32.xlu0 %v1517, 64
      %v2391 = vpop.permute.xlu0 %2390
      %2392 = vrot.lane.b32.xlu0 %v1518, 64
      %v2393 = vpop.permute.xlu0 %2392
      %2394 = vrot.lane.b32.xlu0 %v1519, 64
      %v2395 = vpop.permute.xlu0 %2394
      %2396 = vrot.lane.b32.xlu0 %v1520, 64
      %v2397 = vpop.permute.xlu0 %2396
      %2398 = vrot.lane.b32.xlu0 %v1521, 64
      %v2399 = vpop.permute.xlu0 %2398
      %2400 = vrot.lane.b32.xlu0 %v1522, 64
      %v2401 = vpop.permute.xlu0 %2400
      %2402 = vrot.lane.b32.xlu0 %v1523, 64
      %v2403 = vpop.permute.xlu0 %2402
      %2404 = vrot.lane.b32.xlu0 %v1524, 64
      %v2405 = vpop.permute.xlu0 %2404
      %2406 = vrot.lane.b32.xlu0 %v1525, 64
      %v2407 = vpop.permute.xlu0 %2406
      %2408 = vrot.lane.b32.xlu0 %v1526, 64
      %v2409 = vpop.permute.xlu0 %2408
      %2410 = vrot.lane.b32.xlu0 0.0, 64
      %v2411 = vpop.permute.xlu0 %2410
      %vm2443 = vcmask 64512
      %v2444 = vsel %vm2443, 0.0, %v1529
      %v2445 = vsel %vm2443, %v1168, %v1531
      %v2446 = vsel %vm2443, %v1169, %v1533
      %v2447 = vsel %vm2443, %v1170, %v1535
      %v2448 = vsel %vm2443, %v1171, %v1537
      %v2449 = vsel %vm2443, %v1172, %v1539
      %v2450 = vsel %vm2443, %v1173, %v1541
      %v2451 = vsel %vm2443, %v1174, %v1543
      %v2452 = vsel %vm2443, %v1175, %v1545
      %v2453 = vsel %vm2443, %v1176, %v1547
      %v2454 = vsel %vm2443, %v1177, %v1549
      %v2455 = vsel %vm2443, %v1178, %v1551
      %v2456 = vsel %vm2443, %v1179, %v1553
      %v2457 = vsel %vm2443, %v1180, %v1555
      %v2458 = vsel %vm2443, %v1181, %v1557
      %v2459 = vsel %vm2443, %v1182, %v1559
      %v2460 = vsel %vm2443, %v1183, %v1561
      %v2461 = vsel %vm2443, %v1184, %v1563
      %v2462 = vsel %vm2443, %v1185, %v1565
      %v2463 = vsel %vm2443, %v1186, %v1567
      %v2464 = vsel %vm2443, %v1187, %v1569
      %v2465 = vsel %vm2443, %v1188, %v1571
      %v2466 = vsel %vm2443, %v1189, %v1573
      %v2467 = vsel %vm2443, %v1190, %v1575
      %v2468 = vsel %vm2443, %v1191, %v1577
      %v2469 = vsel %vm2443, %v1192, %v1579
      %v2470 = vsel %vm2443, %v1193, %v1581
      %v2471 = vsel %vm2443, %v1194, %v1583
      %v2472 = vsel %vm2443, %v1195, %v1585
      %v2473 = vsel %vm2443, %v1196, %v1587
      %v2474 = vsel %vm2443, %v1197, %v1589
      %vm2475 = vcmask 130048
      %v2476 = vsel %vm2475, %v2444, %v1653
      %v2477 = vsel %vm2475, %v2444, %v1655
      %v2478 = vsel %vm2475, %v2445, %v1657
      %v2479 = vsel %vm2475, %v2446, %v1659
      %v2480 = vsel %vm2475, %v2447, %v1661
      %v2481 = vsel %vm2475, %v2448, %v1663
      %v2482 = vsel %vm2475, %v2449, %v1665
      %v2483 = vsel %vm2475, %v2450, %v1667
      %v2484 = vsel %vm2475, %v2451, %v1669
      %v2485 = vsel %vm2475, %v2452, %v1671
      %v2486 = vsel %vm2475, %v2453, %v1673
      %v2487 = vsel %vm2475, %v2454, %v1675
      %v2488 = vsel %vm2475, %v2455, %v1677
      %v2489 = vsel %vm2475, %v2456, %v1679
      %v2490 = vsel %vm2475, %v2457, %v1681
      %v2491 = vsel %vm2475, %v2458, %v1683
      %v2492 = vsel %vm2475, %v2459, %v1685
      %v2493 = vsel %vm2475, %v2460, %v1687
      %v2494 = vsel %vm2475, %v2461, %v1689
      %v2495 = vsel %vm2475, %v2462, %v1691
      %v2496 = vsel %vm2475, %v2463, %v1693
      %v2497 = vsel %vm2475, %v2464, %v1695
      %v2498 = vsel %vm2475, %v2465, %v1697
      %v2499 = vsel %vm2475, %v2466, %v1699
      %v2500 = vsel %vm2475, %v2467, %v1701
      %v2501 = vsel %vm2475, %v2468, %v1703
      %v2502 = vsel %vm2475, %v2469, %v1705
      %v2503 = vsel %vm2475, %v2470, %v1707
      %v2504 = vsel %vm2475, %v2471, %v1709
      %v2505 = vsel %vm2475, %v2472, %v1711
      %v2506 = vsel %vm2475, %v2473, %v1713
      %v2507 = vsel %vm2475, %v2474, %v1715
      %vm2508 = vcmask 195584
      %v2509 = vsel %vm2508, %v2476, %v1781
      %v2510 = vsel %vm2508, %v2477, %v1783
      %v2511 = vsel %vm2508, %v2478, %v1785
      %v2512 = vsel %vm2508, %v2479, %v1787
      %v2513 = vsel %vm2508, %v2480, %v1789
      %v2514 = vsel %vm2508, %v2481, %v1791
      %v2515 = vsel %vm2508, %v2482, %v1793
      %v2516 = vsel %vm2508, %v2483, %v1795
      %v2517 = vsel %vm2508, %v2484, %v1797
      %v2518 = vsel %vm2508, %v2485, %v1799
      %v2519 = vsel %vm2508, %v2486, %v1801
      %v2520 = vsel %vm2508, %v2487, %v1803
      %v2521 = vsel %vm2508, %v2488, %v1805
      %v2522 = vsel %vm2508, %v2489, %v1807
      %v2523 = vsel %vm2508, %v2490, %v1809
      %v2524 = vsel %vm2508, %v2491, %v1811
      %v2525 = vsel %vm2508, %v2492, %v1813
      %v2526 = vsel %vm2508, %v2493, %v1815
      %v2527 = vsel %vm2508, %v2494, %v1817
      %v2528 = vsel %vm2508, %v2495, %v1819
      %v2529 = vsel %vm2508, %v2496, %v1821
      %v2530 = vsel %vm2508, %v2497, %v1823
      %v2531 = vsel %vm2508, %v2498, %v1825
      %v2532 = vsel %vm2508, %v2499, %v1827
      %v2533 = vsel %vm2508, %v2500, %v1829
      %v2534 = vsel %vm2508, %v2501, %v1831
      %v2535 = vsel %vm2508, %v2502, %v1833
      %v2536 = vsel %vm2508, %v2503, %v1835
      %v2537 = vsel %vm2508, %v2504, %v1837
      %v2538 = vsel %vm2508, %v2505, %v1839
      %v2539 = vsel %vm2508, %v2506, %v1841
      %v2540 = vsel %vm2508, %v2507, %v1843
      %vm2541 = vcmask 261120
      %v2542 = vsel %vm2541, %v2509, %v1877
      %v2543 = vsel %vm2541, %v2510, %v1879
      %v2544 = vsel %vm2541, %v2511, %v1881
      %v2545 = vsel %vm2541, %v2512, %v1883
      %v2546 = vsel %vm2541, %v2513, %v1885
      %v2547 = vsel %vm2541, %v2514, %v1887
      %v2548 = vsel %vm2541, %v2515, %v1889
      %v2549 = vsel %vm2541, %v2516, %v1891
      %v2550 = vsel %vm2541, %v2517, %v1893
      %v2551 = vsel %vm2541, %v2518, %v1895
      %v2552 = vsel %vm2541, %v2519, %v1897
      %v2553 = vsel %vm2541, %v2520, %v1899
      %v2554 = vsel %vm2541, %v2521, %v1901
      %v2555 = vsel %vm2541, %v2522, %v1903
      %v2556 = vsel %vm2541, %v2523, %v1905
      %v2557 = vsel %vm2541, %v2524, %v1907
      %v2558 = vsel %vm2541, %v2525, %v1909
      %v2559 = vsel %vm2541, %v2526, %v1911
      %v2560 = vsel %vm2541, %v2527, %v1913
      %v2561 = vsel %vm2541, %v2528, %v1915
      %v2562 = vsel %vm2541, %v2529, %v1917
      %v2563 = vsel %vm2541, %v2530, %v1919
      %v2564 = vsel %vm2541, %v2531, %v1921
      %v2565 = vsel %vm2541, %v2532, %v1923
      %v2566 = vsel %vm2541, %v2533, %v1925
      %v2567 = vsel %vm2541, %v2534, %v1927
      %v2568 = vsel %vm2541, %v2535, %v1929
      %v2569 = vsel %vm2541, %v2536, %v1931
      %v2570 = vsel %vm2541, %v2537, %v1933
      %v2571 = vsel %vm2541, %v2538, %v1935
      %v2572 = vsel %vm2541, %v2539, %v1937
      %v2573 = vsel %vm2541, %v2540, %v1939
      %vm2574 = vcmask 326656
      %v2575 = vsel %vm2574, %v2542, %v2005
      %v2576 = vsel %vm2574, %v2543, %v2007
      %v2577 = vsel %vm2574, %v2544, %v2009
      %v2578 = vsel %vm2574, %v2545, %v2011
      %v2579 = vsel %vm2574, %v2546, %v2013
      %v2580 = vsel %vm2574, %v2547, %v2015
      %v2581 = vsel %vm2574, %v2548, %v2017
      %v2582 = vsel %vm2574, %v2549, %v2019
      %v2583 = vsel %vm2574, %v2550, %v2021
      %v2584 = vsel %vm2574, %v2551, %v2023
      %v2585 = vsel %vm2574, %v2552, %v2025
      %v2586 = vsel %vm2574, %v2553, %v2027
      %v2587 = vsel %vm2574, %v2554, %v2029
      %v2588 = vsel %vm2574, %v2555, %v2031
      %v2589 = vsel %vm2574, %v2556, %v2033
      %v2590 = vsel %vm2574, %v2557, %v2035
      %v2591 = vsel %vm2574, %v2558, %v2037
      %v2592 = vsel %vm2574, %v2559, %v2039
      %v2593 = vsel %vm2574, %v2560, %v2041
      %v2594 = vsel %vm2574, %v2561, %v2043
      %v2595 = vsel %vm2574, %v2562, %v2045
      %v2596 = vsel %vm2574, %v2563, %v2047
      %v2597 = vsel %vm2574, %v2564, %v2049
      %v2598 = vsel %vm2574, %v2565, %v2051
      %v2599 = vsel %vm2574, %v2566, %v2053
      %v2600 = vsel %vm2574, %v2567, %v2055
      %v2601 = vsel %vm2574, %v2568, %v2057
      %v2602 = vsel %vm2574, %v2569, %v2059
      %v2603 = vsel %vm2574, %v2570, %v2061
      %v2604 = vsel %vm2574, %v2571, %v2063
      %v2605 = vsel %vm2574, %v2572, %v2065
      %v2606 = vsel %vm2574, %v2573, %v2067
      %vm2607 = vcmask 392192
      %v2608 = vsel %vm2607, %v2575, %v2132
      %v2609 = vsel %vm2607, %v2576, %v2134
      %v2610 = vsel %vm2607, %v2577, %v2136
      %v2611 = vsel %vm2607, %v2578, %v2138
      %v2612 = vsel %vm2607, %v2579, %v2140
      %v2613 = vsel %vm2607, %v2580, %v2142
      %v2614 = vsel %vm2607, %v2581, %v2144
      %v2615 = vsel %vm2607, %v2582, %v2146
      %v2616 = vsel %vm2607, %v2583, %v2148
      %v2617 = vsel %vm2607, %v2584, %v2150
      %v2618 = vsel %vm2607, %v2585, %v2152
      %v2619 = vsel %vm2607, %v2586, %v2154
      %v2620 = vsel %vm2607, %v2587, %v2156
      %v2621 = vsel %vm2607, %v2588, %v2158
      %v2622 = vsel %vm2607, %v2589, %v2160
      %v2623 = vsel %vm2607, %v2590, %v2162
      %v2624 = vsel %vm2607, %v2591, %v2164
      %v2625 = vsel %vm2607, %v2592, %v2166
      %v2626 = vsel %vm2607, %v2593, %v2168
      %v2627 = vsel %vm2607, %v2594, %v2170
      %v2628 = vsel %vm2607, %v2595, %v2172
      %v2629 = vsel %vm2607, %v2596, %v2174
      %v2630 = vsel %vm2607, %v2597, %v2176
      %v2631 = vsel %vm2607, %v2598, %v2178
      %v2632 = vsel %vm2607, %v2599, %v2180
      %v2633 = vsel %vm2607, %v2600, %v2182
      %v2634 = vsel %vm2607, %v2601, %v2184
      %v2635 = vsel %vm2607, %v2602, %v2186
      %v2636 = vsel %vm2607, %v2603, %v2188
      %v2637 = vsel %vm2607, %v2604, %v2190
      %v2638 = vsel %vm2607, %v2605, %v2192
      %v2639 = vsel %vm2607, %v2606, %v2194
      %vm2640 = vcmask 457728
      %v2641 = vsel %vm2640, %v2608, %v2228
      %v2642 = vsel %vm2640, %v2609, %v2230
      %v2643 = vsel %vm2640, %v2610, %v2232
      %v2644 = vsel %vm2640, %v2611, %v2234
      %v2645 = vsel %vm2640, %v2612, %v2236
      %v2646 = vsel %vm2640, %v2613, %v2238
      %v2647 = vsel %vm2640, %v2614, %v2240
      %v2648 = vsel %vm2640, %v2615, %v2242
      %v2649 = vsel %vm2640, %v2616, %v2244
      %v2650 = vsel %vm2640, %v2617, %v2246
      %v2651 = vsel %vm2640, %v2618, %v2248
      %v2652 = vsel %vm2640, %v2619, %v2250
      %v2653 = vsel %vm2640, %v2620, %v2252
      %v2654 = vsel %vm2640, %v2621, %v2254
      %v2655 = vsel %vm2640, %v2622, %v2256
      %v2656 = vsel %vm2640, %v2623, %v2258
      %v2657 = vsel %vm2640, %v2624, %v2260
      %v2658 = vsel %vm2640, %v2625, %v2262
      %v2659 = vsel %vm2640, %v2626, %v2264
      %v2660 = vsel %vm2640, %v2627, %v2266
      %v2661 = vsel %vm2640, %v2628, %v2268
      %v2662 = vsel %vm2640, %v2629, %v2270
      %v2663 = vsel %vm2640, %v2630, %v2272
      %v2664 = vsel %vm2640, %v2631, %v2274
      %v2665 = vsel %vm2640, %v2632, %v2276
      %v2666 = vsel %vm2640, %v2633, %v2278
      %v2667 = vsel %vm2640, %v2634, %v2280
      %v2668 = vsel %vm2640, %v2635, %v2282
      %v2669 = vsel %vm2640, %v2636, %v2284
      %v2670 = vsel %vm2640, %v2637, %v2286
      %v2671 = vsel %vm2640, %v2638, %v2288
      %v2672 = vsel %vm2640, %v2639, %v2288
      %vm2673 = vcmask 523264
      %v2674 = vsel %vm2673, %v2641, %v2351
      %v2675 = vsel %vm2673, %v2642, %v2353
      %v2676 = vsel %vm2673, %v2643, %v2355
      %v2677 = vsel %vm2673, %v2644, %v2357
      %v2678 = vsel %vm2673, %v2645, %v2359
      %v2679 = vsel %vm2673, %v2646, %v2361
      %v2680 = vsel %vm2673, %v2647, %v2363
      %v2681 = vsel %vm2673, %v2648, %v2365
      %v2682 = vsel %vm2673, %v2649, %v2367
      %v2683 = vsel %vm2673, %v2650, %v2369
      %v2684 = vsel %vm2673, %v2651, %v2371
      %v2685 = vsel %vm2673, %v2652, %v2373
      %v2686 = vsel %vm2673, %v2653, %v2375
      %v2687 = vsel %vm2673, %v2654, %v2377
      %v2688 = vsel %vm2673, %v2655, %v2379
      %v2689 = vsel %vm2673, %v2656, %v2381
      %v2690 = vsel %vm2673, %v2657, %v2383
      %v2691 = vsel %vm2673, %v2658, %v2385
      %v2692 = vsel %vm2673, %v2659, %v2387
      %v2693 = vsel %vm2673, %v2660, %v2389
      %v2694 = vsel %vm2673, %v2661, %v2391
      %v2695 = vsel %vm2673, %v2662, %v2393
      %v2696 = vsel %vm2673, %v2663, %v2395
      %v2697 = vsel %vm2673, %v2664, %v2397
      %v2698 = vsel %vm2673, %v2665, %v2399
      %v2699 = vsel %vm2673, %v2666, %v2401
      %v2700 = vsel %vm2673, %v2667, %v2403
      %v2701 = vsel %vm2673, %v2668, %v2405
      %v2702 = vsel %vm2673, %v2669, %v2407
      %v2703 = vsel %vm2673, %v2670, %v2409
      %v2704 = vsel %vm2673, %v2671, %v2411
      %v2705 = vsel %vm2673, %v2672, %v2411
      %v2706 = vpack.c.bf16 %v2675, %v2674
      %v2707 = vpack.c.bf16 %v2677, %v2676
      %v2708 = vpack.c.bf16 %v2679, %v2678
      %v2709 = vpack.c.bf16 %v2681, %v2680
      %v2710 = vpack.c.bf16 %v2683, %v2682
      %v2711 = vpack.c.bf16 %v2685, %v2684
      %v2712 = vpack.c.bf16 %v2687, %v2686
      %v2713 = vpack.c.bf16 %v2689, %v2688
      %v2714 = vpack.c.bf16 %v2691, %v2690
      %v2715 = vpack.c.bf16 %v2693, %v2692
      %v2716 = vpack.c.bf16 %v2695, %v2694
      %v2717 = vpack.c.bf16 %v2697, %v2696
      %v2718 = vpack.c.bf16 %v2699, %v2698
      %v2719 = vpack.c.bf16 %v2701, %v2700
      %v2720 = vpack.c.bf16 %v2703, %v2702
      %v2721 = vpack.c.bf16 %v2705, %v2704
      %v2722 = vld [vmem:[%s3] sm:$0xf]
      %v2723 = vld [vmem:[%s3 + $0x4] sm:$0xf]
      %v2724 = vld [vmem:[%s3 + $0x8] sm:$0xf]
      %v2725 = vld [vmem:[%s3 + $0xc] sm:$0xf]
      %v2726 = vld [vmem:[%s3 + $0x10] sm:$0xf]
      %v2727 = vld [vmem:[%s3 + $0x14] sm:$0xf]
      %v2728 = vld [vmem:[%s3 + $0x18] sm:$0xf]
      %v2729 = vld [vmem:[%s3 + $0x1c] sm:$0xf]
      %v2730 = vld [vmem:[%s3 + $0x20] sm:$0xf]
      %v2731 = vld [vmem:[%s4] sm:$0x1]
      %v2733 = vlaneseq
      %v2734 = vshrl.u32 %v2733, 7
      %v2735 = vsub.s32 0, %v2734
      %v2736 = vrot.slane %v2731, %v2735
      %v2747 = vunpack.c.l.b16 %v2722
      %v2748 = vunpack.c.l.b16 %v2723
      %v2749 = vunpack.c.l.b16 %v2724
      %v2750 = vunpack.c.l.b16 %v2725
      %v2751 = vunpack.c.l.b16 %v2726
      %v2752 = vunpack.c.l.b16 %v2727
      %v2753 = vunpack.c.l.b16 %v2728
      %v2754 = vunpack.c.l.b16 %v2729
      %v2755 = vunpack.c.l.b16 %v2730
      %v2756 = vpack.c.b16 %v2748, %v2747
      %v2757 = vpack.c.b16 %v2750, %v2749
      %v2758 = vpack.c.b16 %v2752, %v2751
      %v2759 = vpack.c.b16 %v2754, %v2753
      %v2760 = vpack.c.b16 %v2755, %v2755
      %vm2765 = vcmask 588800
      %v2767 = vsel %vm2765, %v2706, 0
      %v2770 = vsel %vm2765, %v2707, 0
      %v2773 = vsel %vm2765, %v2708, 0
      %v2776 = vsel %vm2765, %v2709, 0
      %v2779 = vsel %vm2765, %v2710, 0
      %v2782 = vsel %vm2765, %v2711, 0
      %v2785 = vsel %vm2765, %v2712, 0
      %v2788 = vsel %vm2765, %v2713, 0
      %v2791 = vsel %vm2765, %v2714, 0
      %v2794 = vsel %vm2765, %v2715, 0
      %v2797 = vsel %vm2765, %v2716, 0
      %v2800 = vsel %vm2765, %v2717, 0
      %v2803 = vsel %vm2765, %v2718, 0
      %v2806 = vsel %vm2765, %v2719, 0
      %v2809 = vsel %vm2765, %v2720, 0
      %v2812 = vsel %vm2765, %v2721, 0
      %vm2814 = vcmask 1043456
      %v2816 = vsel %vm2814, %v2760, 0
      %2818 = vmatprep.subr.bf16.mxu0 0
      %2819 = vmatpush1.bf16.msra.mxu0 %v2756
      %2820 = vmatprep.subr.bf16.mxu0 0
      %2821 = vmatpush1.bf16.msra.mxu0 %v2757
      %2822 = vmatprep.subr.bf16.mxu0 0
      %2823 = vmatpush1.bf16.msra.mxu0 %v2758
      %2824 = vmatprep.subr.bf16.mxu0 0
      %2825 = vmatpush1.bf16.msra.mxu0 %v2759
      %2826 = vmatprep.subr.bf16.mxu0 0
      %2827 = vmatpush1.bf16.msra.mxu0 %v2816
      %2828 = vmatprep.subr.bf16.mxu0 0
      %2829 = vmatpush1.bf16.msra.mxu0 0
      %2830 = vmatprep.subr.bf16.mxu0 0
      %2831 = vmatpush1.bf16.msra.mxu0 0
      %2832 = vmatprep.subr.bf16.mxu0 0
      %2833 = vmatpush1.bf16.msra.mxu0 0
      %2834 = vmatprep.subr.bf16.mxu0 0
      %2835 = vmatpush1.bf16.msra.mxu0 0
      %2836 = vmatprep.subr.bf16.mxu0 0
      %2837 = vmatpush1.bf16.msra.mxu0 0
      %2838 = vmatprep.subr.bf16.mxu0 0
      %2839 = vmatpush1.bf16.msra.mxu0 0
      %2840 = vmatprep.subr.bf16.mxu0 0
      %2841 = vmatpush1.bf16.msra.mxu0 0
      %2842 = vmatprep.subr.bf16.mxu0 0
      %2843 = vmatpush1.bf16.msra.mxu0 0
      %2844 = vmatprep.subr.bf16.mxu0 0
      %2845 = vmatpush1.bf16.msra.mxu0 0
      %2846 = vmatprep.subr.bf16.mxu0 0
      %2847 = vmatpush1.bf16.msra.mxu0 0
      %2848 = vmatprep.subr.bf16.mxu0 0
      %2849 = vmatpush1.bf16.msra.mxu0 0
      %2850 = vmatprep.mubr.bf16.mxu0 0
      %2851 = vmatmul.mubr.bf16.gmra.mrb[0].mxu0 %v2767
      %v2852 = vpop.f32.mrb[0].mxu0
      %v2853 = vadd.f32 %v2736, %v2852
      %v2854 = vpop.f32.mrb[0].mxu0
      %v2855 = vpop.f32.mrb[0].mxu0
      %v2856 = vadd.f32 %v2736, %v2855
      %v2857 = vpop.f32.mrb[0].mxu0
      %2858 = vmatprep.mubr.bf16.mxu0 0
      %2859 = vmatmul.mubr.bf16.gmra.mrb[0].mxu0 %v2770
      %v2860 = vpop.f32.mrb[0].mxu0
      %v2861 = vadd.f32 %v2736, %v2860
      %v2862 = vpop.f32.mrb[0].mxu0
      %v2863 = vpop.f32.mrb[0].mxu0
      %v2864 = vadd.f32 %v2736, %v2863
      %v2865 = vpop.f32.mrb[0].mxu0
      %2866 = vmatprep.mubr.bf16.mxu0 0
      %2867 = vmatmul.mubr.bf16.gmra.mrb[0].mxu0 %v2773
      %v2868 = vpop.f32.mrb[0].mxu0
      %v2869 = vadd.f32 %v2736, %v2868
      %v2870 = vpop.f32.mrb[0].mxu0
      %v2871 = vpop.f32.mrb[0].mxu0
      %v2872 = vadd.f32 %v2736, %v2871
      %v2873 = vpop.f32.mrb[0].mxu0
      %2874 = vmatprep.mubr.bf16.mxu0 0
      %2875 = vmatmul.mubr.bf16.gmra.mrb[0].mxu0 %v2776
      %v2876 = vpop.f32.mrb[0].mxu0
      %v2877 = vadd.f32 %v2736, %v2876
      %v2878 = vpop.f32.mrb[0].mxu0
      %v2879 = vpop.f32.mrb[0].mxu0
      %v2880 = vadd.f32 %v2736, %v2879
      %v2881 = vpop.f32.mrb[0].mxu0
      %2882 = vmatprep.mubr.bf16.mxu0 0
      %2883 = vmatmul.mubr.bf16.gmra.mrb[0].mxu0 %v2779
      %v2884 = vpop.f32.mrb[0].mxu0
      %v2885 = vadd.f32 %v2736, %v2884
      %v2886 = vpop.f32.mrb[0].mxu0
      %v2887 = vpop.f32.mrb[0].mxu0
      %v2888 = vadd.f32 %v2736, %v2887
      %v2889 = vpop.f32.mrb[0].mxu0
      %2890 = vmatprep.mubr.bf16.mxu0 0
      %2891 = vmatmul.mubr.bf16.gmra.mrb[0].mxu0 %v2782
      %v2892 = vpop.f32.mrb[0].mxu0
      %v2893 = vadd.f32 %v2736, %v2892
      %v2894 = vpop.f32.mrb[0].mxu0
      %v2895 = vpop.f32.mrb[0].mxu0
      %v2896 = vadd.f32 %v2736, %v2895
      %v2897 = vpop.f32.mrb[0].mxu0
      %2898 = vmatprep.mubr.bf16.mxu0 0
      %2899 = vmatmul.mubr.bf16.gmra.mrb[0].mxu0 %v2785
      %v2900 = vpop.f32.mrb[0].mxu0
      %v2901 = vadd.f32 %v2736, %v2900
      %v2902 = vpop.f32.mrb[0].mxu0
      %v2903 = vpop.f32.mrb[0].mxu0
      %v2904 = vadd.f32 %v2736, %v2903
      %v2905 = vpop.f32.mrb[0].mxu0
      %2906 = vmatprep.mubr.bf16.mxu0 0
      %2907 = vmatmul.mubr.bf16.gmra.mrb[0].mxu0 %v2788
      %v2908 = vpop.f32.mrb[0].mxu0
      %v2909 = vadd.f32 %v2736, %v2908
      %v2910 = vpop.f32.mrb[0].mxu0
      %v2911 = vpop.f32.mrb[0].mxu0
      %v2912 = vadd.f32 %v2736, %v2911
      %v2913 = vpop.f32.mrb[0].mxu0
      %2914 = vmatprep.mubr.bf16.mxu0 0
      %2915 = vmatmul.mubr.bf16.gmra.mrb[0].mxu0 %v2791
      %v2916 = vpop.f32.mrb[0].mxu0
      %v2917 = vadd.f32 %v2736, %v2916
      %v2918 = vpop.f32.mrb[0].mxu0
      %v2919 = vpop.f32.mrb[0].mxu0
      %v2920 = vadd.f32 %v2736, %v2919
      %v2921 = vpop.f32.mrb[0].mxu0
      %2922 = vmatprep.mubr.bf16.mxu0 0
      %2923 = vmatmul.mubr.bf16.gmra.mrb[0].mxu0 %v2794
      %v2924 = vpop.f32.mrb[0].mxu0
      %v2925 = vadd.f32 %v2736, %v2924
      %v2926 = vpop.f32.mrb[0].mxu0
      %v2927 = vpop.f32.mrb[0].mxu0
      %v2928 = vadd.f32 %v2736, %v2927
      %v2929 = vpop.f32.mrb[0].mxu0
      %2930 = vmatprep.mubr.bf16.mxu0 0
      %2931 = vmatmul.mubr.bf16.gmra.mrb[0].mxu0 %v2797
      %v2932 = vpop.f32.mrb[0].mxu0
      %v2933 = vadd.f32 %v2736, %v2932
      %v2934 = vpop.f32.mrb[0].mxu0
      %v2935 = vpop.f32.mrb[0].mxu0
      %v2936 = vadd.f32 %v2736, %v2935
      %v2937 = vpop.f32.mrb[0].mxu0
      %2938 = vmatprep.mubr.bf16.mxu0 0
      %2939 = vmatmul.mubr.bf16.gmra.mrb[0].mxu0 %v2800
      %v2940 = vpop.f32.mrb[0].mxu0
      %v2941 = vadd.f32 %v2736, %v2940
      %v2942 = vpop.f32.mrb[0].mxu0
      %v2943 = vpop.f32.mrb[0].mxu0
      %v2944 = vadd.f32 %v2736, %v2943
      %v2945 = vpop.f32.mrb[0].mxu0
      %2946 = vmatprep.mubr.bf16.mxu0 0
      %2947 = vmatmul.mubr.bf16.gmra.mrb[0].mxu0 %v2803
      %v2948 = vpop.f32.mrb[0].mxu0
      %v2949 = vadd.f32 %v2736, %v2948
      %v2950 = vpop.f32.mrb[0].mxu0
      %v2951 = vpop.f32.mrb[0].mxu0
      %v2952 = vadd.f32 %v2736, %v2951
      %v2953 = vpop.f32.mrb[0].mxu0
      %2954 = vmatprep.mubr.bf16.mxu0 0
      %2955 = vmatmul.mubr.bf16.gmra.mrb[0].mxu0 %v2806
      %v2956 = vpop.f32.mrb[0].mxu0
      %v2957 = vadd.f32 %v2736, %v2956
      %v2958 = vpop.f32.mrb[0].mxu0
      %v2959 = vpop.f32.mrb[0].mxu0
      %v2960 = vadd.f32 %v2736, %v2959
      %v2961 = vpop.f32.mrb[0].mxu0
      %2962 = vmatprep.mubr.bf16.mxu0 0
      %2963 = vmatmul.mubr.bf16.gmra.mrb[0].mxu0 %v2809
      %v2964 = vpop.f32.mrb[0].mxu0
      %v2965 = vadd.f32 %v2736, %v2964
      %v2966 = vpop.f32.mrb[0].mxu0
      %v2967 = vpop.f32.mrb[0].mxu0
      %v2968 = vadd.f32 %v2736, %v2967
      %v2969 = vpop.f32.mrb[0].mxu0
      %2970 = vmatprep.mubr.bf16.mxu0 0
      %2971 = vmatmul.mubr.bf16.gmra.mrb[0].mxu0 %v2812
      %v2972 = vpop.f32.mrb[0].mxu0
      %v2973 = vadd.f32 %v2736, %v2972
      %v2974 = vpop.f32.mrb[0].mxu0
      %v2975 = vpop.f32.mrb[0].mxu0
      %v2976 = vadd.f32 %v2736, %v2975
      %v2977 = vpop.f32.mrb[0].mxu0
      %2978 = vdwg.mxu0
      %v2979 = vpack.c.bf16 %v2856, %v2853
      %v2980 = vpack.c.bf16 %v2864, %v2861
      %v2981 = vpack.c.bf16 %v2872, %v2869
      %v2982 = vpack.c.bf16 %v2880, %v2877
      %v2983 = vpack.c.bf16 %v2888, %v2885
      %v2984 = vpack.c.bf16 %v2896, %v2893
      %v2985 = vpack.c.bf16 %v2904, %v2901
      %v2986 = vpack.c.bf16 %v2912, %v2909
      %v2987 = vpack.c.bf16 %v2920, %v2917
      %v2988 = vpack.c.bf16 %v2928, %v2925
      %v2989 = vpack.c.bf16 %v2936, %v2933
      %v2990 = vpack.c.bf16 %v2944, %v2941
      %v2991 = vpack.c.bf16 %v2952, %v2949
      %v2992 = vpack.c.bf16 %v2960, %v2957
      %v2993 = vpack.c.bf16 %v2968, %v2965
      %v2994 = vpack.c.bf16 %v2976, %v2973
      %v3011 = vunpack.c.l.b16 %v2979
      %v3012 = vunpack.c.h.b16 %v2979
      %v3013 = vunpack.c.l.b16 %v2980
      %v3014 = vunpack.c.h.b16 %v2980
      %v3015 = vunpack.c.l.b16 %v2981
      %v3016 = vunpack.c.h.b16 %v2981
      %v3017 = vunpack.c.l.b16 %v2982
      %v3018 = vunpack.c.h.b16 %v2982
      %v3019 = vunpack.c.l.b16 %v2983
      %v3020 = vunpack.c.h.b16 %v2983
      %v3021 = vunpack.c.l.b16 %v2984
      %v3022 = vunpack.c.h.b16 %v2984
      %v3023 = vunpack.c.l.b16 %v2985
      %v3024 = vunpack.c.h.b16 %v2985
      %v3025 = vunpack.c.l.b16 %v2986
      %v3026 = vunpack.c.h.b16 %v2986
      %v3027 = vunpack.c.l.b16 %v2987
      %v3028 = vunpack.c.h.b16 %v2987
      %v3029 = vunpack.c.l.b16 %v2988
      %v3030 = vunpack.c.h.b16 %v2988
      %v3031 = vunpack.c.l.b16 %v2989
      %v3032 = vunpack.c.h.b16 %v2989
      %v3033 = vunpack.c.l.b16 %v2990
      %v3034 = vunpack.c.h.b16 %v2990
      %v3035 = vunpack.c.l.b16 %v2991
      %v3036 = vunpack.c.h.b16 %v2991
      %v3037 = vunpack.c.l.b16 %v2992
      %v3038 = vunpack.c.h.b16 %v2992
      %v3039 = vunpack.c.l.b16 %v2993
      %v3040 = vunpack.c.h.b16 %v2993
      %v3041 = vunpack.c.l.b16 %v2994
      %v3042 = vunpack.c.h.b16 %v2994
      %v3043 = vpack.c.b16 %v3011, %v3011
      %v3044 = vpack.c.b16 %v3012, %v3012
      %v3045 = vpack.c.b16 %v3013, %v3013
      %v3046 = vpack.c.b16 %v3014, %v3014
      %v3047 = vpack.c.b16 %v3015, %v3015
      %v3048 = vpack.c.b16 %v3016, %v3016
      %v3049 = vpack.c.b16 %v3017, %v3017
      %v3050 = vpack.c.b16 %v3018, %v3018
      %v3051 = vpack.c.b16 %v3019, %v3019
      %v3052 = vpack.c.b16 %v3020, %v3020
      %v3053 = vpack.c.b16 %v3021, %v3021
      %v3054 = vpack.c.b16 %v3022, %v3022
      %v3055 = vpack.c.b16 %v3023, %v3023
      %v3056 = vpack.c.b16 %v3024, %v3024
      %v3057 = vpack.c.b16 %v3025, %v3025
      %v3058 = vpack.c.b16 %v3026, %v3026
      %v3059 = vpack.c.b16 %v3027, %v3027
      %v3060 = vpack.c.b16 %v3028, %v3028
      %v3061 = vpack.c.b16 %v3029, %v3029
      %v3062 = vpack.c.b16 %v3030, %v3030
      %v3063 = vpack.c.b16 %v3031, %v3031
      %v3064 = vpack.c.b16 %v3032, %v3032
      %v3065 = vpack.c.b16 %v3033, %v3033
      %v3066 = vpack.c.b16 %v3034, %v3034
      %v3067 = vpack.c.b16 %v3035, %v3035
      %v3068 = vpack.c.b16 %v3036, %v3036
      %v3069 = vpack.c.b16 %v3037, %v3037
      %v3070 = vpack.c.b16 %v3038, %v3038
      %v3071 = vpack.c.b16 %v3039, %v3039
      %v3072 = vpack.c.b16 %v3040, %v3040
      %v3073 = vpack.c.b16 %v3041, %v3041
      %v3074 = vpack.c.b16 %v3042, %v3042
      %vm3107 = vcmask 125952
      %3108 = vst.msk [vmem:[%s258] sm:$0xf] %vm3107, %v3043
      %3109 = vst.msk [vmem:[%s258 + $0x4] sm:$0xf] %vm3107, %v3044
      %3110 = vst.msk [vmem:[%s258 + $0x8] sm:$0xf] %vm3107, %v3045
      %3111 = vst.msk [vmem:[%s258 + $0xc] sm:$0xf] %vm3107, %v3046
      %3112 = vst.msk [vmem:[%s258 + $0x10] sm:$0xf] %vm3107, %v3047
      %3113 = vst.msk [vmem:[%s258 + $0x14] sm:$0xf] %vm3107, %v3048
      %3114 = vst.msk [vmem:[%s258 + $0x18] sm:$0xf] %vm3107, %v3049
      %3115 = vst.msk [vmem:[%s258 + $0x1c] sm:$0xf] %vm3107, %v3050
      %3116 = vst.msk [vmem:[%s258 + $0x20] sm:$0xf] %vm3107, %v3051
      %3117 = vst.msk [vmem:[%s258 + $0x24] sm:$0xf] %vm3107, %v3052
      %3118 = vst.msk [vmem:[%s258 + $0x28] sm:$0xf] %vm3107, %v3053
      %3119 = vst.msk [vmem:[%s258 + $0x2c] sm:$0xf] %vm3107, %v3054
      %3120 = vst.msk [vmem:[%s258 + $0x30] sm:$0xf] %vm3107, %v3055
      %3121 = vst.msk [vmem:[%s258 + $0x34] sm:$0xf] %vm3107, %v3056
      %3122 = vst.msk [vmem:[%s258 + $0x38] sm:$0xf] %vm3107, %v3057
      %3123 = vst.msk [vmem:[%s258 + $0x3c] sm:$0xf] %vm3107, %v3058
      %3124 = vst.msk [vmem:[%s258 + $0x40] sm:$0xf] %vm3107, %v3059
      %3125 = vst.msk [vmem:[%s258 + $0x44] sm:$0xf] %vm3107, %v3060
      %3126 = vst.msk [vmem:[%s258 + $0x48] sm:$0xf] %vm3107, %v3061
      %3127 = vst.msk [vmem:[%s258 + $0x4c] sm:$0xf] %vm3107, %v3062
      %3128 = vst.msk [vmem:[%s258 + $0x50] sm:$0xf] %vm3107, %v3063
      %3129 = vst.msk [vmem:[%s258 + $0x54] sm:$0xf] %vm3107, %v3064
      %3130 = vst.msk [vmem:[%s258 + $0x58] sm:$0xf] %vm3107, %v3065
      %3131 = vst.msk [vmem:[%s258 + $0x5c] sm:$0xf] %vm3107, %v3066
      %3132 = vst.msk [vmem:[%s258 + $0x60] sm:$0xf] %vm3107, %v3067
      %3133 = vst.msk [vmem:[%s258 + $0x64] sm:$0xf] %vm3107, %v3068
      %3134 = vst.msk [vmem:[%s258 + $0x68] sm:$0xf] %vm3107, %v3069
      %3135 = vst.msk [vmem:[%s258 + $0x6c] sm:$0xf] %vm3107, %v3070
      %3136 = vst.msk [vmem:[%s258 + $0x70] sm:$0xf] %vm3107, %v3071
      %3137 = vst.msk [vmem:[%s258 + $0x74] sm:$0xf] %vm3107, %v3072
      %3138 = vst.msk [vmem:[%s258 + $0x78] sm:$0xf] %vm3107, %v3073
      %3139 = vst.msk [vmem:[%s258 + $0x7c] sm:$0xf] %vm3107, %v3074
      %v3140 = vsel %vm2475, %v2853, 0.0
      %v3141 = vsel %vm2475, %v2856, 0.0
      %v3142 = vadd.f32 %v3140, %v3141
      %v3143 = vsel %vm2475, %v2861, 0.0
      %v3144 = vadd.f32 %v3142, %v3143
      %v3145 = vsel %vm2475, %v2864, 0.0
      %v3146 = vadd.f32 %v3144, %v3145
      %v3147 = vsel %vm2475, %v2869, 0.0
      %v3148 = vadd.f32 %v3146, %v3147
      %v3149 = vsel %vm2475, %v2872, 0.0
      %v3150 = vadd.f32 %v3148, %v3149
      %v3151 = vsel %vm2475, %v2877, 0.0
      %v3152 = vadd.f32 %v3150, %v3151
      %v3153 = vsel %vm2475, %v2880, 0.0
      %v3154 = vadd.f32 %v3152, %v3153
      %v3155 = vsel %vm2475, %v2885, 0.0
      %v3156 = vadd.f32 %v3154, %v3155
      %v3157 = vsel %vm2475, %v2888, 0.0
      %v3158 = vadd.f32 %v3156, %v3157
      %v3159 = vsel %vm2475, %v2893, 0.0
      %v3160 = vadd.f32 %v3158, %v3159
      %v3161 = vsel %vm2475, %v2896, 0.0
      %v3162 = vadd.f32 %v3160, %v3161
      %v3163 = vsel %vm2475, %v2901, 0.0
      %v3164 = vadd.f32 %v3162, %v3163
      %v3165 = vsel %vm2475, %v2904, 0.0
      %v3166 = vadd.f32 %v3164, %v3165
      %v3167 = vsel %vm2475, %v2909, 0.0
      %v3168 = vadd.f32 %v3166, %v3167
      %v3169 = vsel %vm2475, %v2912, 0.0
      %v3170 = vadd.f32 %v3168, %v3169
      %v3171 = vsel %vm2475, %v2917, 0.0
      %v3172 = vadd.f32 %v3170, %v3171
      %v3173 = vsel %vm2475, %v2920, 0.0
      %v3174 = vadd.f32 %v3172, %v3173
      %v3175 = vsel %vm2475, %v2925, 0.0
      %v3176 = vadd.f32 %v3174, %v3175
      %v3177 = vsel %vm2475, %v2928, 0.0
      %v3178 = vadd.f32 %v3176, %v3177
      %v3179 = vsel %vm2475, %v2933, 0.0
      %v3180 = vadd.f32 %v3178, %v3179
      %v3181 = vsel %vm2475, %v2936, 0.0
      %v3182 = vadd.f32 %v3180, %v3181
      %v3183 = vsel %vm2475, %v2941, 0.0
      %v3184 = vadd.f32 %v3182, %v3183
      %v3185 = vsel %vm2475, %v2944, 0.0
      %v3186 = vadd.f32 %v3184, %v3185
      %v3187 = vsel %vm2475, %v2949, 0.0
      %v3188 = vadd.f32 %v3186, %v3187
      %v3189 = vsel %vm2475, %v2952, 0.0
      %v3190 = vadd.f32 %v3188, %v3189
      %v3191 = vsel %vm2475, %v2957, 0.0
      %v3192 = vadd.f32 %v3190, %v3191
      %v3193 = vsel %vm2475, %v2960, 0.0
      %v3194 = vadd.f32 %v3192, %v3193
      %v3195 = vsel %vm2475, %v2965, 0.0
      %v3196 = vadd.f32 %v3194, %v3195
      %v3197 = vsel %vm2475, %v2968, 0.0
      %v3198 = vadd.f32 %v3196, %v3197
      %v3199 = vsel %vm2475, %v2973, 0.0
      %v3200 = vadd.f32 %v3198, %v3199
      %v3201 = vsel %vm2475, %v2976, 0.0
      %v3202 = vadd.f32 %v3200, %v3201
      %v3203 = vrot.slane %v3202, 4
      %v3204 = vadd.f32 %v3202, %v3203
      %v3205 = vrot.slane %v3204, 2
      %v3206 = vadd.f32 %v3204, %v3205
      %v3207 = vrot.slane %v3206, 1
      %v3208 = vadd.f32 %v3206, %v3207
      %v3209 = vmul.f32 %v2853, %v2853
      %v3210 = vmul.f32 %v2856, %v2856
      %v3211 = vmul.f32 %v2861, %v2861
      %v3212 = vmul.f32 %v2864, %v2864
      %v3213 = vmul.f32 %v2869, %v2869
      %v3214 = vmul.f32 %v2872, %v2872
      %v3215 = vmul.f32 %v2877, %v2877
      %v3216 = vmul.f32 %v2880, %v2880
      %v3217 = vmul.f32 %v2885, %v2885
      %v3218 = vmul.f32 %v2888, %v2888
      %v3219 = vmul.f32 %v2893, %v2893
      %v3220 = vmul.f32 %v2896, %v2896
      %v3221 = vmul.f32 %v2901, %v2901
      %v3222 = vmul.f32 %v2904, %v2904
      %v3223 = vmul.f32 %v2909, %v2909
      %v3224 = vmul.f32 %v2912, %v2912
      %v3225 = vmul.f32 %v2917, %v2917
      %v3226 = vmul.f32 %v2920, %v2920
      %v3227 = vmul.f32 %v2925, %v2925
      %v3228 = vmul.f32 %v2928, %v2928
      %v3229 = vmul.f32 %v2933, %v2933
      %v3230 = vmul.f32 %v2936, %v2936
      %v3231 = vmul.f32 %v2941, %v2941
      %v3232 = vmul.f32 %v2944, %v2944
      %v3233 = vmul.f32 %v2949, %v2949
      %v3234 = vmul.f32 %v2952, %v2952
      %v3235 = vmul.f32 %v2957, %v2957
      %v3236 = vmul.f32 %v2960, %v2960
      %v3237 = vmul.f32 %v2965, %v2965
      %v3238 = vmul.f32 %v2968, %v2968
      %v3239 = vmul.f32 %v2973, %v2973
      %v3240 = vmul.f32 %v2976, %v2976
      %v3241 = vsel %vm2475, %v3209, 0.0
      %v3242 = vsel %vm2475, %v3210, 0.0
      %v3243 = vadd.f32 %v3241, %v3242
      %v3244 = vsel %vm2475, %v3211, 0.0
      %v3245 = vadd.f32 %v3243, %v3244
      %v3246 = vsel %vm2475, %v3212, 0.0
      %v3247 = vadd.f32 %v3245, %v3246
      %v3248 = vsel %vm2475, %v3213, 0.0
      %v3249 = vadd.f32 %v3247, %v3248
      %v3250 = vsel %vm2475, %v3214, 0.0
      %v3251 = vadd.f32 %v3249, %v3250
      %v3252 = vsel %vm2475, %v3215, 0.0
      %v3253 = vadd.f32 %v3251, %v3252
      %v3254 = vsel %vm2475, %v3216, 0.0
      %v3255 = vadd.f32 %v3253, %v3254
      %v3256 = vsel %vm2475, %v3217, 0.0
      %v3257 = vadd.f32 %v3255, %v3256
      %v3258 = vsel %vm2475, %v3218, 0.0
      %v3259 = vadd.f32 %v3257, %v3258
      %v3260 = vsel %vm2475, %v3219, 0.0
      %v3261 = vadd.f32 %v3259, %v3260
      %v3262 = vsel %vm2475, %v3220, 0.0
      %v3263 = vadd.f32 %v3261, %v3262
      %v3264 = vsel %vm2475, %v3221, 0.0
      %v3265 = vadd.f32 %v3263, %v3264
      %v3266 = vsel %vm2475, %v3222, 0.0
      %v3267 = vadd.f32 %v3265, %v3266
      %v3268 = vsel %vm2475, %v3223, 0.0
      %v3269 = vadd.f32 %v3267, %v3268
      %v3270 = vsel %vm2475, %v3224, 0.0
      %v3271 = vadd.f32 %v3269, %v3270
      %v3272 = vsel %vm2475, %v3225, 0.0
      %v3273 = vadd.f32 %v3271, %v3272
      %v3274 = vsel %vm2475, %v3226, 0.0
      %v3275 = vadd.f32 %v3273, %v3274
      %v3276 = vsel %vm2475, %v3227, 0.0
      %v3277 = vadd.f32 %v3275, %v3276
      %v3278 = vsel %vm2475, %v3228, 0.0
      %v3279 = vadd.f32 %v3277, %v3278
      %v3280 = vsel %vm2475, %v3229, 0.0
      %v3281 = vadd.f32 %v3279, %v3280
      %v3282 = vsel %vm2475, %v3230, 0.0
      %v3283 = vadd.f32 %v3281, %v3282
      %v3284 = vsel %vm2475, %v3231, 0.0
      %v3285 = vadd.f32 %v3283, %v3284
      %v3286 = vsel %vm2475, %v3232, 0.0
      %v3287 = vadd.f32 %v3285, %v3286
      %v3288 = vsel %vm2475, %v3233, 0.0
      %v3289 = vadd.f32 %v3287, %v3288
      %v3290 = vsel %vm2475, %v3234, 0.0
      %v3291 = vadd.f32 %v3289, %v3290
      %v3292 = vsel %vm2475, %v3235, 0.0
      %v3293 = vadd.f32 %v3291, %v3292
      %v3294 = vsel %vm2475, %v3236, 0.0
      %v3295 = vadd.f32 %v3293, %v3294
      %v3296 = vsel %vm2475, %v3237, 0.0
      %v3297 = vadd.f32 %v3295, %v3296
      %v3298 = vsel %vm2475, %v3238, 0.0
      %v3299 = vadd.f32 %v3297, %v3298
      %v3300 = vsel %vm2475, %v3239, 0.0
      %v3301 = vadd.f32 %v3299, %v3300
      %v3302 = vsel %vm2475, %v3240, 0.0
      %v3303 = vadd.f32 %v3301, %v3302
      %v3304 = vrot.slane %v3303, 4
      %v3305 = vadd.f32 %v3303, %v3304
      %v3306 = vrot.slane %v3305, 2
      %v3307 = vadd.f32 %v3305, %v3306
      %v3308 = vrot.slane %v3307, 1
      %v3309 = vadd.f32 %v3307, %v3308
      %v3310 = vsel %vm1013, %v3208, %v3309
      %vm3311 = vcmask 123904
      %3312 = vst.msk [vmem:[%s262] sm:$0x3] %vm3311, %v3310
      %p3313 = scmp.lt.s32.totalorder %s18, 1
      %s3314 = scalar_select %p3313, %s18, 1
      %s3315 = smul.addr %s3314, 32
      %s3316 = smul.addr %s3315, 4
      %s3317 = scalar_lea.vmem %s5, %s3316
      %p3318 = scmp.lt.s32.totalorder %s18, 1
      %s3319 = scalar_select %p3318, %s18, 1
      %s3320 = smul.addr %s3319, 2
      %s3321 = scalar_lea.vmem %s6, %s3320
      // Predicated region
      $region41: #{fire_forward.4} parent=39 // pred_check
        %p3322 = pneg %p146
      $region42: #{fire_forward.4} parent=39 // pred_check_branch
        %3324 = sbr.rel (%p3322) target = $region44
      $region43: #{fire_forward.4} parent=39 // pred_region
        _
      $region44: #{fire_forward.4} parent=39 // pred_fallthru
        _
      // Predicated region
      $region45: #{fire_forward.4} parent=39 // pred_check
        %p3325 = pneg %p172
      $region46: #{fire_forward.4} parent=39 // pred_check_branch
        %3327 = sbr.rel (%p3325) target = $region48
      $region47: #{fire_forward.4} parent=39 // pred_region
        _
      $region48: #{fire_forward.4} parent=39 // pred_fallthru
        _
    $region40: #{fire_forward.4} parent=5 // pred_fallthru
      _
    %p3328 = scmp.le.s32.totalorder 2, %s13
    // Predicated region
    $region49: #{fire_forward.4} parent=5 // pred_check
      %p3329 = pneg %p3328
    $region50: #{fire_forward.4} parent=5 // pred_check_branch
      %3331 = sbr.rel (%p3329) target = $region52
    $region51: #{fire_forward.4} parent=5 // pred_region
      %s3332 = ssub.s32 %s13, 2
      // Predicated region
      $region53: #{fire_forward.4} parent=51 // pred_check
        %p3333 = pneg %p152
      $region54: #{fire_forward.4} parent=51 // pred_check_branch
        %3335 = sbr.rel (%p3333) target = $region56
      $region55: #{fire_forward.4} parent=51 // pred_region
        %p3336 = scmp.lt.s32.totalorder %s19, 1
        %s3337 = scalar_select %p3336, %s19, 1
        %s3338 = smul.addr %s3337, 32
        %s3339 = smul.addr %s3338, 4
        %s3340 = scalar_lea.vmem %s5, %s3339
      $region56: #{fire_forward.4} parent=51 // pred_fallthru
        _
      // Predicated region
      $region57: #{fire_forward.4} parent=51 // pred_check
        %p3341 = pneg %p178
      $region58: #{fire_forward.4} parent=51 // pred_check_branch
        %3343 = sbr.rel (%p3341) target = $region60
      $region59: #{fire_forward.4} parent=51 // pred_region
        %p3344 = scmp.lt.s32.totalorder %s19, 1
        %s3345 = scalar_select %p3344, %s19, 1
        %s3346 = smul.addr %s3345, 2
        %s3347 = scalar_lea.vmem %s6, %s3346
      $region60: #{fire_forward.4} parent=51 // pred_fallthru
        _
    $region52: #{fire_forward.4} parent=5 // pred_fallthru
      _
  $region6: #{fire_forward.4} parent=0 // loop_footer
    %s17 = sadd.s32 1, %s13
  $region7: #{fire_forward.4} parent=0 // loop_footer_branch
    %12 = sbr.rel target = $region3
  $region8: #{fire_forward.4} parent=0 // loop_exit
    _

</llo_original>
